<compile_context>
chip_gen: v7x
topology: tpu7x:2x2x1
jax: 0.10.0
libtpu: 0.0.40
codegen_flags: <defaults>
</compile_context>

<pallas_src>
import functools
import math

import jax
import jax.numpy as jnp
from jax import lax
from jax.experimental import pallas as pl
from jax.experimental.pallas import tpu as pltpu


def _round_up(x, m):
    return ((x + m - 1) // m) * m


# ----------------------------------------------------------------------------
# Graph preparation (call once at graph-build time, NOT per forward).
# ----------------------------------------------------------------------------
def prepare_graph(graph, *, tm=256, tk=1024):
    n = graph.shape[0]
    blk = tm * tk // math.gcd(tm, tk)
    n_pad = _round_up(n, blk)
    g16 = graph.astype(jnp.bfloat16)                  # cast BEFORE pad: half the prep traffic
    return jnp.pad(g16, ((0, n_pad - n), (0, n_pad - n)))


# ----------------------------------------------------------------------------
# Kernel 1: fused L-layer LightGCN propagation.
#   grid = (layer, row_tile, k_tile); graph streamed in (tm, tk) bf16 tiles,
#   cur / next-layer embeddings are resident bf16 VMEM scratch, the running
#   layer-sum lives in the resident f32 output block; mean taken at the end.
# ----------------------------------------------------------------------------
def _lightgcn_fused_kernel(graph_ref, emb_ref, out_ref,
                           cur_ref, nxt_ref, row_acc,
                           *, tm, tk, inv_scale):
    l = pl.program_id(0)
    i = pl.program_id(1)
    k = pl.program_id(2)
    nl = pl.num_programs(0)
    ni = pl.num_programs(1)
    nk = pl.num_programs(2)

    # Very first grid step: load layer-0 embeddings into the resident VMEM state.
    @pl.when((l == 0) & (i == 0) & (k == 0))
    def _():
        emb = emb_ref[...]
        cur_ref[...] = emb.astype(jnp.bfloat16)
        out_ref[...] = emb                                # layer-sum accumulator (f32)

    @pl.when(k == 0)
    def _():
        row_acc[...] = jnp.zeros_like(row_acc)

    # (tm, tk) bf16 graph tile x (tk, d) bf16 resident cur slab -> f32 accumulate.
    koff = pl.multiple_of(k * tk, tk)
    row_acc[...] += jnp.dot(
        graph_ref[...],
        cur_ref[pl.ds(koff, tk), :],
        preferred_element_type=jnp.float32,
    )

    @pl.when(k == nk - 1)
    def _():
        prop = row_acc[...]
        ioff = pl.multiple_of(i * tm, tm)
        nxt_ref[pl.ds(ioff, tm), :] = prop.astype(jnp.bfloat16)
        out_ref[pl.ds(ioff, tm), :] += prop

    # End of a layer: promote next-layer embeddings (tiny VMEM->VMEM copy).
    @pl.when((k == nk - 1) & (i == ni - 1))
    def _():
        cur_ref[...] = nxt_ref[...]

    # Very last grid step: finish the mean over the L+1 layer embeddings.
    @pl.when((l == nl - 1) & (i == ni - 1) & (k == nk - 1))
    def _():
        out_ref[...] = out_ref[...] * inv_scale


def lightgcn_propagate(graph_bf16, all_embed, num_layers, *, tm=256, tk=1024):
    n_pad, d = all_embed.shape
    assert graph_bf16.shape == (n_pad, n_pad) and graph_bf16.dtype == jnp.bfloat16
    assert n_pad % tm == 0 and n_pad % tk == 0
    if num_layers == 0:
        return all_embed

    inv_scale = 1.0 / float(num_layers + 1)
    kernel = functools.partial(_lightgcn_fused_kernel, tm=tm, tk=tk, inv_scale=inv_scale)

    # VMEM budget (lanes pad d=32 up to 128): graph double-buffer + cur + nxt + emb + out + acc.
    vmem_need = (2 * tm * tk * 2
                 + 2 * n_pad * 128 * 2
                 + 2 * n_pad * 128 * 4
                 + tm * 128 * 4)
    vmem_limit = int(min(64 * 1024 * 1024, max(32 * 1024 * 1024, 2 * vmem_need)))

    cost = pl.CostEstimate(
        flops=2 * num_layers * n_pad * n_pad * d,
        transcendentals=0,
        bytes_accessed=num_layers * n_pad * n_pad * 2 + 2 * n_pad * d * 4,
    )

    return pl.pallas_call(
        kernel,
        out_shape=jax.ShapeDtypeStruct((n_pad, d), jnp.float32),
        grid_spec=pltpu.PrefetchScalarGridSpec(
            num_scalar_prefetch=0,
            grid=(num_layers, n_pad // tm, n_pad // tk),
            in_specs=[
                pl.BlockSpec((tm, tk), lambda l, i, k: (i, k)),     # graph tile (bf16)
                pl.BlockSpec((n_pad, d), lambda l, i, k: (0, 0)),   # layer-0 embeds, DMA'd once
            ],
            out_specs=pl.BlockSpec((n_pad, d), lambda l, i, k: (0, 0)),  # resident mean acc
            scratch_shapes=[
                pltpu.VMEM((n_pad, d), jnp.bfloat16),   # cur  (layer l input)
                pltpu.VMEM((n_pad, d), jnp.bfloat16),   # next (layer l output)
                pltpu.VMEM((tm, d), jnp.float32),       # per-row-tile MXU accumulator
            ],
        ),
        compiler_params=pltpu.CompilerParams(
            # Cross-layer VMEM carry (cur/next) forbids splitting the row axis across
            # TensorCores, so every axis is sequential ("arbitrary").
            dimension_semantics=("arbitrary", "arbitrary", "arbitrary"),
            vmem_limit_bytes=vmem_limit,
        ),
        cost_estimate=cost,
    )(graph_bf16, all_embed)


# ----------------------------------------------------------------------------
# Kernel 2: fused gather + rowwise dot, lane-dense (1, B) output.
#   score[b] = sum_d mean_embed[users[b], d] * mean_embed[user_count + items[b], d]
# ----------------------------------------------------------------------------
def _score_kernel(users_ref, items_ref, emb_ref, out_ref, u_buf, i_buf,
                  *, user_count, tb):
    base = pl.program_id(0) * tb

    # Gather the user / item rows of this batch tile. Unrolled by 8 so the independent
    # SMEM-index -> dynamic (1, D) vld -> vst chains can co-issue on the load/store slots.
    def gather_row(r, carry):
        uidx = users_ref[base + r]
        iidx = items_ref[base + r] + user_count
        u_buf[pl.ds(r, 1), :] = emb_ref[pl.ds(uidx, 1), :]
        i_buf[pl.ds(r, 1), :] = emb_ref[pl.ds(iidx, 1), :]
        return carry

    lax.fori_loop(0, tb, gather_row, 0, unroll=8)

    prod = u_buf[...] * i_buf[...]                      # (TB, D) f32
    # `ones` is a single-vreg constant splat per step; kept inline because hoisting it into
    # a program_id(0)==0 - gated scratch init would be wrong on a "parallel" grid axis.
    ones = jnp.ones((1, prod.shape[1]), jnp.float32)
    # (1,D) x (TB,D) contracting D -> (1,TB): row-sums land lane-dense on the lane axis.
    out_ref[...] = lax.dot_general(
        ones, prod,
        dimension_numbers=(((1,), (1,)), ((), ())),
        preferred_element_type=jnp.float32,
    )


def fused_gather_score(mean_embed, users_idx, items_idx, user_count, *, batch_tile=256):
    n_pad, d = mean_embed.shape
    b_pad = users_idx.shape[0]
    tb = batch_tile
    assert tb % 128 == 0 and b_pad % tb == 0

    # TODO(synk): mean_embed is held fully VMEM-resident; for very large catalogs switch to
    # memory_space=pl.ANY + double-buffered async-copy row gather (does not fit v7x VMEM).
    kernel = functools.partial(_score_kernel, user_count=user_count, tb=tb)
    return pl.pallas_call(
        kernel,
        out_shape=jax.ShapeDtypeStruct((1, b_pad), jnp.float32),
        grid_spec=pltpu.PrefetchScalarGridSpec(
            num_scalar_prefetch=2,                       # users, items -> SMEM
            grid=(b_pad // tb,),
            in_specs=[pl.BlockSpec((n_pad, d), lambda bt, u, i: (0, 0))],
            out_specs=pl.BlockSpec((1, tb), lambda bt, u, i: (0, bt)),
            scratch_shapes=[
                pltpu.VMEM((tb, d), jnp.float32),
                pltpu.VMEM((tb, d), jnp.float32),
            ],
        ),
        compiler_params=pltpu.CompilerParams(
            dimension_semantics=("parallel",),
        ),
    )(users_idx, items_idx, mean_embed)


# ----------------------------------------------------------------------------
# Full NCL.forward equivalent (takes the pre-prepared padded bf16 graph).
# ----------------------------------------------------------------------------
def ncl_forward(embed_user, embed_item, graph_bf16_padded, users, items, num_layers,
                *, tm=256, tk=1024, batch_tile=256):
    user_count = embed_user.shape[0]
    item_count = embed_item.shape[0]
    n = user_count + item_count
    n_pad = graph_bf16_padded.shape[0]
    assert n_pad >= n and n_pad % tm == 0 and n_pad % tk == 0

    all_embed = jnp.concatenate([embed_user, embed_item], axis=0)      # (N, D)
    all_embed = jnp.pad(all_embed, ((0, n_pad - n), (0, 0)))           # zero rows: inert in G @ x

    mean_embed = lightgcn_propagate(graph_bf16_padded, all_embed, num_layers, tm=tm, tk=tk)

    b = users.shape[0]
    b_pad = _round_up(max(b, 1), batch_tile)
    # Padded batch slots gather row 0 / row user_count and produce garbage scores; they are
    # sliced off below — never consume scores beyond [:b].
    users_p = jnp.pad(users.astype(jnp.int32), (0, b_pad - b))
    items_p = jnp.pad(items.astype(jnp.int32), (0, b_pad - b))

    scores = fused_gather_score(mean_embed, users_p, items_p, user_count,
                                batch_tile=batch_tile)                 # (1, b_pad)
    return scores[0, :b]


# Pure-JAX f32 reference for validation.
def ncl_forward_ref(embed_user, embed_item, graph, users, items, num_layers):
    all_embed = jnp.concatenate([embed_user, embed_item], axis=0)
    embeds = [all_embed]
    cur = all_embed
    for _ in range(num_layers):
        cur = graph @ cur
        embeds.append(cur)
    mean_embed = jnp.mean(jnp.stack(embeds, axis=1), axis=1)
    u = mean_embed[: embed_user.shape[0]][users]
    i = mean_embed[embed_user.shape[0]:][items]
    return jnp.sum(u * i, axis=1)


def build_norm_adjacency(key, user_count, item_count):
    """Deterministic symmetric-normalized bipartite adjacency (LightGCN style)."""
    n = user_count + item_count
    inter = (jax.random.uniform(key, (user_count, item_count)) < 0.3).astype(jnp.float32)
    adj = jnp.zeros((n, n), jnp.float32)
    adj = adj.at[:user_count, user_count:].set(inter)
    adj = adj.at[user_count:, :user_count].set(inter.T)
    deg = jnp.sum(adj, axis=1)
    d_inv_sqrt = jnp.where(deg > 0, 1.0 / jnp.sqrt(jnp.maximum(deg, 1e-12)), 0.0)
    return adj * d_inv_sqrt[:, None] * d_inv_sqrt[None, :]


if __name__ == "__main__":
    # Small but multi-tile: N = 624 -> padded to 1024 -> (2 layers, 4 row tiles, 1 K tile).
    user_count = 300
    item_count = 324
    embed_size = 32
    num_layers = 2
    batch = 64
    tm, tk = 256, 1024
    batch_tile = 128
    # dropOut = 0.0  => sparse dropout in the reference is the identity.

    key = jax.random.PRNGKey(0)
    k_u, k_i, k_g, k_uid, k_iid = jax.random.split(key, 5)

    # nn.init.normal_(std=0.1) on both embedding tables.
    embed_user = 0.1 * jax.random.normal(k_u, (user_count, embed_size), jnp.float32)
    embed_item = 0.1 * jax.random.normal(k_i, (item_count, embed_size), jnp.float32)
    graph = build_norm_adjacency(k_g, user_count, item_count)

    # Graph prep happens ONCE here (graph-build time), not inside the forward.
    graph_bf16_padded = prepare_graph(graph, tm=tm, tk=tk)

    users = jax.random.randint(k_uid, (batch,), 0, user_count)
    items = jax.random.randint(k_iid, (batch,), 0, item_count)

    scores = ncl_forward(embed_user, embed_item, graph_bf16_padded, users, items,
                         num_layers, tm=tm, tk=tk, batch_tile=batch_tile)
    scores = jax.block_until_ready(scores)

    ref = ncl_forward_ref(embed_user, embed_item, graph, users, items, num_layers)
    assert scores.shape == (batch,)
    # bf16 graph / bf16 resident cur on the MXU (f32 accumulation) -> relaxed tolerance vs f32 ref.
    assert jnp.allclose(scores, ref, atol=2e-3, rtol=2e-2), (scores, ref)

    print("KERNEL_OK")
</pallas_src>

<mosaic_0001>
module attributes {stable_mosaic.version = 11 : i64} {
  func.func @_lightgcn_fused_kernel(%arg0: i32, %arg1: i32, %arg2: i32, %arg3: memref<256x1024xbf16, #tpu.memory_space<vmem>>, %arg4: memref<1024x32xf32, #tpu.memory_space<vmem>>, %arg5: memref<1024x32xf32, #tpu.memory_space<vmem>>, %arg6: memref<1024x32xbf16, #tpu.memory_space<vmem>>, %arg7: memref<1024x32xbf16, #tpu.memory_space<vmem>>, %arg8: memref<256x32xf32, #tpu.memory_space<vmem>>) attributes {dimension_semantics = [#tpu.dimension_semantics<arbitrary>, #tpu.dimension_semantics<arbitrary>, #tpu.dimension_semantics<arbitrary>], iteration_bounds = array<i64: 2, 4, 1>, scalar_prefetch = 0 : i64, scratch_operands = 3 : i64, tpu.core_type = #tpu.core_type<tc>, window_params = [{transform_indices = @transform_0, window_bounds = array<i64: 256, 1024>}, {pipeline_mode = #tpu.pipeline_mode<synchronous>, transform_indices = @transform_1, window_bounds = array<i64: 1024, 32>}, {pipeline_mode = #tpu.pipeline_mode<synchronous>, transform_indices = @transform_2, window_bounds = array<i64: 1024, 32>}]} {
    %c0_i32 = arith.constant 0 : i32
    %0 = arith.cmpi eq, %arg0, %c0_i32 : i32
    %c0_i32_0 = arith.constant 0 : i32
    %1 = arith.cmpi eq, %arg1, %c0_i32_0 : i32
    %2 = arith.andi %0, %1 : i1
    %c0_i32_1 = arith.constant 0 : i32
    %3 = arith.cmpi eq, %arg2, %c0_i32_1 : i32
    %4 = arith.andi %2, %3 : i1
    %5 = arith.extui %4 : i1 to i32
    %c0_i32_2 = arith.constant 0 : i32
    %6 = arith.cmpi ne, %5, %c0_i32_2 : i32
    scf.if %6 {
      %c0_18 = arith.constant 0 : index
      %c0_19 = arith.constant 0 : index
      %34 = vector.load %arg4[%c0_18, %c0_19] : memref<1024x32xf32, #tpu.memory_space<vmem>>, vector<1024x32xf32>
      %35 = arith.truncf %34 : vector<1024x32xf32> to vector<1024x32xbf16>
      %c0_20 = arith.constant 0 : index
      %c0_21 = arith.constant 0 : index
      %36 = vector.load %arg6[%c0_20, %c0_21] : memref<1024x32xbf16, #tpu.memory_space<vmem>>, vector<1024x32xbf16>
      tpu.vector_store %arg6[%c0_20, %c0_21], %35 {strides = array<i32>} : memref<1024x32xbf16, #tpu.memory_space<vmem>>, vector<1024x32xbf16>,
      %c0_22 = arith.constant 0 : index
      %c0_23 = arith.constant 0 : index
      %37 = vector.load %arg5[%c0_22, %c0_23] : memref<1024x32xf32, #tpu.memory_space<vmem>>, vector<1024x32xf32>
      tpu.vector_store %arg5[%c0_22, %c0_23], %34 {strides = array<i32>} : memref<1024x32xf32, #tpu.memory_space<vmem>>, vector<1024x32xf32>,
    } else {
    }
    %c0_i32_3 = arith.constant 0 : i32
    %7 = arith.cmpi eq, %arg2, %c0_i32_3 : i32
    %8 = arith.extui %7 : i1 to i32
    %c0_i32_4 = arith.constant 0 : i32
    %9 = arith.cmpi ne, %8, %c0_i32_4 : i32
    scf.if %9 {
      %cst_18 = arith.constant 0.000000e+00 : f32
      %34 = vector.broadcast %cst_18 : f32 to vector<256x32xf32>
      %c0_19 = arith.constant 0 : index
      %c0_20 = arith.constant 0 : index
      %35 = vector.load %arg8[%c0_19, %c0_20] : memref<256x32xf32, #tpu.memory_space<vmem>>, vector<256x32xf32>
      tpu.vector_store %arg8[%c0_19, %c0_20], %34 {strides = array<i32>} : memref<256x32xf32, #tpu.memory_space<vmem>>, vector<256x32xf32>,
    } else {
    }
    %c1024_i32 = arith.constant 1024 : i32
    %10 = arith.muli %arg2, %c1024_i32 : i32
    %11 = tpu.assume_multiple %10, 1024 : i32
    %c0 = arith.constant 0 : index
    %c0_5 = arith.constant 0 : index
    %12 = vector.load %arg8[%c0, %c0_5] : memref<256x32xf32, #tpu.memory_space<vmem>>, vector<256x32xf32>
    %c0_6 = arith.constant 0 : index
    %c0_7 = arith.constant 0 : index
    %13 = vector.load %arg3[%c0_6, %c0_7] : memref<256x1024xbf16, #tpu.memory_space<vmem>>, vector<256x1024xbf16>
    %14 = arith.index_cast %11 : i32 to index
    %c0_8 = arith.constant 0 : index
    %15 = vector.load %arg6[%14, %c0_8] : memref<1024x32xbf16, #tpu.memory_space<vmem>>, vector<1024x32xbf16>
    %cst = arith.constant dense<0.000000e+00> : vector<256x32xf32>
    %16 = tpu.matmul %13, %15, %cst {dimension_numbers = #tpu.dot_dimension_numbers<[1], [0], [0], [1], [0, 0, 1, 1], [], []>} : vector<256x1024xbf16>, vector<1024x32xbf16>, vector<256x32xf32> -> vector<256x32xf32>
    %17 = arith.addf %12, %16 : vector<256x32xf32>
    %c0_9 = arith.constant 0 : index
    %c0_10 = arith.constant 0 : index
    %18 = vector.load %arg8[%c0_9, %c0_10] : memref<256x32xf32, #tpu.memory_space<vmem>>, vector<256x32xf32>
    tpu.vector_store %arg8[%c0_9, %c0_10], %17 {strides = array<i32>} : memref<256x32xf32, #tpu.memory_space<vmem>>, vector<256x32xf32>,
    %c0_i32_11 = arith.constant 0 : i32
    %19 = arith.cmpi eq, %arg2, %c0_i32_11 : i32
    %20 = arith.extui %19 : i1 to i32
    %c0_i32_12 = arith.constant 0 : i32
    %21 = arith.cmpi ne, %20, %c0_i32_12 : i32
    scf.if %21 {
      %c0_18 = arith.constant 0 : index
      %c0_19 = arith.constant 0 : index
      %34 = vector.load %arg8[%c0_18, %c0_19] : memref<256x32xf32, #tpu.memory_space<vmem>>, vector<256x32xf32>
      %c256_i32 = arith.constant 256 : i32
      %35 = arith.muli %arg1, %c256_i32 : i32
      %36 = tpu.assume_multiple %35, 256 : i32
      %37 = arith.truncf %34 : vector<256x32xf32> to vector<256x32xbf16>
      %38 = arith.index_cast %36 : i32 to index
      %c0_20 = arith.constant 0 : index
      %39 = vector.load %arg7[%38, %c0_20] : memref<1024x32xbf16, #tpu.memory_space<vmem>>, vector<256x32xbf16>
      tpu.vector_store %arg7[%38, %c0_20], %37 {strides = array<i32>} : memref<1024x32xbf16, #tpu.memory_space<vmem>>, vector<256x32xbf16>,
      %40 = arith.index_cast %36 : i32 to index
      %c0_21 = arith.constant 0 : index
      %41 = vector.load %arg5[%40, %c0_21] : memref<1024x32xf32, #tpu.memory_space<vmem>>, vector<256x32xf32>
      %42 = arith.addf %41, %34 : vector<256x32xf32>
      %43 = arith.index_cast %36 : i32 to index
      %c0_22 = arith.constant 0 : index
      %44 = vector.load %arg5[%43, %c0_22] : memref<1024x32xf32, #tpu.memory_space<vmem>>, vector<256x32xf32>
      tpu.vector_store %arg5[%43, %c0_22], %42 {strides = array<i32>} : memref<1024x32xf32, #tpu.memory_space<vmem>>, vector<256x32xf32>,
    } else {
    }
    %c0_i32_13 = arith.constant 0 : i32
    %22 = arith.cmpi eq, %arg2, %c0_i32_13 : i32
    %c3_i32 = arith.constant 3 : i32
    %23 = arith.cmpi eq, %arg1, %c3_i32 : i32
    %24 = arith.andi %22, %23 : i1
    %25 = arith.extui %24 : i1 to i32
    %c0_i32_14 = arith.constant 0 : i32
    %26 = arith.cmpi ne, %25, %c0_i32_14 : i32
    scf.if %26 {
      %c0_18 = arith.constant 0 : index
      %c0_19 = arith.constant 0 : index
      %34 = vector.load %arg7[%c0_18, %c0_19] : memref<1024x32xbf16, #tpu.memory_space<vmem>>, vector<1024x32xbf16>
      %c0_20 = arith.constant 0 : index
      %c0_21 = arith.constant 0 : index
      %35 = vector.load %arg6[%c0_20, %c0_21] : memref<1024x32xbf16, #tpu.memory_space<vmem>>, vector<1024x32xbf16>
      tpu.vector_store %arg6[%c0_20, %c0_21], %34 {strides = array<i32>} : memref<1024x32xbf16, #tpu.memory_space<vmem>>, vector<1024x32xbf16>,
    } else {
    }
    %c1_i32 = arith.constant 1 : i32
    %27 = arith.cmpi eq, %arg0, %c1_i32 : i32
    %c3_i32_15 = arith.constant 3 : i32
    %28 = arith.cmpi eq, %arg1, %c3_i32_15 : i32
    %29 = arith.andi %27, %28 : i1
    %c0_i32_16 = arith.constant 0 : i32
    %30 = arith.cmpi eq, %arg2, %c0_i32_16 : i32
    %31 = arith.andi %29, %30 : i1
    %32 = arith.extui %31 : i1 to i32
    %c0_i32_17 = arith.constant 0 : i32
    %33 = arith.cmpi ne, %32, %c0_i32_17 : i32
    scf.if %33 {
      %c0_18 = arith.constant 0 : index
      %c0_19 = arith.constant 0 : index
      %34 = vector.load %arg5[%c0_18, %c0_19] : memref<1024x32xf32, #tpu.memory_space<vmem>>, vector<1024x32xf32>
      %cst_20 = arith.constant 0.333333343 : f32
      %35 = vector.broadcast %cst_20 : f32 to vector<1024x32xf32>
      %36 = arith.mulf %34, %35 : vector<1024x32xf32>
      %c0_21 = arith.constant 0 : index
      %c0_22 = arith.constant 0 : index
      %37 = vector.load %arg5[%c0_21, %c0_22] : memref<1024x32xf32, #tpu.memory_space<vmem>>, vector<1024x32xf32>
      tpu.vector_store %arg5[%c0_21, %c0_22], %36 {strides = array<i32>} : memref<1024x32xf32, #tpu.memory_space<vmem>>, vector<1024x32xf32>,
    } else {
    }
    return
  }
  func.func @transform_0(%arg0: i32, %arg1: i32, %arg2: i32) -> (i32, i32) {
    %c0_i32 = arith.constant 0 : i32
    return %arg1, %arg2 : i32, i32
  }
  func.func @transform_1(%arg0: i32, %arg1: i32, %arg2: i32) -> (i32, i32) {
    %c0_i32 = arith.constant 0 : i32
    %c0_i32_0 = arith.constant 0 : i32
    %c0_i32_1 = arith.constant 0 : i32
    return %c0_i32, %c0_i32_0 : i32, i32
  }
  func.func @transform_2(%arg0: i32, %arg1: i32, %arg2: i32) -> (i32, i32) {
    %c0_i32 = arith.constant 0 : i32
    %c0_i32_0 = arith.constant 0 : i32
    %c0_i32_1 = arith.constant 0 : i32
    return %c0_i32, %c0_i32_0 : i32, i32
  }
}

</mosaic_0001>

<llo_original>
// kernel: tpu_custom_call.1
$region0: #{tpu_custom_call.1}
  #allocation0 [shape = 'u32[]', space=smem, size = 0x4, offset = 0x4, fixed_abs, tag = 'smem constant byte address 0x4 - core index']
  #allocation1 [shape = 'u32[144,128]{1,0:T(1,128)}', space=vmem, size = 0x12000, scoped, tag = 'internal scratch']
  #allocation2 [shape = 'bf16[1024,32]{1,0:T(16,128)(2,1)}', space=vmem, size = 0x40000, scoped, tag = 'scratch operand']
  #allocation3 [shape = 'bf16[1024,32]{1,0:T(16,128)(2,1)}', space=vmem, size = 0x40000, scoped, tag = 'scratch operand']
  #allocation4 [shape = 'f32[256,32]{1,0:T(8,128)}', space=vmem, size = 0x20000, scoped, tag = 'scratch operand']
  %s0 = inlined_call_operand.hbm [shape: bf16[1024,1024], index: 0, kind: input, shape index: {}]
  %s1 = inlined_call_operand.vmem [shape: f32[1024,32], index: 1, kind: input, shape index: {}]
  %s2 = inlined_call_operand.vmem [shape: f32[1024,32], index: 2, kind: output, shape index: {}]
  %s3 = sld [smem:[#allocation0]]
  $region65: #{tpu_custom_call.1} parent=0
    _
  %s5 = ssub.s32 1, %s3
  %s6 = scalar_select 0, %s5, %s3
  $region1: #{tpu_custom_call.1} parent=0
    #allocation5 [shape = 'u8[1048576]{0}', space=vmem, size = 0x100000, scoped, tag = 'input window, operand 0']
    #allocation6 [shape = 's32[2]{0}', space=sflag, size = 0x8, scoped, tag = 'scoped memory for tpu_custom_call.1']
    %7 = vsyncpa [#allocation6], 0
    %s8 = scalar_lea.sflag [#allocation6], 1
    %9 = vsyncpa %s8, 0
    loop: start=0, step=1, limit=10
    $region2: #{tpu_custom_call.1} parent=1 // loop_pre_header
      _
    $region3: #{tpu_custom_call.1} parent=1 // loop_header
      %s11 = sphi 0, %s15
      %p12 = scmp.ge.s32.totalorder %s11, 10
      %s18 = sphi 0, %s37
      %s19 = sphi 0, %s33
      %s20 = sphi 0, %s29
      %s21 = sphi 0, %s18
      %s22 = sphi 0, %s19
      %s23 = sphi 0, %s20
      %s24 = sphi 0, %s21
      %s25 = sphi 0, %s22
      %s26 = sphi 0, %s23
      %s42 = sphi 0, %s44
      %s45 = sphi 0, %s42
      %s46 = sphi 0, %s45
      %s62 = sphi 0, %s46
      %s66 = sphi 0, %s66
      %s68 = sphi 0, %s66
      %s69 = sphi 0, %s68
      %s83 = sphi 0, %s69
      %s87 = sphi 0, %s87
      %s89 = sphi 0, %s87
      %s90 = sphi 0, %s89
      %s104 = sphi 0, %s90
    $region4: #{tpu_custom_call.1} parent=1 // loop_header_branch
      %14 = sbr.rel (%p12) target = $region8
    $region5: #{tpu_custom_call.1} parent=1 // loop_body
      %s16 = ssub.s32 %s11, 1
      %s17 = ssub.s32 %s11, 2
      %s27 = sadd.s32 1, %s20
      %p28 = scmp.ge.s32.totalorder %s27, 1
      %s29 = scalar_select %p28, 0, %s27
      %s30 = sadd.s32 1, %s19
      %s31 = scalar_select %p28, %s30, %s19
      %p32 = scmp.ge.s32.totalorder %s31, 4
      %s33 = scalar_select %p32, 0, %s31
      %s34 = sadd.s32 1, %s18
      %s35 = scalar_select %p32, %s34, %s18
      %p36 = scmp.ge.s32.totalorder %s35, 2
      %s37 = scalar_select %p36, 0, %s35
      %s38 = ssub.s32 %s19, %s33
      %s39 = ssub.s32 %s20, %s29
      %s40 = sor.u32 %s38, %s39
      %p41 = scmp.eq.s32.totalorder %s40, 0
      %s43 = sadd.s32 %s42, 1
      %s44 = scalar_select %p41, %s42, %s43
      %p47 = pneg %p41
      %p48 = scmp.eq.s32.totalorder %s11, 7
      %p49 = por %p47, %p48
      %p50 = scmp.ne.s32.totalorder %s42, %s45
      %p51 = scmp.eq.s32.totalorder %s11, 0
      %p52 = por %p50, %p51
      %p53 = scmp.ne.s32.totalorder %s42, %s45
      %p54 = scmp.eq.s32.totalorder %s16, 7
      %p55 = por %p53, %p54
      %p56 = scmp.ne.s32.totalorder %s45, %s46
      %p57 = scmp.eq.s32.totalorder %s16, 0
      %p58 = por %p56, %p57
      %p59 = scmp.ne.s32.totalorder %s45, %s46
      %p60 = scmp.eq.s32.totalorder %s17, 7
      %p61 = por %p59, %p60
      %p63 = scmp.ne.s32.totalorder %s46, %s62
      %p64 = scmp.eq.s32.totalorder %s17, 0
      %p65 = por %p63, %p64
      %s67 = sadd.s32 %s66, 1
      %p70 = scmp.eq.s32.totalorder %s11, 7
      %p71 = scmp.ne.s32.totalorder %s66, %s68
      %p72 = scmp.eq.s32.totalorder %s11, 0
      %p73 = por %p71, %p72
      %p74 = scmp.ne.s32.totalorder %s66, %s68
      %p75 = scmp.eq.s32.totalorder %s16, 7
      %p76 = por %p74, %p75
      %p77 = scmp.ne.s32.totalorder %s68, %s69
      %p78 = scmp.eq.s32.totalorder %s16, 0
      %p79 = por %p77, %p78
      %p80 = scmp.ne.s32.totalorder %s68, %s69
      %p81 = scmp.eq.s32.totalorder %s17, 7
      %p82 = por %p80, %p81
      %p84 = scmp.ne.s32.totalorder %s69, %s83
      %p85 = scmp.eq.s32.totalorder %s17, 0
      %p86 = por %p84, %p85
      %s88 = sadd.s32 %s87, 1
      %p91 = scmp.eq.s32.totalorder %s11, 7
      %p92 = scmp.ne.s32.totalorder %s87, %s89
      %p93 = scmp.eq.s32.totalorder %s11, 0
      %p94 = por %p92, %p93
      %p95 = scmp.ne.s32.totalorder %s87, %s89
      %p96 = scmp.eq.s32.totalorder %s16, 7
      %p97 = por %p95, %p96
      %p98 = scmp.ne.s32.totalorder %s89, %s90
      %p99 = scmp.eq.s32.totalorder %s16, 0
      %p100 = por %p98, %p99
      %p101 = scmp.ne.s32.totalorder %s89, %s90
      %p102 = scmp.eq.s32.totalorder %s17, 7
      %p103 = por %p101, %p102
      %p105 = scmp.ne.s32.totalorder %s90, %s104
      %p106 = scmp.eq.s32.totalorder %s17, 0
      %p107 = por %p105, %p106
      %p108 = scmp.le.s32.totalorder 1, %s11
      %p109 = scmp.lt.s32.totalorder %s11, 9
      %p110 = pnand %p108, %p109
      %p111 = pneg %p110
      // Predicated region
      $region9: #{tpu_custom_call.1} parent=5 // pred_check
        _
      $region10: #{tpu_custom_call.1} parent=5 // pred_check_branch
        %113 = sbr.rel (%p110) target = $region12
      $region11: #{tpu_custom_call.1} parent=5 // pred_region
        %s114 = ssub.s32 %s11, 1
        // Predicated region
        $region13: #{tpu_custom_call.1} parent=11 // pred_check
          %p115 = pneg %p79
        $region14: #{tpu_custom_call.1} parent=11 // pred_check_branch
          %117 = sbr.rel (%p115) target = $region16
        $region15: #{tpu_custom_call.1} parent=11 // pred_region
          _
        $region16: #{tpu_custom_call.1} parent=11 // pred_fallthru
          _
      $region12: #{tpu_custom_call.1} parent=5 // pred_fallthru
        _
      %p118 = scmp.lt.s32.totalorder %s11, 8
      // Predicated region
      $region17: #{tpu_custom_call.1} parent=5 // pred_check
        %p119 = pneg %p118
      $region18: #{tpu_custom_call.1} parent=5 // pred_check_branch
        %121 = sbr.rel (%p119) target = $region20
      $region19: #{tpu_custom_call.1} parent=5 // pred_region
        // Predicated region
        $region21: #{tpu_custom_call.1} parent=19 // pred_check
          %p122 = pneg %p52
        $region22: #{tpu_custom_call.1} parent=19 // pred_check_branch
          %124 = sbr.rel (%p122) target = $region24
        $region23: #{tpu_custom_call.1} parent=19 // pred_region
          %s125 = sand.u32 %s42, 1
          %s126 = scalar_lea.sflag [#allocation6], %s125
          %s127 = sand.u32 %s42, 1
          %s128 = smul.addr %s127, 1024
          %s129 = scalar_lea.vmem [#allocation5], %s128
          %s130 = smul.u32 32, %s19
          %s131 = smul.u32 8, %s20
          %s133 = ssub.s32 16384, 16384
          %134 = vsyncadd %s126, %s133
          %s135 = smul.addr %s130, 8
          %s136 = sadd.s32 %s131, %s135
          %s137 = smul.addr %s136, 64
          %s138 = scalar_lea.hbm %s0, %s137
          %s139 = sshll.u32 %s129, 4
          %s140 = int_to_ptr.vmem [resolvable:$true] %s139
          %145 = dma.hbm_to_vmem [thread:$0]  %s138, 16384, %s140, %s126, 512, 512, 32
        $region24: #{tpu_custom_call.1} parent=19 // pred_fallthru
          _
      $region20: #{tpu_custom_call.1} parent=5 // pred_fallthru
        _
      %p146 = scmp.le.s32.totalorder 1, %s11
      %p147 = scmp.lt.s32.totalorder %s11, 9
      %p148 = pnand %p146, %p147
      %p149 = pneg %p148
      // Predicated region
      $region25: #{tpu_custom_call.1} parent=5 // pred_check
        _
      $region26: #{tpu_custom_call.1} parent=5 // pred_check_branch
        %151 = sbr.rel (%p148) target = $region28
      $region27: #{tpu_custom_call.1} parent=5 // pred_region
        %s152 = ssub.s32 %s11, 1
        %s153 = sand.u32 %s45, 1
        %s154 = scalar_lea.sflag [#allocation6], %s153
        %s155 = sand.u32 %s45, 1
        %s156 = smul.addr %s155, 1024
        %s157 = scalar_lea.vmem [#allocation5], %s156
        // Predicated region
        $region29: #{tpu_custom_call.1} parent=27 // pred_check
          %p158 = pneg %p58
        $region30: #{tpu_custom_call.1} parent=27 // pred_check_branch
          %160 = sbr.rel (%p158) target = $region32
        $region31: #{tpu_custom_call.1} parent=27 // pred_region
          %161 = dma.done %s154, 16384
        $region32: #{tpu_custom_call.1} parent=27 // pred_fallthru
          _
        %s162 = sand.u32 %s45, 1
        %s163 = scalar_lea.sflag [#allocation6], %s162
        %s164 = sand.u32 %s45, 1
        %s165 = smul.addr %s164, 1024
        %s166 = scalar_lea.vmem [#allocation5], %s165
        %p167 = pneg %p58
        %p168 = pneg %p55
        %p169 = pneg %p79
        %p170 = pneg %p76
        %p171 = pneg %p100
        %p172 = pneg %p97
        %s173 = smul.u32 32, %s22
        %s174 = smul.u32 8, %s23
        %p176 = scmp.eq.s32.totalorder %s21, 0
        %p177 = scmp.eq.s32.totalorder %s22, 0
        %p178 = pnand %p176, %p177
        %p179 = pneg %p178
        %p180 = scmp.eq.s32.totalorder %s23, 0
        %p181 = pnand %p179, %p180
        %p182 = pneg %p181
        // Predicated region
        $region33: #{tpu_custom_call.1} parent=27 // pred_check
          _
        $region34: #{tpu_custom_call.1} parent=27 // pred_check_branch
          %184 = sbr.rel (%p181) target = $region36
        $region35: #{tpu_custom_call.1} parent=27 // pred_region
          %v185 = vld [vmem:[%s1] sm:$0xff]
          %v186 = vld [vmem:[%s1 + $0x8] sm:$0xff]
          %v187 = vld [vmem:[%s1 + $0x10] sm:$0xff]
          %v188 = vld [vmem:[%s1 + $0x18] sm:$0xff]
          %v189 = vld [vmem:[%s1 + $0x20] sm:$0xff]
          %v190 = vld [vmem:[%s1 + $0x28] sm:$0xff]
          %v191 = vld [vmem:[%s1 + $0x30] sm:$0xff]
          %v192 = vld [vmem:[%s1 + $0x38] sm:$0xff]
          %v193 = vld [vmem:[%s1 + $0x40] sm:$0xff]
          %v194 = vld [vmem:[%s1 + $0x48] sm:$0xff]
          %v195 = vld [vmem:[%s1 + $0x50] sm:$0xff]
          %v196 = vld [vmem:[%s1 + $0x58] sm:$0xff]
          %v197 = vld [vmem:[%s1 + $0x60] sm:$0xff]
          %v198 = vld [vmem:[%s1 + $0x68] sm:$0xff]
          %v199 = vld [vmem:[%s1 + $0x70] sm:$0xff]
          %v200 = vld [vmem:[%s1 + $0x78] sm:$0xff]
          %v201 = vld [vmem:[%s1 + $0x80] sm:$0xff]
          %v202 = vld [vmem:[%s1 + $0x88] sm:$0xff]
          %v203 = vld [vmem:[%s1 + $0x90] sm:$0xff]
          %v204 = vld [vmem:[%s1 + $0x98] sm:$0xff]
          %v205 = vld [vmem:[%s1 + $0xa0] sm:$0xff]
          %v206 = vld [vmem:[%s1 + $0xa8] sm:$0xff]
          %v207 = vld [vmem:[%s1 + $0xb0] sm:$0xff]
          %v208 = vld [vmem:[%s1 + $0xb8] sm:$0xff]
          %v209 = vld [vmem:[%s1 + $0xc0] sm:$0xff]
          %v210 = vld [vmem:[%s1 + $0xc8] sm:$0xff]
          %v211 = vld [vmem:[%s1 + $0xd0] sm:$0xff]
          %v212 = vld [vmem:[%s1 + $0xd8] sm:$0xff]
          %v213 = vld [vmem:[%s1 + $0xe0] sm:$0xff]
          %v214 = vld [vmem:[%s1 + $0xe8] sm:$0xff]
          %v215 = vld [vmem:[%s1 + $0xf0] sm:$0xff]
          %v216 = vld [vmem:[%s1 + $0xf8] sm:$0xff]
          %v217 = vld [vmem:[%s1 + $0x100] sm:$0xff]
          %v218 = vld [vmem:[%s1 + $0x108] sm:$0xff]
          %v219 = vld [vmem:[%s1 + $0x110] sm:$0xff]
          %v220 = vld [vmem:[%s1 + $0x118] sm:$0xff]
          %v221 = vld [vmem:[%s1 + $0x120] sm:$0xff]
          %v222 = vld [vmem:[%s1 + $0x128] sm:$0xff]
          %v223 = vld [vmem:[%s1 + $0x130] sm:$0xff]
          %v224 = vld [vmem:[%s1 + $0x138] sm:$0xff]
          %v225 = vld [vmem:[%s1 + $0x140] sm:$0xff]
          %v226 = vld [vmem:[%s1 + $0x148] sm:$0xff]
          %v227 = vld [vmem:[%s1 + $0x150] sm:$0xff]
          %v228 = vld [vmem:[%s1 + $0x158] sm:$0xff]
          %v229 = vld [vmem:[%s1 + $0x160] sm:$0xff]
          %v230 = vld [vmem:[%s1 + $0x168] sm:$0xff]
          %v231 = vld [vmem:[%s1 + $0x170] sm:$0xff]
          %v232 = vld [vmem:[%s1 + $0x178] sm:$0xff]
          %v233 = vld [vmem:[%s1 + $0x180] sm:$0xff]
          %v234 = vld [vmem:[%s1 + $0x188] sm:$0xff]
          %v235 = vld [vmem:[%s1 + $0x190] sm:$0xff]
          %v236 = vld [vmem:[%s1 + $0x198] sm:$0xff]
          %v237 = vld [vmem:[%s1 + $0x1a0] sm:$0xff]
          %v238 = vld [vmem:[%s1 + $0x1a8] sm:$0xff]
          %v239 = vld [vmem:[%s1 + $0x1b0] sm:$0xff]
          %v240 = vld [vmem:[%s1 + $0x1b8] sm:$0xff]
          %v241 = vld [vmem:[%s1 + $0x1c0] sm:$0xff]
          %v242 = vld [vmem:[%s1 + $0x1c8] sm:$0xff]
          %v243 = vld [vmem:[%s1 + $0x1d0] sm:$0xff]
          %v244 = vld [vmem:[%s1 + $0x1d8] sm:$0xff]
          %v245 = vld [vmem:[%s1 + $0x1e0] sm:$0xff]
          %v246 = vld [vmem:[%s1 + $0x1e8] sm:$0xff]
          %v247 = vld [vmem:[%s1 + $0x1f0] sm:$0xff]
          %v248 = vld [vmem:[%s1 + $0x1f8] sm:$0xff]
          %v249 = vld [vmem:[%s1 + $0x200] sm:$0xff]
          %v250 = vld [vmem:[%s1 + $0x208] sm:$0xff]
          %v251 = vld [vmem:[%s1 + $0x210] sm:$0xff]
          %v252 = vld [vmem:[%s1 + $0x218] sm:$0xff]
          %v253 = vld [vmem:[%s1 + $0x220] sm:$0xff]
          %v254 = vld [vmem:[%s1 + $0x228] sm:$0xff]
          %v255 = vld [vmem:[%s1 + $0x230] sm:$0xff]
          %v256 = vld [vmem:[%s1 + $0x238] sm:$0xff]
          %v257 = vld [vmem:[%s1 + $0x240] sm:$0xff]
          %v258 = vld [vmem:[%s1 + $0x248] sm:$0xff]
          %v259 = vld [vmem:[%s1 + $0x250] sm:$0xff]
          %v260 = vld [vmem:[%s1 + $0x258] sm:$0xff]
          %v261 = vld [vmem:[%s1 + $0x260] sm:$0xff]
          %v262 = vld [vmem:[%s1 + $0x268] sm:$0xff]
          %v263 = vld [vmem:[%s1 + $0x270] sm:$0xff]
          %v264 = vld [vmem:[%s1 + $0x278] sm:$0xff]
          %v265 = vld [vmem:[%s1 + $0x280] sm:$0xff]
          %v266 = vld [vmem:[%s1 + $0x288] sm:$0xff]
          %v267 = vld [vmem:[%s1 + $0x290] sm:$0xff]
          %v268 = vld [vmem:[%s1 + $0x298] sm:$0xff]
          %v269 = vld [vmem:[%s1 + $0x2a0] sm:$0xff]
          %v270 = vld [vmem:[%s1 + $0x2a8] sm:$0xff]
          %v271 = vld [vmem:[%s1 + $0x2b0] sm:$0xff]
          %v272 = vld [vmem:[%s1 + $0x2b8] sm:$0xff]
          %v273 = vld [vmem:[%s1 + $0x2c0] sm:$0xff]
          %v274 = vld [vmem:[%s1 + $0x2c8] sm:$0xff]
          %v275 = vld [vmem:[%s1 + $0x2d0] sm:$0xff]
          %v276 = vld [vmem:[%s1 + $0x2d8] sm:$0xff]
          %v277 = vld [vmem:[%s1 + $0x2e0] sm:$0xff]
          %v278 = vld [vmem:[%s1 + $0x2e8] sm:$0xff]
          %v279 = vld [vmem:[%s1 + $0x2f0] sm:$0xff]
          %v280 = vld [vmem:[%s1 + $0x2f8] sm:$0xff]
          %v281 = vld [vmem:[%s1 + $0x300] sm:$0xff]
          %v282 = vld [vmem:[%s1 + $0x308] sm:$0xff]
          %v283 = vld [vmem:[%s1 + $0x310] sm:$0xff]
          %v284 = vld [vmem:[%s1 + $0x318] sm:$0xff]
          %v285 = vld [vmem:[%s1 + $0x320] sm:$0xff]
          %v286 = vld [vmem:[%s1 + $0x328] sm:$0xff]
          %v287 = vld [vmem:[%s1 + $0x330] sm:$0xff]
          %v288 = vld [vmem:[%s1 + $0x338] sm:$0xff]
          %v289 = vld [vmem:[%s1 + $0x340] sm:$0xff]
          %v290 = vld [vmem:[%s1 + $0x348] sm:$0xff]
          %v291 = vld [vmem:[%s1 + $0x350] sm:$0xff]
          %v292 = vld [vmem:[%s1 + $0x358] sm:$0xff]
          %v293 = vld [vmem:[%s1 + $0x360] sm:$0xff]
          %v294 = vld [vmem:[%s1 + $0x368] sm:$0xff]
          %v295 = vld [vmem:[%s1 + $0x370] sm:$0xff]
          %v296 = vld [vmem:[%s1 + $0x378] sm:$0xff]
          %v297 = vld [vmem:[%s1 + $0x380] sm:$0xff]
          %v298 = vld [vmem:[%s1 + $0x388] sm:$0xff]
          %v299 = vld [vmem:[%s1 + $0x390] sm:$0xff]
          %v300 = vld [vmem:[%s1 + $0x398] sm:$0xff]
          %v301 = vld [vmem:[%s1 + $0x3a0] sm:$0xff]
          %v302 = vld [vmem:[%s1 + $0x3a8] sm:$0xff]
          %v303 = vld [vmem:[%s1 + $0x3b0] sm:$0xff]
          %v304 = vld [vmem:[%s1 + $0x3b8] sm:$0xff]
          %v305 = vld [vmem:[%s1 + $0x3c0] sm:$0xff]
          %v306 = vld [vmem:[%s1 + $0x3c8] sm:$0xff]
          %v307 = vld [vmem:[%s1 + $0x3d0] sm:$0xff]
          %v308 = vld [vmem:[%s1 + $0x3d8] sm:$0xff]
          %v309 = vld [vmem:[%s1 + $0x3e0] sm:$0xff]
          %v310 = vld [vmem:[%s1 + $0x3e8] sm:$0xff]
          %v311 = vld [vmem:[%s1 + $0x3f0] sm:$0xff]
          %v312 = vld [vmem:[%s1 + $0x3f8] sm:$0xff]
          %v313 = vpack.c.bf16 %v186, %v185
          %v314 = vpack.c.bf16 %v188, %v187
          %v315 = vpack.c.bf16 %v190, %v189
          %v316 = vpack.c.bf16 %v192, %v191
          %v317 = vpack.c.bf16 %v194, %v193
          %v318 = vpack.c.bf16 %v196, %v195
          %v319 = vpack.c.bf16 %v198, %v197
          %v320 = vpack.c.bf16 %v200, %v199
          %v321 = vpack.c.bf16 %v202, %v201
          %v322 = vpack.c.bf16 %v204, %v203
          %v323 = vpack.c.bf16 %v206, %v205
          %v324 = vpack.c.bf16 %v208, %v207
          %v325 = vpack.c.bf16 %v210, %v209
          %v326 = vpack.c.bf16 %v212, %v211
          %v327 = vpack.c.bf16 %v214, %v213
          %v328 = vpack.c.bf16 %v216, %v215
          %v329 = vpack.c.bf16 %v218, %v217
          %v330 = vpack.c.bf16 %v220, %v219
          %v331 = vpack.c.bf16 %v222, %v221
          %v332 = vpack.c.bf16 %v224, %v223
          %v333 = vpack.c.bf16 %v226, %v225
          %v334 = vpack.c.bf16 %v228, %v227
          %v335 = vpack.c.bf16 %v230, %v229
          %v336 = vpack.c.bf16 %v232, %v231
          %v337 = vpack.c.bf16 %v234, %v233
          %v338 = vpack.c.bf16 %v236, %v235
          %v339 = vpack.c.bf16 %v238, %v237
          %v340 = vpack.c.bf16 %v240, %v239
          %v341 = vpack.c.bf16 %v242, %v241
          %v342 = vpack.c.bf16 %v244, %v243
          %v343 = vpack.c.bf16 %v246, %v245
          %v344 = vpack.c.bf16 %v248, %v247
          %v345 = vpack.c.bf16 %v250, %v249
          %v346 = vpack.c.bf16 %v252, %v251
          %v347 = vpack.c.bf16 %v254, %v253
          %v348 = vpack.c.bf16 %v256, %v255
          %v349 = vpack.c.bf16 %v258, %v257
          %v350 = vpack.c.bf16 %v260, %v259
          %v351 = vpack.c.bf16 %v262, %v261
          %v352 = vpack.c.bf16 %v264, %v263
          %v353 = vpack.c.bf16 %v266, %v265
          %v354 = vpack.c.bf16 %v268, %v267
          %v355 = vpack.c.bf16 %v270, %v269
          %v356 = vpack.c.bf16 %v272, %v271
          %v357 = vpack.c.bf16 %v274, %v273
          %v358 = vpack.c.bf16 %v276, %v275
          %v359 = vpack.c.bf16 %v278, %v277
          %v360 = vpack.c.bf16 %v280, %v279
          %v361 = vpack.c.bf16 %v282, %v281
          %v362 = vpack.c.bf16 %v284, %v283
          %v363 = vpack.c.bf16 %v286, %v285
          %v364 = vpack.c.bf16 %v288, %v287
          %v365 = vpack.c.bf16 %v290, %v289
          %v366 = vpack.c.bf16 %v292, %v291
          %v367 = vpack.c.bf16 %v294, %v293
          %v368 = vpack.c.bf16 %v296, %v295
          %v369 = vpack.c.bf16 %v298, %v297
          %v370 = vpack.c.bf16 %v300, %v299
          %v371 = vpack.c.bf16 %v302, %v301
          %v372 = vpack.c.bf16 %v304, %v303
          %v373 = vpack.c.bf16 %v306, %v305
          %v374 = vpack.c.bf16 %v308, %v307
          %v375 = vpack.c.bf16 %v310, %v309
          %v376 = vpack.c.bf16 %v312, %v311
          %vm377 = vcmask 261120
          %378 = vst.msk [vmem:[#allocation2] sm:$0xff] %vm377, %v313
          %379 = vst.msk [vmem:[#allocation2 + $0x8] sm:$0xff] %vm377, %v314
          %380 = vst.msk [vmem:[#allocation2 + $0x10] sm:$0xff] %vm377, %v315
          %381 = vst.msk [vmem:[#allocation2 + $0x18] sm:$0xff] %vm377, %v316
          %382 = vst.msk [vmem:[#allocation2 + $0x20] sm:$0xff] %vm377, %v317
          %383 = vst.msk [vmem:[#allocation2 + $0x28] sm:$0xff] %vm377, %v318
          %384 = vst.msk [vmem:[#allocation2 + $0x30] sm:$0xff] %vm377, %v319
          %385 = vst.msk [vmem:[#allocation2 + $0x38] sm:$0xff] %vm377, %v320
          %386 = vst.msk [vmem:[#allocation2 + $0x40] sm:$0xff] %vm377, %v321
          %387 = vst.msk [vmem:[#allocation2 + $0x48] sm:$0xff] %vm377, %v322
          %388 = vst.msk [vmem:[#allocation2 + $0x50] sm:$0xff] %vm377, %v323
          %389 = vst.msk [vmem:[#allocation2 + $0x58] sm:$0xff] %vm377, %v324
          %390 = vst.msk [vmem:[#allocation2 + $0x60] sm:$0xff] %vm377, %v325
          %391 = vst.msk [vmem:[#allocation2 + $0x68] sm:$0xff] %vm377, %v326
          %392 = vst.msk [vmem:[#allocation2 + $0x70] sm:$0xff] %vm377, %v327
          %393 = vst.msk [vmem:[#allocation2 + $0x78] sm:$0xff] %vm377, %v328
          %394 = vst.msk [vmem:[#allocation2 + $0x80] sm:$0xff] %vm377, %v329
          %395 = vst.msk [vmem:[#allocation2 + $0x88] sm:$0xff] %vm377, %v330
          %396 = vst.msk [vmem:[#allocation2 + $0x90] sm:$0xff] %vm377, %v331
          %397 = vst.msk [vmem:[#allocation2 + $0x98] sm:$0xff] %vm377, %v332
          %398 = vst.msk [vmem:[#allocation2 + $0xa0] sm:$0xff] %vm377, %v333
          %399 = vst.msk [vmem:[#allocation2 + $0xa8] sm:$0xff] %vm377, %v334
          %400 = vst.msk [vmem:[#allocation2 + $0xb0] sm:$0xff] %vm377, %v335
          %401 = vst.msk [vmem:[#allocation2 + $0xb8] sm:$0xff] %vm377, %v336
          %402 = vst.msk [vmem:[#allocation2 + $0xc0] sm:$0xff] %vm377, %v337
          %403 = vst.msk [vmem:[#allocation2 + $0xc8] sm:$0xff] %vm377, %v338
          %404 = vst.msk [vmem:[#allocation2 + $0xd0] sm:$0xff] %vm377, %v339
          %405 = vst.msk [vmem:[#allocation2 + $0xd8] sm:$0xff] %vm377, %v340
          %406 = vst.msk [vmem:[#allocation2 + $0xe0] sm:$0xff] %vm377, %v341
          %407 = vst.msk [vmem:[#allocation2 + $0xe8] sm:$0xff] %vm377, %v342
          %408 = vst.msk [vmem:[#allocation2 + $0xf0] sm:$0xff] %vm377, %v343
          %409 = vst.msk [vmem:[#allocation2 + $0xf8] sm:$0xff] %vm377, %v344
          %410 = vst.msk [vmem:[#allocation2 + $0x100] sm:$0xff] %vm377, %v345
          %411 = vst.msk [vmem:[#allocation2 + $0x108] sm:$0xff] %vm377, %v346
          %412 = vst.msk [vmem:[#allocation2 + $0x110] sm:$0xff] %vm377, %v347
          %413 = vst.msk [vmem:[#allocation2 + $0x118] sm:$0xff] %vm377, %v348
          %414 = vst.msk [vmem:[#allocation2 + $0x120] sm:$0xff] %vm377, %v349
          %415 = vst.msk [vmem:[#allocation2 + $0x128] sm:$0xff] %vm377, %v350
          %416 = vst.msk [vmem:[#allocation2 + $0x130] sm:$0xff] %vm377, %v351
          %417 = vst.msk [vmem:[#allocation2 + $0x138] sm:$0xff] %vm377, %v352
          %418 = vst.msk [vmem:[#allocation2 + $0x140] sm:$0xff] %vm377, %v353
          %419 = vst.msk [vmem:[#allocation2 + $0x148] sm:$0xff] %vm377, %v354
          %420 = vst.msk [vmem:[#allocation2 + $0x150] sm:$0xff] %vm377, %v355
          %421 = vst.msk [vmem:[#allocation2 + $0x158] sm:$0xff] %vm377, %v356
          %422 = vst.msk [vmem:[#allocation2 + $0x160] sm:$0xff] %vm377, %v357
          %423 = vst.msk [vmem:[#allocation2 + $0x168] sm:$0xff] %vm377, %v358
          %424 = vst.msk [vmem:[#allocation2 + $0x170] sm:$0xff] %vm377, %v359
          %425 = vst.msk [vmem:[#allocation2 + $0x178] sm:$0xff] %vm377, %v360
          %426 = vst.msk [vmem:[#allocation2 + $0x180] sm:$0xff] %vm377, %v361
          %427 = vst.msk [vmem:[#allocation2 + $0x188] sm:$0xff] %vm377, %v362
          %428 = vst.msk [vmem:[#allocation2 + $0x190] sm:$0xff] %vm377, %v363
          %429 = vst.msk [vmem:[#allocation2 + $0x198] sm:$0xff] %vm377, %v364
          %430 = vst.msk [vmem:[#allocation2 + $0x1a0] sm:$0xff] %vm377, %v365
          %431 = vst.msk [vmem:[#allocation2 + $0x1a8] sm:$0xff] %vm377, %v366
          %432 = vst.msk [vmem:[#allocation2 + $0x1b0] sm:$0xff] %vm377, %v367
          %433 = vst.msk [vmem:[#allocation2 + $0x1b8] sm:$0xff] %vm377, %v368
          %434 = vst.msk [vmem:[#allocation2 + $0x1c0] sm:$0xff] %vm377, %v369
          %435 = vst.msk [vmem:[#allocation2 + $0x1c8] sm:$0xff] %vm377, %v370
          %436 = vst.msk [vmem:[#allocation2 + $0x1d0] sm:$0xff] %vm377, %v371
          %437 = vst.msk [vmem:[#allocation2 + $0x1d8] sm:$0xff] %vm377, %v372
          %438 = vst.msk [vmem:[#allocation2 + $0x1e0] sm:$0xff] %vm377, %v373
          %439 = vst.msk [vmem:[#allocation2 + $0x1e8] sm:$0xff] %vm377, %v374
          %440 = vst.msk [vmem:[#allocation2 + $0x1f0] sm:$0xff] %vm377, %v375
          %441 = vst.msk [vmem:[#allocation2 + $0x1f8] sm:$0xff] %vm377, %v376
          %442 = vst.msk [vmem:[%s2] sm:$0xff] %vm377, %v185
          %443 = vst.msk [vmem:[%s2 + $0x8] sm:$0xff] %vm377, %v186
          %444 = vst.msk [vmem:[%s2 + $0x10] sm:$0xff] %vm377, %v187
          %445 = vst.msk [vmem:[%s2 + $0x18] sm:$0xff] %vm377, %v188
          %446 = vst.msk [vmem:[%s2 + $0x20] sm:$0xff] %vm377, %v189
          %447 = vst.msk [vmem:[%s2 + $0x28] sm:$0xff] %vm377, %v190
          %448 = vst.msk [vmem:[%s2 + $0x30] sm:$0xff] %vm377, %v191
          %449 = vst.msk [vmem:[%s2 + $0x38] sm:$0xff] %vm377, %v192
          %450 = vst.msk [vmem:[%s2 + $0x40] sm:$0xff] %vm377, %v193
          %451 = vst.msk [vmem:[%s2 + $0x48] sm:$0xff] %vm377, %v194
          %452 = vst.msk [vmem:[%s2 + $0x50] sm:$0xff] %vm377, %v195
          %453 = vst.msk [vmem:[%s2 + $0x58] sm:$0xff] %vm377, %v196
          %454 = vst.msk [vmem:[%s2 + $0x60] sm:$0xff] %vm377, %v197
          %455 = vst.msk [vmem:[%s2 + $0x68] sm:$0xff] %vm377, %v198
          %456 = vst.msk [vmem:[%s2 + $0x70] sm:$0xff] %vm377, %v199
          %457 = vst.msk [vmem:[%s2 + $0x78] sm:$0xff] %vm377, %v200
          %458 = vst.msk [vmem:[%s2 + $0x80] sm:$0xff] %vm377, %v201
          %459 = vst.msk [vmem:[%s2 + $0x88] sm:$0xff] %vm377, %v202
          %460 = vst.msk [vmem:[%s2 + $0x90] sm:$0xff] %vm377, %v203
          %461 = vst.msk [vmem:[%s2 + $0x98] sm:$0xff] %vm377, %v204
          %462 = vst.msk [vmem:[%s2 + $0xa0] sm:$0xff] %vm377, %v205
          %463 = vst.msk [vmem:[%s2 + $0xa8] sm:$0xff] %vm377, %v206
          %464 = vst.msk [vmem:[%s2 + $0xb0] sm:$0xff] %vm377, %v207
          %465 = vst.msk [vmem:[%s2 + $0xb8] sm:$0xff] %vm377, %v208
          %466 = vst.msk [vmem:[%s2 + $0xc0] sm:$0xff] %vm377, %v209
          %467 = vst.msk [vmem:[%s2 + $0xc8] sm:$0xff] %vm377, %v210
          %468 = vst.msk [vmem:[%s2 + $0xd0] sm:$0xff] %vm377, %v211
          %469 = vst.msk [vmem:[%s2 + $0xd8] sm:$0xff] %vm377, %v212
          %470 = vst.msk [vmem:[%s2 + $0xe0] sm:$0xff] %vm377, %v213
          %471 = vst.msk [vmem:[%s2 + $0xe8] sm:$0xff] %vm377, %v214
          %472 = vst.msk [vmem:[%s2 + $0xf0] sm:$0xff] %vm377, %v215
          %473 = vst.msk [vmem:[%s2 + $0xf8] sm:$0xff] %vm377, %v216
          %474 = vst.msk [vmem:[%s2 + $0x100] sm:$0xff] %vm377, %v217
          %475 = vst.msk [vmem:[%s2 + $0x108] sm:$0xff] %vm377, %v218
          %476 = vst.msk [vmem:[%s2 + $0x110] sm:$0xff] %vm377, %v219
          %477 = vst.msk [vmem:[%s2 + $0x118] sm:$0xff] %vm377, %v220
          %478 = vst.msk [vmem:[%s2 + $0x120] sm:$0xff] %vm377, %v221
          %479 = vst.msk [vmem:[%s2 + $0x128] sm:$0xff] %vm377, %v222
          %480 = vst.msk [vmem:[%s2 + $0x130] sm:$0xff] %vm377, %v223
          %481 = vst.msk [vmem:[%s2 + $0x138] sm:$0xff] %vm377, %v224
          %482 = vst.msk [vmem:[%s2 + $0x140] sm:$0xff] %vm377, %v225
          %483 = vst.msk [vmem:[%s2 + $0x148] sm:$0xff] %vm377, %v226
          %484 = vst.msk [vmem:[%s2 + $0x150] sm:$0xff] %vm377, %v227
          %485 = vst.msk [vmem:[%s2 + $0x158] sm:$0xff] %vm377, %v228
          %486 = vst.msk [vmem:[%s2 + $0x160] sm:$0xff] %vm377, %v229
          %487 = vst.msk [vmem:[%s2 + $0x168] sm:$0xff] %vm377, %v230
          %488 = vst.msk [vmem:[%s2 + $0x170] sm:$0xff] %vm377, %v231
          %489 = vst.msk [vmem:[%s2 + $0x178] sm:$0xff] %vm377, %v232
          %490 = vst.msk [vmem:[%s2 + $0x180] sm:$0xff] %vm377, %v233
          %491 = vst.msk [vmem:[%s2 + $0x188] sm:$0xff] %vm377, %v234
          %492 = vst.msk [vmem:[%s2 + $0x190] sm:$0xff] %vm377, %v235
          %493 = vst.msk [vmem:[%s2 + $0x198] sm:$0xff] %vm377, %v236
          %494 = vst.msk [vmem:[%s2 + $0x1a0] sm:$0xff] %vm377, %v237
          %495 = vst.msk [vmem:[%s2 + $0x1a8] sm:$0xff] %vm377, %v238
          %496 = vst.msk [vmem:[%s2 + $0x1b0] sm:$0xff] %vm377, %v239
          %497 = vst.msk [vmem:[%s2 + $0x1b8] sm:$0xff] %vm377, %v240
          %498 = vst.msk [vmem:[%s2 + $0x1c0] sm:$0xff] %vm377, %v241
          %499 = vst.msk [vmem:[%s2 + $0x1c8] sm:$0xff] %vm377, %v242
          %500 = vst.msk [vmem:[%s2 + $0x1d0] sm:$0xff] %vm377, %v243
          %501 = vst.msk [vmem:[%s2 + $0x1d8] sm:$0xff] %vm377, %v244
          %502 = vst.msk [vmem:[%s2 + $0x1e0] sm:$0xff] %vm377, %v245
          %503 = vst.msk [vmem:[%s2 + $0x1e8] sm:$0xff] %vm377, %v246
          %504 = vst.msk [vmem:[%s2 + $0x1f0] sm:$0xff] %vm377, %v247
          %505 = vst.msk [vmem:[%s2 + $0x1f8] sm:$0xff] %vm377, %v248
          %506 = vst.msk [vmem:[%s2 + $0x200] sm:$0xff] %vm377, %v249
          %507 = vst.msk [vmem:[%s2 + $0x208] sm:$0xff] %vm377, %v250
          %508 = vst.msk [vmem:[%s2 + $0x210] sm:$0xff] %vm377, %v251
          %509 = vst.msk [vmem:[%s2 + $0x218] sm:$0xff] %vm377, %v252
          %510 = vst.msk [vmem:[%s2 + $0x220] sm:$0xff] %vm377, %v253
          %511 = vst.msk [vmem:[%s2 + $0x228] sm:$0xff] %vm377, %v254
          %512 = vst.msk [vmem:[%s2 + $0x230] sm:$0xff] %vm377, %v255
          %513 = vst.msk [vmem:[%s2 + $0x238] sm:$0xff] %vm377, %v256
          %514 = vst.msk [vmem:[%s2 + $0x240] sm:$0xff] %vm377, %v257
          %515 = vst.msk [vmem:[%s2 + $0x248] sm:$0xff] %vm377, %v258
          %516 = vst.msk [vmem:[%s2 + $0x250] sm:$0xff] %vm377, %v259
          %517 = vst.msk [vmem:[%s2 + $0x258] sm:$0xff] %vm377, %v260
          %518 = vst.msk [vmem:[%s2 + $0x260] sm:$0xff] %vm377, %v261
          %519 = vst.msk [vmem:[%s2 + $0x268] sm:$0xff] %vm377, %v262
          %520 = vst.msk [vmem:[%s2 + $0x270] sm:$0xff] %vm377, %v263
          %521 = vst.msk [vmem:[%s2 + $0x278] sm:$0xff] %vm377, %v264
          %522 = vst.msk [vmem:[%s2 + $0x280] sm:$0xff] %vm377, %v265
          %523 = vst.msk [vmem:[%s2 + $0x288] sm:$0xff] %vm377, %v266
          %524 = vst.msk [vmem:[%s2 + $0x290] sm:$0xff] %vm377, %v267
          %525 = vst.msk [vmem:[%s2 + $0x298] sm:$0xff] %vm377, %v268
          %526 = vst.msk [vmem:[%s2 + $0x2a0] sm:$0xff] %vm377, %v269
          %527 = vst.msk [vmem:[%s2 + $0x2a8] sm:$0xff] %vm377, %v270
          %528 = vst.msk [vmem:[%s2 + $0x2b0] sm:$0xff] %vm377, %v271
          %529 = vst.msk [vmem:[%s2 + $0x2b8] sm:$0xff] %vm377, %v272
          %530 = vst.msk [vmem:[%s2 + $0x2c0] sm:$0xff] %vm377, %v273
          %531 = vst.msk [vmem:[%s2 + $0x2c8] sm:$0xff] %vm377, %v274
          %532 = vst.msk [vmem:[%s2 + $0x2d0] sm:$0xff] %vm377, %v275
          %533 = vst.msk [vmem:[%s2 + $0x2d8] sm:$0xff] %vm377, %v276
          %534 = vst.msk [vmem:[%s2 + $0x2e0] sm:$0xff] %vm377, %v277
          %535 = vst.msk [vmem:[%s2 + $0x2e8] sm:$0xff] %vm377, %v278
          %536 = vst.msk [vmem:[%s2 + $0x2f0] sm:$0xff] %vm377, %v279
          %537 = vst.msk [vmem:[%s2 + $0x2f8] sm:$0xff] %vm377, %v280
          %538 = vst.msk [vmem:[%s2 + $0x300] sm:$0xff] %vm377, %v281
          %539 = vst.msk [vmem:[%s2 + $0x308] sm:$0xff] %vm377, %v282
          %540 = vst.msk [vmem:[%s2 + $0x310] sm:$0xff] %vm377, %v283
          %541 = vst.msk [vmem:[%s2 + $0x318] sm:$0xff] %vm377, %v284
          %542 = vst.msk [vmem:[%s2 + $0x320] sm:$0xff] %vm377, %v285
          %543 = vst.msk [vmem:[%s2 + $0x328] sm:$0xff] %vm377, %v286
          %544 = vst.msk [vmem:[%s2 + $0x330] sm:$0xff] %vm377, %v287
          %545 = vst.msk [vmem:[%s2 + $0x338] sm:$0xff] %vm377, %v288
          %546 = vst.msk [vmem:[%s2 + $0x340] sm:$0xff] %vm377, %v289
          %547 = vst.msk [vmem:[%s2 + $0x348] sm:$0xff] %vm377, %v290
          %548 = vst.msk [vmem:[%s2 + $0x350] sm:$0xff] %vm377, %v291
          %549 = vst.msk [vmem:[%s2 + $0x358] sm:$0xff] %vm377, %v292
          %550 = vst.msk [vmem:[%s2 + $0x360] sm:$0xff] %vm377, %v293
          %551 = vst.msk [vmem:[%s2 + $0x368] sm:$0xff] %vm377, %v294
          %552 = vst.msk [vmem:[%s2 + $0x370] sm:$0xff] %vm377, %v295
          %553 = vst.msk [vmem:[%s2 + $0x378] sm:$0xff] %vm377, %v296
          %554 = vst.msk [vmem:[%s2 + $0x380] sm:$0xff] %vm377, %v297
          %555 = vst.msk [vmem:[%s2 + $0x388] sm:$0xff] %vm377, %v298
          %556 = vst.msk [vmem:[%s2 + $0x390] sm:$0xff] %vm377, %v299
          %557 = vst.msk [vmem:[%s2 + $0x398] sm:$0xff] %vm377, %v300
          %558 = vst.msk [vmem:[%s2 + $0x3a0] sm:$0xff] %vm377, %v301
          %559 = vst.msk [vmem:[%s2 + $0x3a8] sm:$0xff] %vm377, %v302
          %560 = vst.msk [vmem:[%s2 + $0x3b0] sm:$0xff] %vm377, %v303
          %561 = vst.msk [vmem:[%s2 + $0x3b8] sm:$0xff] %vm377, %v304
          %562 = vst.msk [vmem:[%s2 + $0x3c0] sm:$0xff] %vm377, %v305
          %563 = vst.msk [vmem:[%s2 + $0x3c8] sm:$0xff] %vm377, %v306
          %564 = vst.msk [vmem:[%s2 + $0x3d0] sm:$0xff] %vm377, %v307
          %565 = vst.msk [vmem:[%s2 + $0x3d8] sm:$0xff] %vm377, %v308
          %566 = vst.msk [vmem:[%s2 + $0x3e0] sm:$0xff] %vm377, %v309
          %567 = vst.msk [vmem:[%s2 + $0x3e8] sm:$0xff] %vm377, %v310
          %568 = vst.msk [vmem:[%s2 + $0x3f0] sm:$0xff] %vm377, %v311
          %569 = vst.msk [vmem:[%s2 + $0x3f8] sm:$0xff] %vm377, %v312
        $region36: #{tpu_custom_call.1} parent=27 // pred_fallthru
          _
        // Predicated region
        $region37: #{tpu_custom_call.1} parent=27 // pred_check
          %p570 = pneg %p180
        $region38: #{tpu_custom_call.1} parent=27 // pred_check_branch
          %572 = sbr.rel (%p570) target = $region40
        $region39: #{tpu_custom_call.1} parent=27 // pred_region
          %vm573 = vcmask 261120
          %574 = vst.msk [vmem:[#allocation4] sm:$0xff] %vm573, 0.0
          %575 = vst.msk [vmem:[#allocation4 + $0x8] sm:$0xff] %vm573, 0.0
          %576 = vst.msk [vmem:[#allocation4 + $0x10] sm:$0xff] %vm573, 0.0
          %577 = vst.msk [vmem:[#allocation4 + $0x18] sm:$0xff] %vm573, 0.0
          %578 = vst.msk [vmem:[#allocation4 + $0x20] sm:$0xff] %vm573, 0.0
          %579 = vst.msk [vmem:[#allocation4 + $0x28] sm:$0xff] %vm573, 0.0
          %580 = vst.msk [vmem:[#allocation4 + $0x30] sm:$0xff] %vm573, 0.0
          %581 = vst.msk [vmem:[#allocation4 + $0x38] sm:$0xff] %vm573, 0.0
          %582 = vst.msk [vmem:[#allocation4 + $0x40] sm:$0xff] %vm573, 0.0
          %583 = vst.msk [vmem:[#allocation4 + $0x48] sm:$0xff] %vm573, 0.0
          %584 = vst.msk [vmem:[#allocation4 + $0x50] sm:$0xff] %vm573, 0.0
          %585 = vst.msk [vmem:[#allocation4 + $0x58] sm:$0xff] %vm573, 0.0
          %586 = vst.msk [vmem:[#allocation4 + $0x60] sm:$0xff] %vm573, 0.0
          %587 = vst.msk [vmem:[#allocation4 + $0x68] sm:$0xff] %vm573, 0.0
          %588 = vst.msk [vmem:[#allocation4 + $0x70] sm:$0xff] %vm573, 0.0
          %589 = vst.msk [vmem:[#allocation4 + $0x78] sm:$0xff] %vm573, 0.0
          %590 = vst.msk [vmem:[#allocation4 + $0x80] sm:$0xff] %vm573, 0.0
          %591 = vst.msk [vmem:[#allocation4 + $0x88] sm:$0xff] %vm573, 0.0
          %592 = vst.msk [vmem:[#allocation4 + $0x90] sm:$0xff] %vm573, 0.0
          %593 = vst.msk [vmem:[#allocation4 + $0x98] sm:$0xff] %vm573, 0.0
          %594 = vst.msk [vmem:[#allocation4 + $0xa0] sm:$0xff] %vm573, 0.0
          %595 = vst.msk [vmem:[#allocation4 + $0xa8] sm:$0xff] %vm573, 0.0
          %596 = vst.msk [vmem:[#allocation4 + $0xb0] sm:$0xff] %vm573, 0.0
          %597 = vst.msk [vmem:[#allocation4 + $0xb8] sm:$0xff] %vm573, 0.0
          %598 = vst.msk [vmem:[#allocation4 + $0xc0] sm:$0xff] %vm573, 0.0
          %599 = vst.msk [vmem:[#allocation4 + $0xc8] sm:$0xff] %vm573, 0.0
          %600 = vst.msk [vmem:[#allocation4 + $0xd0] sm:$0xff] %vm573, 0.0
          %601 = vst.msk [vmem:[#allocation4 + $0xd8] sm:$0xff] %vm573, 0.0
          %602 = vst.msk [vmem:[#allocation4 + $0xe0] sm:$0xff] %vm573, 0.0
          %603 = vst.msk [vmem:[#allocation4 + $0xe8] sm:$0xff] %vm573, 0.0
          %604 = vst.msk [vmem:[#allocation4 + $0xf0] sm:$0xff] %vm573, 0.0
          %605 = vst.msk [vmem:[#allocation4 + $0xf8] sm:$0xff] %vm573, 0.0
        $region40: #{tpu_custom_call.1} parent=27 // pred_fallthru
          _
        %s606 = smul.u32 %s23, 1024
        %v607 = vld [vmem:[#allocation4] sm:$0xff]
        %v608 = vld [vmem:[#allocation4 + $0x8] sm:$0xff]
        %v609 = vld [vmem:[#allocation4 + $0x10] sm:$0xff]
        %v610 = vld [vmem:[#allocation4 + $0x18] sm:$0xff]
        %v611 = vld [vmem:[#allocation4 + $0x20] sm:$0xff]
        %v612 = vld [vmem:[#allocation4 + $0x28] sm:$0xff]
        %v613 = vld [vmem:[#allocation4 + $0x30] sm:$0xff]
        %v614 = vld [vmem:[#allocation4 + $0x38] sm:$0xff]
        %v615 = vld [vmem:[#allocation4 + $0x40] sm:$0xff]
        %v616 = vld [vmem:[#allocation4 + $0x48] sm:$0xff]
        %v617 = vld [vmem:[#allocation4 + $0x50] sm:$0xff]
        %v618 = vld [vmem:[#allocation4 + $0x58] sm:$0xff]
        %v619 = vld [vmem:[#allocation4 + $0x60] sm:$0xff]
        %v620 = vld [vmem:[#allocation4 + $0x68] sm:$0xff]
        %v621 = vld [vmem:[#allocation4 + $0x70] sm:$0xff]
        %v622 = vld [vmem:[#allocation4 + $0x78] sm:$0xff]
        %v623 = vld [vmem:[#allocation4 + $0x80] sm:$0xff]
        %v624 = vld [vmem:[#allocation4 + $0x88] sm:$0xff]
        %v625 = vld [vmem:[#allocation4 + $0x90] sm:$0xff]
        %v626 = vld [vmem:[#allocation4 + $0x98] sm:$0xff]
        %v627 = vld [vmem:[#allocation4 + $0xa0] sm:$0xff]
        %v628 = vld [vmem:[#allocation4 + $0xa8] sm:$0xff]
        %v629 = vld [vmem:[#allocation4 + $0xb0] sm:$0xff]
        %v630 = vld [vmem:[#allocation4 + $0xb8] sm:$0xff]
        %v631 = vld [vmem:[#allocation4 + $0xc0] sm:$0xff]
        %v632 = vld [vmem:[#allocation4 + $0xc8] sm:$0xff]
        %v633 = vld [vmem:[#allocation4 + $0xd0] sm:$0xff]
        %v634 = vld [vmem:[#allocation4 + $0xd8] sm:$0xff]
        %v635 = vld [vmem:[#allocation4 + $0xe0] sm:$0xff]
        %v636 = vld [vmem:[#allocation4 + $0xe8] sm:$0xff]
        %v637 = vld [vmem:[#allocation4 + $0xf0] sm:$0xff]
        %v638 = vld [vmem:[#allocation4 + $0xf8] sm:$0xff]
        %v639 = vld [vmem:[%s157] sm:$0xff]
        %v640 = vld [vmem:[%s157 + $0x8] sm:$0xff]
        %v641 = vld [vmem:[%s157 + $0x10] sm:$0xff]
        %v642 = vld [vmem:[%s157 + $0x18] sm:$0xff]
        %v643 = vld [vmem:[%s157 + $0x20] sm:$0xff]
        %v644 = vld [vmem:[%s157 + $0x28] sm:$0xff]
        %v645 = vld [vmem:[%s157 + $0x30] sm:$0xff]
        %v646 = vld [vmem:[%s157 + $0x38] sm:$0xff]
        %v647 = vld [vmem:[%s157 + $0x40] sm:$0xff]
        %v648 = vld [vmem:[%s157 + $0x48] sm:$0xff]
        %v649 = vld [vmem:[%s157 + $0x50] sm:$0xff]
        %v650 = vld [vmem:[%s157 + $0x58] sm:$0xff]
        %v651 = vld [vmem:[%s157 + $0x60] sm:$0xff]
        %v652 = vld [vmem:[%s157 + $0x68] sm:$0xff]
        %v653 = vld [vmem:[%s157 + $0x70] sm:$0xff]
        %v654 = vld [vmem:[%s157 + $0x78] sm:$0xff]
        %v655 = vld [vmem:[%s157 + $0x80] sm:$0xff]
        %v656 = vld [vmem:[%s157 + $0x88] sm:$0xff]
        %v657 = vld [vmem:[%s157 + $0x90] sm:$0xff]
        %v658 = vld [vmem:[%s157 + $0x98] sm:$0xff]
        %v659 = vld [vmem:[%s157 + $0xa0] sm:$0xff]
        %v660 = vld [vmem:[%s157 + $0xa8] sm:$0xff]
        %v661 = vld [vmem:[%s157 + $0xb0] sm:$0xff]
        %v662 = vld [vmem:[%s157 + $0xb8] sm:$0xff]
        %v663 = vld [vmem:[%s157 + $0xc0] sm:$0xff]
        %v664 = vld [vmem:[%s157 + $0xc8] sm:$0xff]
        %v665 = vld [vmem:[%s157 + $0xd0] sm:$0xff]
        %v666 = vld [vmem:[%s157 + $0xd8] sm:$0xff]
        %v667 = vld [vmem:[%s157 + $0xe0] sm:$0xff]
        %v668 = vld [vmem:[%s157 + $0xe8] sm:$0xff]
        %v669 = vld [vmem:[%s157 + $0xf0] sm:$0xff]
        %v670 = vld [vmem:[%s157 + $0xf8] sm:$0xff]
        %v671 = vld [vmem:[%s157 + $0x100] sm:$0xff]
        %v672 = vld [vmem:[%s157 + $0x108] sm:$0xff]
        %v673 = vld [vmem:[%s157 + $0x110] sm:$0xff]
        %v674 = vld [vmem:[%s157 + $0x118] sm:$0xff]
        %v675 = vld [vmem:[%s157 + $0x120] sm:$0xff]
        %v676 = vld [vmem:[%s157 + $0x128] sm:$0xff]
        %v677 = vld [vmem:[%s157 + $0x130] sm:$0xff]
        %v678 = vld [vmem:[%s157 + $0x138] sm:$0xff]
        %v679 = vld [vmem:[%s157 + $0x140] sm:$0xff]
        %v680 = vld [vmem:[%s157 + $0x148] sm:$0xff]
        %v681 = vld [vmem:[%s157 + $0x150] sm:$0xff]
        %v682 = vld [vmem:[%s157 + $0x158] sm:$0xff]
        %v683 = vld [vmem:[%s157 + $0x160] sm:$0xff]
        %v684 = vld [vmem:[%s157 + $0x168] sm:$0xff]
        %v685 = vld [vmem:[%s157 + $0x170] sm:$0xff]
        %v686 = vld [vmem:[%s157 + $0x178] sm:$0xff]
        %v687 = vld [vmem:[%s157 + $0x180] sm:$0xff]
        %v688 = vld [vmem:[%s157 + $0x188] sm:$0xff]
        %v689 = vld [vmem:[%s157 + $0x190] sm:$0xff]
        %v690 = vld [vmem:[%s157 + $0x198] sm:$0xff]
        %v691 = vld [vmem:[%s157 + $0x1a0] sm:$0xff]
        %v692 = vld [vmem:[%s157 + $0x1a8] sm:$0xff]
        %v693 = vld [vmem:[%s157 + $0x1b0] sm:$0xff]
        %v694 = vld [vmem:[%s157 + $0x1b8] sm:$0xff]
        %v695 = vld [vmem:[%s157 + $0x1c0] sm:$0xff]
        %v696 = vld [vmem:[%s157 + $0x1c8] sm:$0xff]
        %v697 = vld [vmem:[%s157 + $0x1d0] sm:$0xff]
        %v698 = vld [vmem:[%s157 + $0x1d8] sm:$0xff]
        %v699 = vld [vmem:[%s157 + $0x1e0] sm:$0xff]
        %v700 = vld [vmem:[%s157 + $0x1e8] sm:$0xff]
        %v701 = vld [vmem:[%s157 + $0x1f0] sm:$0xff]
        %v702 = vld [vmem:[%s157 + $0x1f8] sm:$0xff]
        %v703 = vld [vmem:[%s157 + $0x200] sm:$0xff]
        %v704 = vld [vmem:[%s157 + $0x208] sm:$0xff]
        %v705 = vld [vmem:[%s157 + $0x210] sm:$0xff]
        %v706 = vld [vmem:[%s157 + $0x218] sm:$0xff]
        %v707 = vld [vmem:[%s157 + $0x220] sm:$0xff]
        %v708 = vld [vmem:[%s157 + $0x228] sm:$0xff]
        %v709 = vld [vmem:[%s157 + $0x230] sm:$0xff]
        %v710 = vld [vmem:[%s157 + $0x238] sm:$0xff]
        %v711 = vld [vmem:[%s157 + $0x240] sm:$0xff]
        %v712 = vld [vmem:[%s157 + $0x248] sm:$0xff]
        %v713 = vld [vmem:[%s157 + $0x250] sm:$0xff]
        %v714 = vld [vmem:[%s157 + $0x258] sm:$0xff]
        %v715 = vld [vmem:[%s157 + $0x260] sm:$0xff]
        %v716 = vld [vmem:[%s157 + $0x268] sm:$0xff]
        %v717 = vld [vmem:[%s157 + $0x270] sm:$0xff]
        %v718 = vld [vmem:[%s157 + $0x278] sm:$0xff]
        %v719 = vld [vmem:[%s157 + $0x280] sm:$0xff]
        %v720 = vld [vmem:[%s157 + $0x288] sm:$0xff]
        %v721 = vld [vmem:[%s157 + $0x290] sm:$0xff]
        %v722 = vld [vmem:[%s157 + $0x298] sm:$0xff]
        %v723 = vld [vmem:[%s157 + $0x2a0] sm:$0xff]
        %v724 = vld [vmem:[%s157 + $0x2a8] sm:$0xff]
        %v725 = vld [vmem:[%s157 + $0x2b0] sm:$0xff]
        %v726 = vld [vmem:[%s157 + $0x2b8] sm:$0xff]
        %v727 = vld [vmem:[%s157 + $0x2c0] sm:$0xff]
        %v728 = vld [vmem:[%s157 + $0x2c8] sm:$0xff]
        %v729 = vld [vmem:[%s157 + $0x2d0] sm:$0xff]
        %v730 = vld [vmem:[%s157 + $0x2d8] sm:$0xff]
        %v731 = vld [vmem:[%s157 + $0x2e0] sm:$0xff]
        %v732 = vld [vmem:[%s157 + $0x2e8] sm:$0xff]
        %v733 = vld [vmem:[%s157 + $0x2f0] sm:$0xff]
        %v734 = vld [vmem:[%s157 + $0x2f8] sm:$0xff]
        %v735 = vld [vmem:[%s157 + $0x300] sm:$0xff]
        %v736 = vld [vmem:[%s157 + $0x308] sm:$0xff]
        %v737 = vld [vmem:[%s157 + $0x310] sm:$0xff]
        %v738 = vld [vmem:[%s157 + $0x318] sm:$0xff]
        %v739 = vld [vmem:[%s157 + $0x320] sm:$0xff]
        %v740 = vld [vmem:[%s157 + $0x328] sm:$0xff]
        %v741 = vld [vmem:[%s157 + $0x330] sm:$0xff]
        %v742 = vld [vmem:[%s157 + $0x338] sm:$0xff]
        %v743 = vld [vmem:[%s157 + $0x340] sm:$0xff]
        %v744 = vld [vmem:[%s157 + $0x348] sm:$0xff]
        %v745 = vld [vmem:[%s157 + $0x350] sm:$0xff]
        %v746 = vld [vmem:[%s157 + $0x358] sm:$0xff]
        %v747 = vld [vmem:[%s157 + $0x360] sm:$0xff]
        %v748 = vld [vmem:[%s157 + $0x368] sm:$0xff]
        %v749 = vld [vmem:[%s157 + $0x370] sm:$0xff]
        %v750 = vld [vmem:[%s157 + $0x378] sm:$0xff]
        %v751 = vld [vmem:[%s157 + $0x380] sm:$0xff]
        %v752 = vld [vmem:[%s157 + $0x388] sm:$0xff]
        %v753 = vld [vmem:[%s157 + $0x390] sm:$0xff]
        %v754 = vld [vmem:[%s157 + $0x398] sm:$0xff]
        %v755 = vld [vmem:[%s157 + $0x3a0] sm:$0xff]
        %v756 = vld [vmem:[%s157 + $0x3a8] sm:$0xff]
        %v757 = vld [vmem:[%s157 + $0x3b0] sm:$0xff]
        %v758 = vld [vmem:[%s157 + $0x3b8] sm:$0xff]
        %v759 = vld [vmem:[%s157 + $0x3c0] sm:$0xff]
        %v760 = vld [vmem:[%s157 + $0x3c8] sm:$0xff]
        %v761 = vld [vmem:[%s157 + $0x3d0] sm:$0xff]
        %v762 = vld [vmem:[%s157 + $0x3d8] sm:$0xff]
        %v763 = vld [vmem:[%s157 + $0x3e0] sm:$0xff]
        %v764 = vld [vmem:[%s157 + $0x3e8] sm:$0xff]
        %v765 = vld [vmem:[%s157 + $0x3f0] sm:$0xff]
        %v766 = vld [vmem:[%s157 + $0x3f8] sm:$0xff]
        %s767 = sshra.s32 %s606, 4
        %s768 = sand.u32 %s606, 15
        %s769 = smul.addr %s767, 8
        %s770 = scalar_lea.vmem [#allocation2], %s769
        %v771 = vld [vmem:[%s770] sm:$0xff]
        %v772 = vld [vmem:[%s770 + $0x8] sm:$0xff]
        %v773 = vld [vmem:[%s770 + $0x10] sm:$0xff]
        %v774 = vld [vmem:[%s770 + $0x18] sm:$0xff]
        %v775 = vld [vmem:[%s770 + $0x20] sm:$0xff]
        %v776 = vld [vmem:[%s770 + $0x28] sm:$0xff]
        %v777 = vld [vmem:[%s770 + $0x30] sm:$0xff]
        %v778 = vld [vmem:[%s770 + $0x38] sm:$0xff]
        %v779 = vld [vmem:[%s770 + $0x40] sm:$0xff]
        %v780 = vld [vmem:[%s770 + $0x48] sm:$0xff]
        %v781 = vld [vmem:[%s770 + $0x50] sm:$0xff]
        %v782 = vld [vmem:[%s770 + $0x58] sm:$0xff]
        %v783 = vld [vmem:[%s770 + $0x60] sm:$0xff]
        %v784 = vld [vmem:[%s770 + $0x68] sm:$0xff]
        %v785 = vld [vmem:[%s770 + $0x70] sm:$0xff]
        %v786 = vld [vmem:[%s770 + $0x78] sm:$0xff]
        %v787 = vld [vmem:[%s770 + $0x80] sm:$0xff]
        %v788 = vld [vmem:[%s770 + $0x88] sm:$0xff]
        %v789 = vld [vmem:[%s770 + $0x90] sm:$0xff]
        %v790 = vld [vmem:[%s770 + $0x98] sm:$0xff]
        %v791 = vld [vmem:[%s770 + $0xa0] sm:$0xff]
        %v792 = vld [vmem:[%s770 + $0xa8] sm:$0xff]
        %v793 = vld [vmem:[%s770 + $0xb0] sm:$0xff]
        %v794 = vld [vmem:[%s770 + $0xb8] sm:$0xff]
        %v795 = vld [vmem:[%s770 + $0xc0] sm:$0xff]
        %v796 = vld [vmem:[%s770 + $0xc8] sm:$0xff]
        %v797 = vld [vmem:[%s770 + $0xd0] sm:$0xff]
        %v798 = vld [vmem:[%s770 + $0xd8] sm:$0xff]
        %v799 = vld [vmem:[%s770 + $0xe0] sm:$0xff]
        %v800 = vld [vmem:[%s770 + $0xe8] sm:$0xff]
        %v801 = vld [vmem:[%s770 + $0xf0] sm:$0xff]
        %v802 = vld [vmem:[%s770 + $0xf8] sm:$0xff]
        %v803 = vld [vmem:[%s770 + $0x100] sm:$0xff]
        %v804 = vld [vmem:[%s770 + $0x108] sm:$0xff]
        %v805 = vld [vmem:[%s770 + $0x110] sm:$0xff]
        %v806 = vld [vmem:[%s770 + $0x118] sm:$0xff]
        %v807 = vld [vmem:[%s770 + $0x120] sm:$0xff]
        %v808 = vld [vmem:[%s770 + $0x128] sm:$0xff]
        %v809 = vld [vmem:[%s770 + $0x130] sm:$0xff]
        %v810 = vld [vmem:[%s770 + $0x138] sm:$0xff]
        %v811 = vld [vmem:[%s770 + $0x140] sm:$0xff]
        %v812 = vld [vmem:[%s770 + $0x148] sm:$0xff]
        %v813 = vld [vmem:[%s770 + $0x150] sm:$0xff]
        %v814 = vld [vmem:[%s770 + $0x158] sm:$0xff]
        %v815 = vld [vmem:[%s770 + $0x160] sm:$0xff]
        %v816 = vld [vmem:[%s770 + $0x168] sm:$0xff]
        %v817 = vld [vmem:[%s770 + $0x170] sm:$0xff]
        %v818 = vld [vmem:[%s770 + $0x178] sm:$0xff]
        %v819 = vld [vmem:[%s770 + $0x180] sm:$0xff]
        %v820 = vld [vmem:[%s770 + $0x188] sm:$0xff]
        %v821 = vld [vmem:[%s770 + $0x190] sm:$0xff]
        %v822 = vld [vmem:[%s770 + $0x198] sm:$0xff]
        %v823 = vld [vmem:[%s770 + $0x1a0] sm:$0xff]
        %v824 = vld [vmem:[%s770 + $0x1a8] sm:$0xff]
        %v825 = vld [vmem:[%s770 + $0x1b0] sm:$0xff]
        %v826 = vld [vmem:[%s770 + $0x1b8] sm:$0xff]
        %v827 = vld [vmem:[%s770 + $0x1c0] sm:$0xff]
        %v828 = vld [vmem:[%s770 + $0x1c8] sm:$0xff]
        %v829 = vld [vmem:[%s770 + $0x1d0] sm:$0xff]
        %v830 = vld [vmem:[%s770 + $0x1d8] sm:$0xff]
        %v831 = vld [vmem:[%s770 + $0x1e0] sm:$0xff]
        %v832 = vld [vmem:[%s770 + $0x1e8] sm:$0xff]
        %v833 = vld [vmem:[%s770 + $0x1f0] sm:$0xff]
        %v834 = vld [vmem:[%s770 + $0x1f8] sm:$0xff]
        %v963 = vunpack.c.l.b16 %v639
        %v964 = vunpack.c.h.b16 %v639
        %v965 = vunpack.c.l.b16 %v640
        %v966 = vunpack.c.h.b16 %v640
        %v967 = vunpack.c.l.b16 %v641
        %v968 = vunpack.c.h.b16 %v641
        %v969 = vunpack.c.l.b16 %v642
        %v970 = vunpack.c.h.b16 %v642
        %v971 = vunpack.c.l.b16 %v643
        %v972 = vunpack.c.h.b16 %v643
        %v973 = vunpack.c.l.b16 %v644
        %v974 = vunpack.c.h.b16 %v644
        %v975 = vunpack.c.l.b16 %v645
        %v976 = vunpack.c.h.b16 %v645
        %v977 = vunpack.c.l.b16 %v646
        %v978 = vunpack.c.h.b16 %v646
        %v979 = vunpack.c.l.b16 %v647
        %v980 = vunpack.c.h.b16 %v647
        %v981 = vunpack.c.l.b16 %v648
        %v982 = vunpack.c.h.b16 %v648
        %v983 = vunpack.c.l.b16 %v649
        %v984 = vunpack.c.h.b16 %v649
        %v985 = vunpack.c.l.b16 %v650
        %v986 = vunpack.c.h.b16 %v650
        %v987 = vunpack.c.l.b16 %v651
        %v988 = vunpack.c.h.b16 %v651
        %v989 = vunpack.c.l.b16 %v652
        %v990 = vunpack.c.h.b16 %v652
        %v991 = vunpack.c.l.b16 %v653
        %v992 = vunpack.c.h.b16 %v653
        %v993 = vunpack.c.l.b16 %v654
        %v994 = vunpack.c.h.b16 %v654
        %v995 = vunpack.c.l.b16 %v655
        %v996 = vunpack.c.h.b16 %v655
        %v997 = vunpack.c.l.b16 %v656
        %v998 = vunpack.c.h.b16 %v656
        %v999 = vunpack.c.l.b16 %v657
        %v1000 = vunpack.c.h.b16 %v657
        %v1001 = vunpack.c.l.b16 %v658
        %v1002 = vunpack.c.h.b16 %v658
        %v1003 = vunpack.c.l.b16 %v659
        %v1004 = vunpack.c.h.b16 %v659
        %v1005 = vunpack.c.l.b16 %v660
        %v1006 = vunpack.c.h.b16 %v660
        %v1007 = vunpack.c.l.b16 %v661
        %v1008 = vunpack.c.h.b16 %v661
        %v1009 = vunpack.c.l.b16 %v662
        %v1010 = vunpack.c.h.b16 %v662
        %v1011 = vunpack.c.l.b16 %v663
        %v1012 = vunpack.c.h.b16 %v663
        %v1013 = vunpack.c.l.b16 %v664
        %v1014 = vunpack.c.h.b16 %v664
        %v1015 = vunpack.c.l.b16 %v665
        %v1016 = vunpack.c.h.b16 %v665
        %v1017 = vunpack.c.l.b16 %v666
        %v1018 = vunpack.c.h.b16 %v666
        %v1019 = vunpack.c.l.b16 %v667
        %v1020 = vunpack.c.h.b16 %v667
        %v1021 = vunpack.c.l.b16 %v668
        %v1022 = vunpack.c.h.b16 %v668
        %v1023 = vunpack.c.l.b16 %v669
        %v1024 = vunpack.c.h.b16 %v669
        %v1025 = vunpack.c.l.b16 %v670
        %v1026 = vunpack.c.h.b16 %v670
        %v1027 = vunpack.c.l.b16 %v671
        %v1028 = vunpack.c.h.b16 %v671
        %v1029 = vunpack.c.l.b16 %v672
        %v1030 = vunpack.c.h.b16 %v672
        %v1031 = vunpack.c.l.b16 %v673
        %v1032 = vunpack.c.h.b16 %v673
        %v1033 = vunpack.c.l.b16 %v674
        %v1034 = vunpack.c.h.b16 %v674
        %v1035 = vunpack.c.l.b16 %v675
        %v1036 = vunpack.c.h.b16 %v675
        %v1037 = vunpack.c.l.b16 %v676
        %v1038 = vunpack.c.h.b16 %v676
        %v1039 = vunpack.c.l.b16 %v677
        %v1040 = vunpack.c.h.b16 %v677
        %v1041 = vunpack.c.l.b16 %v678
        %v1042 = vunpack.c.h.b16 %v678
        %v1043 = vunpack.c.l.b16 %v679
        %v1044 = vunpack.c.h.b16 %v679
        %v1045 = vunpack.c.l.b16 %v680
        %v1046 = vunpack.c.h.b16 %v680
        %v1047 = vunpack.c.l.b16 %v681
        %v1048 = vunpack.c.h.b16 %v681
        %v1049 = vunpack.c.l.b16 %v682
        %v1050 = vunpack.c.h.b16 %v682
        %v1051 = vunpack.c.l.b16 %v683
        %v1052 = vunpack.c.h.b16 %v683
        %v1053 = vunpack.c.l.b16 %v684
        %v1054 = vunpack.c.h.b16 %v684
        %v1055 = vunpack.c.l.b16 %v685
        %v1056 = vunpack.c.h.b16 %v685
        %v1057 = vunpack.c.l.b16 %v686
        %v1058 = vunpack.c.h.b16 %v686
        %v1059 = vunpack.c.l.b16 %v687
        %v1060 = vunpack.c.h.b16 %v687
        %v1061 = vunpack.c.l.b16 %v688
        %v1062 = vunpack.c.h.b16 %v688
        %v1063 = vunpack.c.l.b16 %v689
        %v1064 = vunpack.c.h.b16 %v689
        %v1065 = vunpack.c.l.b16 %v690
        %v1066 = vunpack.c.h.b16 %v690
        %v1067 = vunpack.c.l.b16 %v691
        %v1068 = vunpack.c.h.b16 %v691
        %v1069 = vunpack.c.l.b16 %v692
        %v1070 = vunpack.c.h.b16 %v692
        %v1071 = vunpack.c.l.b16 %v693
        %v1072 = vunpack.c.h.b16 %v693
        %v1073 = vunpack.c.l.b16 %v694
        %v1074 = vunpack.c.h.b16 %v694
        %v1075 = vunpack.c.l.b16 %v695
        %v1076 = vunpack.c.h.b16 %v695
        %v1077 = vunpack.c.l.b16 %v696
        %v1078 = vunpack.c.h.b16 %v696
        %v1079 = vunpack.c.l.b16 %v697
        %v1080 = vunpack.c.h.b16 %v697
        %v1081 = vunpack.c.l.b16 %v698
        %v1082 = vunpack.c.h.b16 %v698
        %v1083 = vunpack.c.l.b16 %v699
        %v1084 = vunpack.c.h.b16 %v699
        %v1085 = vunpack.c.l.b16 %v700
        %v1086 = vunpack.c.h.b16 %v700
        %v1087 = vunpack.c.l.b16 %v701
        %v1088 = vunpack.c.h.b16 %v701
        %v1089 = vunpack.c.l.b16 %v702
        %v1090 = vunpack.c.h.b16 %v702
        %v1091 = vunpack.c.l.b16 %v703
        %v1092 = vunpack.c.h.b16 %v703
        %v1093 = vunpack.c.l.b16 %v704
        %v1094 = vunpack.c.h.b16 %v704
        %v1095 = vunpack.c.l.b16 %v705
        %v1096 = vunpack.c.h.b16 %v705
        %v1097 = vunpack.c.l.b16 %v706
        %v1098 = vunpack.c.h.b16 %v706
        %v1099 = vunpack.c.l.b16 %v707
        %v1100 = vunpack.c.h.b16 %v707
        %v1101 = vunpack.c.l.b16 %v708
        %v1102 = vunpack.c.h.b16 %v708
        %v1103 = vunpack.c.l.b16 %v709
        %v1104 = vunpack.c.h.b16 %v709
        %v1105 = vunpack.c.l.b16 %v710
        %v1106 = vunpack.c.h.b16 %v710
        %v1107 = vunpack.c.l.b16 %v711
        %v1108 = vunpack.c.h.b16 %v711
        %v1109 = vunpack.c.l.b16 %v712
        %v1110 = vunpack.c.h.b16 %v712
        %v1111 = vunpack.c.l.b16 %v713
        %v1112 = vunpack.c.h.b16 %v713
        %v1113 = vunpack.c.l.b16 %v714
        %v1114 = vunpack.c.h.b16 %v714
        %v1115 = vunpack.c.l.b16 %v715
        %v1116 = vunpack.c.h.b16 %v715
        %v1117 = vunpack.c.l.b16 %v716
        %v1118 = vunpack.c.h.b16 %v716
        %v1119 = vunpack.c.l.b16 %v717
        %v1120 = vunpack.c.h.b16 %v717
        %v1121 = vunpack.c.l.b16 %v718
        %v1122 = vunpack.c.h.b16 %v718
        %v1123 = vunpack.c.l.b16 %v719
        %v1124 = vunpack.c.h.b16 %v719
        %v1125 = vunpack.c.l.b16 %v720
        %v1126 = vunpack.c.h.b16 %v720
        %v1127 = vunpack.c.l.b16 %v721
        %v1128 = vunpack.c.h.b16 %v721
        %v1129 = vunpack.c.l.b16 %v722
        %v1130 = vunpack.c.h.b16 %v722
        %v1131 = vunpack.c.l.b16 %v723
        %v1132 = vunpack.c.h.b16 %v723
        %v1133 = vunpack.c.l.b16 %v724
        %v1134 = vunpack.c.h.b16 %v724
        %v1135 = vunpack.c.l.b16 %v725
        %v1136 = vunpack.c.h.b16 %v725
        %v1137 = vunpack.c.l.b16 %v726
        %v1138 = vunpack.c.h.b16 %v726
        %v1139 = vunpack.c.l.b16 %v727
        %v1140 = vunpack.c.h.b16 %v727
        %v1141 = vunpack.c.l.b16 %v728
        %v1142 = vunpack.c.h.b16 %v728
        %v1143 = vunpack.c.l.b16 %v729
        %v1144 = vunpack.c.h.b16 %v729
        %v1145 = vunpack.c.l.b16 %v730
        %v1146 = vunpack.c.h.b16 %v730
        %v1147 = vunpack.c.l.b16 %v731
        %v1148 = vunpack.c.h.b16 %v731
        %v1149 = vunpack.c.l.b16 %v732
        %v1150 = vunpack.c.h.b16 %v732
        %v1151 = vunpack.c.l.b16 %v733
        %v1152 = vunpack.c.h.b16 %v733
        %v1153 = vunpack.c.l.b16 %v734
        %v1154 = vunpack.c.h.b16 %v734
        %v1155 = vunpack.c.l.b16 %v735
        %v1156 = vunpack.c.h.b16 %v735
        %v1157 = vunpack.c.l.b16 %v736
        %v1158 = vunpack.c.h.b16 %v736
        %v1159 = vunpack.c.l.b16 %v737
        %v1160 = vunpack.c.h.b16 %v737
        %v1161 = vunpack.c.l.b16 %v738
        %v1162 = vunpack.c.h.b16 %v738
        %v1163 = vunpack.c.l.b16 %v739
        %v1164 = vunpack.c.h.b16 %v739
        %v1165 = vunpack.c.l.b16 %v740
        %v1166 = vunpack.c.h.b16 %v740
        %v1167 = vunpack.c.l.b16 %v741
        %v1168 = vunpack.c.h.b16 %v741
        %v1169 = vunpack.c.l.b16 %v742
        %v1170 = vunpack.c.h.b16 %v742
        %v1171 = vunpack.c.l.b16 %v743
        %v1172 = vunpack.c.h.b16 %v743
        %v1173 = vunpack.c.l.b16 %v744
        %v1174 = vunpack.c.h.b16 %v744
        %v1175 = vunpack.c.l.b16 %v745
        %v1176 = vunpack.c.h.b16 %v745
        %v1177 = vunpack.c.l.b16 %v746
        %v1178 = vunpack.c.h.b16 %v746
        %v1179 = vunpack.c.l.b16 %v747
        %v1180 = vunpack.c.h.b16 %v747
        %v1181 = vunpack.c.l.b16 %v748
        %v1182 = vunpack.c.h.b16 %v748
        %v1183 = vunpack.c.l.b16 %v749
        %v1184 = vunpack.c.h.b16 %v749
        %v1185 = vunpack.c.l.b16 %v750
        %v1186 = vunpack.c.h.b16 %v750
        %v1187 = vunpack.c.l.b16 %v751
        %v1188 = vunpack.c.h.b16 %v751
        %v1189 = vunpack.c.l.b16 %v752
        %v1190 = vunpack.c.h.b16 %v752
        %v1191 = vunpack.c.l.b16 %v753
        %v1192 = vunpack.c.h.b16 %v753
        %v1193 = vunpack.c.l.b16 %v754
        %v1194 = vunpack.c.h.b16 %v754
        %v1195 = vunpack.c.l.b16 %v755
        %v1196 = vunpack.c.h.b16 %v755
        %v1197 = vunpack.c.l.b16 %v756
        %v1198 = vunpack.c.h.b16 %v756
        %v1199 = vunpack.c.l.b16 %v757
        %v1200 = vunpack.c.h.b16 %v757
        %v1201 = vunpack.c.l.b16 %v758
        %v1202 = vunpack.c.h.b16 %v758
        %v1203 = vunpack.c.l.b16 %v759
        %v1204 = vunpack.c.h.b16 %v759
        %v1205 = vunpack.c.l.b16 %v760
        %v1206 = vunpack.c.h.b16 %v760
        %v1207 = vunpack.c.l.b16 %v761
        %v1208 = vunpack.c.h.b16 %v761
        %v1209 = vunpack.c.l.b16 %v762
        %v1210 = vunpack.c.h.b16 %v762
        %v1211 = vunpack.c.l.b16 %v763
        %v1212 = vunpack.c.h.b16 %v763
        %v1213 = vunpack.c.l.b16 %v764
        %v1214 = vunpack.c.h.b16 %v764
        %v1215 = vunpack.c.l.b16 %v765
        %v1216 = vunpack.c.h.b16 %v765
        %v1217 = vunpack.c.l.b16 %v766
        %v1218 = vunpack.c.h.b16 %v766
        %v1219 = vpack.c.b16 %v971, %v963
        %v1220 = vpack.c.b16 %v972, %v964
        %v1221 = vpack.c.b16 %v973, %v965
        %v1222 = vpack.c.b16 %v974, %v966
        %v1223 = vpack.c.b16 %v975, %v967
        %v1224 = vpack.c.b16 %v976, %v968
        %v1225 = vpack.c.b16 %v977, %v969
        %v1226 = vpack.c.b16 %v978, %v970
        %v1227 = vpack.c.b16 %v987, %v979
        %v1228 = vpack.c.b16 %v988, %v980
        %v1229 = vpack.c.b16 %v989, %v981
        %v1230 = vpack.c.b16 %v990, %v982
        %v1231 = vpack.c.b16 %v991, %v983
        %v1232 = vpack.c.b16 %v992, %v984
        %v1233 = vpack.c.b16 %v993, %v985
        %v1234 = vpack.c.b16 %v994, %v986
        %v1235 = vpack.c.b16 %v1003, %v995
        %v1236 = vpack.c.b16 %v1004, %v996
        %v1237 = vpack.c.b16 %v1005, %v997
        %v1238 = vpack.c.b16 %v1006, %v998
        %v1239 = vpack.c.b16 %v1007, %v999
        %v1240 = vpack.c.b16 %v1008, %v1000
        %v1241 = vpack.c.b16 %v1009, %v1001
        %v1242 = vpack.c.b16 %v1010, %v1002
        %v1243 = vpack.c.b16 %v1019, %v1011
        %v1244 = vpack.c.b16 %v1020, %v1012
        %v1245 = vpack.c.b16 %v1021, %v1013
        %v1246 = vpack.c.b16 %v1022, %v1014
        %v1247 = vpack.c.b16 %v1023, %v1015
        %v1248 = vpack.c.b16 %v1024, %v1016
        %v1249 = vpack.c.b16 %v1025, %v1017
        %v1250 = vpack.c.b16 %v1026, %v1018
        %v1251 = vpack.c.b16 %v1035, %v1027
        %v1252 = vpack.c.b16 %v1036, %v1028
        %v1253 = vpack.c.b16 %v1037, %v1029
        %v1254 = vpack.c.b16 %v1038, %v1030
        %v1255 = vpack.c.b16 %v1039, %v1031
        %v1256 = vpack.c.b16 %v1040, %v1032
        %v1257 = vpack.c.b16 %v1041, %v1033
        %v1258 = vpack.c.b16 %v1042, %v1034
        %v1259 = vpack.c.b16 %v1051, %v1043
        %v1260 = vpack.c.b16 %v1052, %v1044
        %v1261 = vpack.c.b16 %v1053, %v1045
        %v1262 = vpack.c.b16 %v1054, %v1046
        %v1263 = vpack.c.b16 %v1055, %v1047
        %v1264 = vpack.c.b16 %v1056, %v1048
        %v1265 = vpack.c.b16 %v1057, %v1049
        %v1266 = vpack.c.b16 %v1058, %v1050
        %v1267 = vpack.c.b16 %v1067, %v1059
        %v1268 = vpack.c.b16 %v1068, %v1060
        %v1269 = vpack.c.b16 %v1069, %v1061
        %v1270 = vpack.c.b16 %v1070, %v1062
        %v1271 = vpack.c.b16 %v1071, %v1063
        %v1272 = vpack.c.b16 %v1072, %v1064
        %v1273 = vpack.c.b16 %v1073, %v1065
        %v1274 = vpack.c.b16 %v1074, %v1066
        %v1275 = vpack.c.b16 %v1083, %v1075
        %v1276 = vpack.c.b16 %v1084, %v1076
        %v1277 = vpack.c.b16 %v1085, %v1077
        %v1278 = vpack.c.b16 %v1086, %v1078
        %v1279 = vpack.c.b16 %v1087, %v1079
        %v1280 = vpack.c.b16 %v1088, %v1080
        %v1281 = vpack.c.b16 %v1089, %v1081
        %v1282 = vpack.c.b16 %v1090, %v1082
        %v1283 = vpack.c.b16 %v1099, %v1091
        %v1284 = vpack.c.b16 %v1100, %v1092
        %v1285 = vpack.c.b16 %v1101, %v1093
        %v1286 = vpack.c.b16 %v1102, %v1094
        %v1287 = vpack.c.b16 %v1103, %v1095
        %v1288 = vpack.c.b16 %v1104, %v1096
        %v1289 = vpack.c.b16 %v1105, %v1097
        %v1290 = vpack.c.b16 %v1106, %v1098
        %v1291 = vpack.c.b16 %v1115, %v1107
        %v1292 = vpack.c.b16 %v1116, %v1108
        %v1293 = vpack.c.b16 %v1117, %v1109
        %v1294 = vpack.c.b16 %v1118, %v1110
        %v1295 = vpack.c.b16 %v1119, %v1111
        %v1296 = vpack.c.b16 %v1120, %v1112
        %v1297 = vpack.c.b16 %v1121, %v1113
        %v1298 = vpack.c.b16 %v1122, %v1114
        %v1299 = vpack.c.b16 %v1131, %v1123
        %v1300 = vpack.c.b16 %v1132, %v1124
        %v1301 = vpack.c.b16 %v1133, %v1125
        %v1302 = vpack.c.b16 %v1134, %v1126
        %v1303 = vpack.c.b16 %v1135, %v1127
        %v1304 = vpack.c.b16 %v1136, %v1128
        %v1305 = vpack.c.b16 %v1137, %v1129
        %v1306 = vpack.c.b16 %v1138, %v1130
        %v1307 = vpack.c.b16 %v1147, %v1139
        %v1308 = vpack.c.b16 %v1148, %v1140
        %v1309 = vpack.c.b16 %v1149, %v1141
        %v1310 = vpack.c.b16 %v1150, %v1142
        %v1311 = vpack.c.b16 %v1151, %v1143
        %v1312 = vpack.c.b16 %v1152, %v1144
        %v1313 = vpack.c.b16 %v1153, %v1145
        %v1314 = vpack.c.b16 %v1154, %v1146
        %v1315 = vpack.c.b16 %v1163, %v1155
        %v1316 = vpack.c.b16 %v1164, %v1156
        %v1317 = vpack.c.b16 %v1165, %v1157
        %v1318 = vpack.c.b16 %v1166, %v1158
        %v1319 = vpack.c.b16 %v1167, %v1159
        %v1320 = vpack.c.b16 %v1168, %v1160
        %v1321 = vpack.c.b16 %v1169, %v1161
        %v1322 = vpack.c.b16 %v1170, %v1162
        %v1323 = vpack.c.b16 %v1179, %v1171
        %v1324 = vpack.c.b16 %v1180, %v1172
        %v1325 = vpack.c.b16 %v1181, %v1173
        %v1326 = vpack.c.b16 %v1182, %v1174
        %v1327 = vpack.c.b16 %v1183, %v1175
        %v1328 = vpack.c.b16 %v1184, %v1176
        %v1329 = vpack.c.b16 %v1185, %v1177
        %v1330 = vpack.c.b16 %v1186, %v1178
        %v1331 = vpack.c.b16 %v1195, %v1187
        %v1332 = vpack.c.b16 %v1196, %v1188
        %v1333 = vpack.c.b16 %v1197, %v1189
        %v1334 = vpack.c.b16 %v1198, %v1190
        %v1335 = vpack.c.b16 %v1199, %v1191
        %v1336 = vpack.c.b16 %v1200, %v1192
        %v1337 = vpack.c.b16 %v1201, %v1193
        %v1338 = vpack.c.b16 %v1202, %v1194
        %v1339 = vpack.c.b16 %v1211, %v1203
        %v1340 = vpack.c.b16 %v1212, %v1204
        %v1341 = vpack.c.b16 %v1213, %v1205
        %v1342 = vpack.c.b16 %v1214, %v1206
        %v1343 = vpack.c.b16 %v1215, %v1207
        %v1344 = vpack.c.b16 %v1216, %v1208
        %v1345 = vpack.c.b16 %v1217, %v1209
        %v1346 = vpack.c.b16 %v1218, %v1210
        %1475 = vmatprep.subr.bf16.mxu0 0
        %1476 = vmatpush1.bf16.msra.mxu0 %v771
        %1477 = vmatprep.subr.bf16.mxu0 0
        %1478 = vmatpush1.bf16.msra.mxu0 %v772
        %1479 = vmatprep.subr.bf16.mxu0 0
        %1480 = vmatpush1.bf16.msra.mxu0 %v773
        %1481 = vmatprep.subr.bf16.mxu0 0
        %1482 = vmatpush1.bf16.msra.mxu0 %v774
        %1483 = vmatprep.subr.bf16.mxu0 0
        %1484 = vmatpush1.bf16.msra.mxu0 %v775
        %1485 = vmatprep.subr.bf16.mxu0 0
        %1486 = vmatpush1.bf16.msra.mxu0 %v776
        %1487 = vmatprep.subr.bf16.mxu0 0
        %1488 = vmatpush1.bf16.msra.mxu0 %v777
        %1489 = vmatprep.subr.bf16.mxu0 0
        %1490 = vmatpush1.bf16.msra.mxu0 %v778
        %1491 = vmatprep.subr.bf16.mxu0 0
        %1492 = vmatpush1.bf16.msra.mxu0 %v779
        %1493 = vmatprep.subr.bf16.mxu0 0
        %1494 = vmatpush1.bf16.msra.mxu0 %v780
        %1495 = vmatprep.subr.bf16.mxu0 0
        %1496 = vmatpush1.bf16.msra.mxu0 %v781
        %1497 = vmatprep.subr.bf16.mxu0 0
        %1498 = vmatpush1.bf16.msra.mxu0 %v782
        %1499 = vmatprep.subr.bf16.mxu0 0
        %1500 = vmatpush1.bf16.msra.mxu0 %v783
        %1501 = vmatprep.subr.bf16.mxu0 0
        %1502 = vmatpush1.bf16.msra.mxu0 %v784
        %1503 = vmatprep.subr.bf16.mxu0 0
        %1504 = vmatpush1.bf16.msra.mxu0 %v785
        %1505 = vmatprep.subr.bf16.mxu0 0
        %1506 = vmatpush1.bf16.msra.mxu0 %v786
        %1507 = vmatprep.mubr.bf16.mxu0 %v1220
        %1508 = vmatmul.mubr.bf16.gmra.mrb[0].mxu0 %v1219
        %v1509 = vpop.f32.mrb[0].mxu0
        %v1510 = vadd.f32 0.0, %v1509
        %v1511 = vpop.f32.mrb[0].mxu0
        %v1512 = vpop.f32.mrb[0].mxu0
        %v1513 = vadd.f32 0.0, %v1512
        %v1514 = vpop.f32.mrb[0].mxu0
        %1515 = vmatprep.mubr.bf16.mxu0 %v1228
        %1516 = vmatmul.mubr.bf16.gmra.mrb[0].mxu0 %v1227
        %v1517 = vpop.f32.mrb[0].mxu0
        %v1518 = vadd.f32 0.0, %v1517
        %v1519 = vpop.f32.mrb[0].mxu0
        %v1520 = vpop.f32.mrb[0].mxu0
        %v1521 = vadd.f32 0.0, %v1520
        %v1522 = vpop.f32.mrb[0].mxu0
        %1523 = vmatprep.mubr.bf16.mxu0 %v1236
        %1524 = vmatmul.mubr.bf16.gmra.mrb[0].mxu0 %v1235
        %v1525 = vpop.f32.mrb[0].mxu0
        %v1526 = vadd.f32 0.0, %v1525
        %v1527 = vpop.f32.mrb[0].mxu0
        %v1528 = vpop.f32.mrb[0].mxu0
        %v1529 = vadd.f32 0.0, %v1528
        %v1530 = vpop.f32.mrb[0].mxu0
        %1531 = vmatprep.mubr.bf16.mxu0 %v1244
        %1532 = vmatmul.mubr.bf16.gmra.mrb[0].mxu0 %v1243
        %v1533 = vpop.f32.mrb[0].mxu0
        %v1534 = vadd.f32 0.0, %v1533
        %v1535 = vpop.f32.mrb[0].mxu0
        %v1536 = vpop.f32.mrb[0].mxu0
        %v1537 = vadd.f32 0.0, %v1536
        %v1538 = vpop.f32.mrb[0].mxu0
        %1539 = vmatprep.mubr.bf16.mxu0 %v1252
        %1540 = vmatmul.mubr.bf16.gmra.mrb[0].mxu0 %v1251
        %v1541 = vpop.f32.mrb[0].mxu0
        %v1542 = vadd.f32 0.0, %v1541
        %v1543 = vpop.f32.mrb[0].mxu0
        %v1544 = vpop.f32.mrb[0].mxu0
        %v1545 = vadd.f32 0.0, %v1544
        %v1546 = vpop.f32.mrb[0].mxu0
        %1547 = vmatprep.mubr.bf16.mxu0 %v1260
        %1548 = vmatmul.mubr.bf16.gmra.mrb[0].mxu0 %v1259
        %v1549 = vpop.f32.mrb[0].mxu0
        %v1550 = vadd.f32 0.0, %v1549
        %v1551 = vpop.f32.mrb[0].mxu0
        %v1552 = vpop.f32.mrb[0].mxu0
        %v1553 = vadd.f32 0.0, %v1552
        %v1554 = vpop.f32.mrb[0].mxu0
        %1555 = vmatprep.mubr.bf16.mxu0 %v1268
        %1556 = vmatmul.mubr.bf16.gmra.mrb[0].mxu0 %v1267
        %v1557 = vpop.f32.mrb[0].mxu0
        %v1558 = vadd.f32 0.0, %v1557
        %v1559 = vpop.f32.mrb[0].mxu0
        %v1560 = vpop.f32.mrb[0].mxu0
        %v1561 = vadd.f32 0.0, %v1560
        %v1562 = vpop.f32.mrb[0].mxu0
        %1563 = vmatprep.mubr.bf16.mxu0 %v1276
        %1564 = vmatmul.mubr.bf16.gmra.mrb[0].mxu0 %v1275
        %v1565 = vpop.f32.mrb[0].mxu0
        %v1566 = vadd.f32 0.0, %v1565
        %v1567 = vpop.f32.mrb[0].mxu0
        %v1568 = vpop.f32.mrb[0].mxu0
        %v1569 = vadd.f32 0.0, %v1568
        %v1570 = vpop.f32.mrb[0].mxu0
        %1571 = vmatprep.mubr.bf16.mxu0 %v1284
        %1572 = vmatmul.mubr.bf16.gmra.mrb[0].mxu0 %v1283
        %v1573 = vpop.f32.mrb[0].mxu0
        %v1574 = vadd.f32 0.0, %v1573
        %v1575 = vpop.f32.mrb[0].mxu0
        %v1576 = vpop.f32.mrb[0].mxu0
        %v1577 = vadd.f32 0.0, %v1576
        %v1578 = vpop.f32.mrb[0].mxu0
        %1579 = vmatprep.mubr.bf16.mxu0 %v1292
        %1580 = vmatmul.mubr.bf16.gmra.mrb[0].mxu0 %v1291
        %v1581 = vpop.f32.mrb[0].mxu0
        %v1582 = vadd.f32 0.0, %v1581
        %v1583 = vpop.f32.mrb[0].mxu0
        %v1584 = vpop.f32.mrb[0].mxu0
        %v1585 = vadd.f32 0.0, %v1584
        %v1586 = vpop.f32.mrb[0].mxu0
        %1587 = vmatprep.mubr.bf16.mxu0 %v1300
        %1588 = vmatmul.mubr.bf16.gmra.mrb[0].mxu0 %v1299
        %v1589 = vpop.f32.mrb[0].mxu0
        %v1590 = vadd.f32 0.0, %v1589
        %v1591 = vpop.f32.mrb[0].mxu0
        %v1592 = vpop.f32.mrb[0].mxu0
        %v1593 = vadd.f32 0.0, %v1592
        %v1594 = vpop.f32.mrb[0].mxu0
        %1595 = vmatprep.mubr.bf16.mxu0 %v1308
        %1596 = vmatmul.mubr.bf16.gmra.mrb[0].mxu0 %v1307
        %v1597 = vpop.f32.mrb[0].mxu0
        %v1598 = vadd.f32 0.0, %v1597
        %v1599 = vpop.f32.mrb[0].mxu0
        %v1600 = vpop.f32.mrb[0].mxu0
        %v1601 = vadd.f32 0.0, %v1600
        %v1602 = vpop.f32.mrb[0].mxu0
        %1603 = vmatprep.mubr.bf16.mxu0 %v1316
        %1604 = vmatmul.mubr.bf16.gmra.mrb[0].mxu0 %v1315
        %v1605 = vpop.f32.mrb[0].mxu0
        %v1606 = vadd.f32 0.0, %v1605
        %v1607 = vpop.f32.mrb[0].mxu0
        %v1608 = vpop.f32.mrb[0].mxu0
        %v1609 = vadd.f32 0.0, %v1608
        %v1610 = vpop.f32.mrb[0].mxu0
        %1611 = vmatprep.mubr.bf16.mxu0 %v1324
        %1612 = vmatmul.mubr.bf16.gmra.mrb[0].mxu0 %v1323
        %v1613 = vpop.f32.mrb[0].mxu0
        %v1614 = vadd.f32 0.0, %v1613
        %v1615 = vpop.f32.mrb[0].mxu0
        %v1616 = vpop.f32.mrb[0].mxu0
        %v1617 = vadd.f32 0.0, %v1616
        %v1618 = vpop.f32.mrb[0].mxu0
        %1619 = vmatprep.mubr.bf16.mxu0 %v1332
        %1620 = vmatmul.mubr.bf16.gmra.mrb[0].mxu0 %v1331
        %v1621 = vpop.f32.mrb[0].mxu0
        %v1622 = vadd.f32 0.0, %v1621
        %v1623 = vpop.f32.mrb[0].mxu0
        %v1624 = vpop.f32.mrb[0].mxu0
        %v1625 = vadd.f32 0.0, %v1624
        %v1626 = vpop.f32.mrb[0].mxu0
        %1627 = vmatprep.mubr.bf16.mxu0 %v1340
        %1628 = vmatmul.mubr.bf16.gmra.mrb[0].mxu0 %v1339
        %v1629 = vpop.f32.mrb[0].mxu0
        %v1630 = vadd.f32 0.0, %v1629
        %v1631 = vpop.f32.mrb[0].mxu0
        %v1632 = vpop.f32.mrb[0].mxu0
        %v1633 = vadd.f32 0.0, %v1632
        %v1634 = vpop.f32.mrb[0].mxu0
        %1635 = vdwg.mxu0
        %1636 = vmatprep.subr.bf16.mxu0 0
        %1637 = vmatpush1.bf16.msra.mxu0 %v787
        %1638 = vmatprep.subr.bf16.mxu0 0
        %1639 = vmatpush1.bf16.msra.mxu0 %v788
        %1640 = vmatprep.subr.bf16.mxu0 0
        %1641 = vmatpush1.bf16.msra.mxu0 %v789
        %1642 = vmatprep.subr.bf16.mxu0 0
        %1643 = vmatpush1.bf16.msra.mxu0 %v790
        %1644 = vmatprep.subr.bf16.mxu0 0
        %1645 = vmatpush1.bf16.msra.mxu0 %v791
        %1646 = vmatprep.subr.bf16.mxu0 0
        %1647 = vmatpush1.bf16.msra.mxu0 %v792
        %1648 = vmatprep.subr.bf16.mxu0 0
        %1649 = vmatpush1.bf16.msra.mxu0 %v793
        %1650 = vmatprep.subr.bf16.mxu0 0
        %1651 = vmatpush1.bf16.msra.mxu0 %v794
        %1652 = vmatprep.subr.bf16.mxu0 0
        %1653 = vmatpush1.bf16.msra.mxu0 %v795
        %1654 = vmatprep.subr.bf16.mxu0 0
        %1655 = vmatpush1.bf16.msra.mxu0 %v796
        %1656 = vmatprep.subr.bf16.mxu0 0
        %1657 = vmatpush1.bf16.msra.mxu0 %v797
        %1658 = vmatprep.subr.bf16.mxu0 0
        %1659 = vmatpush1.bf16.msra.mxu0 %v798
        %1660 = vmatprep.subr.bf16.mxu0 0
        %1661 = vmatpush1.bf16.msra.mxu0 %v799
        %1662 = vmatprep.subr.bf16.mxu0 0
        %1663 = vmatpush1.bf16.msra.mxu0 %v800
        %1664 = vmatprep.subr.bf16.mxu0 0
        %1665 = vmatpush1.bf16.msra.mxu0 %v801
        %1666 = vmatprep.subr.bf16.mxu0 0
        %1667 = vmatpush1.bf16.msra.mxu0 %v802
        %1668 = vmatprep.mubr.bf16.mxu0 %v1222
        %1669 = vmatmul.mubr.bf16.gmra.mrb[0].mxu0 %v1221
        %v1670 = vpop.f32.mrb[0].mxu0
        %v1671 = vadd.f32 %v1510, %v1670
        %v1672 = vpop.f32.mrb[0].mxu0
        %v1673 = vpop.f32.mrb[0].mxu0
        %v1674 = vadd.f32 %v1513, %v1673
        %v1675 = vpop.f32.mrb[0].mxu0
        %1676 = vmatprep.mubr.bf16.mxu0 %v1230
        %1677 = vmatmul.mubr.bf16.gmra.mrb[0].mxu0 %v1229
        %v1678 = vpop.f32.mrb[0].mxu0
        %v1679 = vadd.f32 %v1518, %v1678
        %v1680 = vpop.f32.mrb[0].mxu0
        %v1681 = vpop.f32.mrb[0].mxu0
        %v1682 = vadd.f32 %v1521, %v1681
        %v1683 = vpop.f32.mrb[0].mxu0
        %1684 = vmatprep.mubr.bf16.mxu0 %v1238
        %1685 = vmatmul.mubr.bf16.gmra.mrb[0].mxu0 %v1237
        %v1686 = vpop.f32.mrb[0].mxu0
        %v1687 = vadd.f32 %v1526, %v1686
        %v1688 = vpop.f32.mrb[0].mxu0
        %v1689 = vpop.f32.mrb[0].mxu0
        %v1690 = vadd.f32 %v1529, %v1689
        %v1691 = vpop.f32.mrb[0].mxu0
        %1692 = vmatprep.mubr.bf16.mxu0 %v1246
        %1693 = vmatmul.mubr.bf16.gmra.mrb[0].mxu0 %v1245
        %v1694 = vpop.f32.mrb[0].mxu0
        %v1695 = vadd.f32 %v1534, %v1694
        %v1696 = vpop.f32.mrb[0].mxu0
        %v1697 = vpop.f32.mrb[0].mxu0
        %v1698 = vadd.f32 %v1537, %v1697
        %v1699 = vpop.f32.mrb[0].mxu0
        %1700 = vmatprep.mubr.bf16.mxu0 %v1254
        %1701 = vmatmul.mubr.bf16.gmra.mrb[0].mxu0 %v1253
        %v1702 = vpop.f32.mrb[0].mxu0
        %v1703 = vadd.f32 %v1542, %v1702
        %v1704 = vpop.f32.mrb[0].mxu0
        %v1705 = vpop.f32.mrb[0].mxu0
        %v1706 = vadd.f32 %v1545, %v1705
        %v1707 = vpop.f32.mrb[0].mxu0
        %1708 = vmatprep.mubr.bf16.mxu0 %v1262
        %1709 = vmatmul.mubr.bf16.gmra.mrb[0].mxu0 %v1261
        %v1710 = vpop.f32.mrb[0].mxu0
        %v1711 = vadd.f32 %v1550, %v1710
        %v1712 = vpop.f32.mrb[0].mxu0
        %v1713 = vpop.f32.mrb[0].mxu0
        %v1714 = vadd.f32 %v1553, %v1713
        %v1715 = vpop.f32.mrb[0].mxu0
        %1716 = vmatprep.mubr.bf16.mxu0 %v1270
        %1717 = vmatmul.mubr.bf16.gmra.mrb[0].mxu0 %v1269
        %v1718 = vpop.f32.mrb[0].mxu0
        %v1719 = vadd.f32 %v1558, %v1718
        %v1720 = vpop.f32.mrb[0].mxu0
        %v1721 = vpop.f32.mrb[0].mxu0
        %v1722 = vadd.f32 %v1561, %v1721
        %v1723 = vpop.f32.mrb[0].mxu0
        %1724 = vmatprep.mubr.bf16.mxu0 %v1278
        %1725 = vmatmul.mubr.bf16.gmra.mrb[0].mxu0 %v1277
        %v1726 = vpop.f32.mrb[0].mxu0
        %v1727 = vadd.f32 %v1566, %v1726
        %v1728 = vpop.f32.mrb[0].mxu0
        %v1729 = vpop.f32.mrb[0].mxu0
        %v1730 = vadd.f32 %v1569, %v1729
        %v1731 = vpop.f32.mrb[0].mxu0
        %1732 = vmatprep.mubr.bf16.mxu0 %v1286
        %1733 = vmatmul.mubr.bf16.gmra.mrb[0].mxu0 %v1285
        %v1734 = vpop.f32.mrb[0].mxu0
        %v1735 = vadd.f32 %v1574, %v1734
        %v1736 = vpop.f32.mrb[0].mxu0
        %v1737 = vpop.f32.mrb[0].mxu0
        %v1738 = vadd.f32 %v1577, %v1737
        %v1739 = vpop.f32.mrb[0].mxu0
        %1740 = vmatprep.mubr.bf16.mxu0 %v1294
        %1741 = vmatmul.mubr.bf16.gmra.mrb[0].mxu0 %v1293
        %v1742 = vpop.f32.mrb[0].mxu0
        %v1743 = vadd.f32 %v1582, %v1742
        %v1744 = vpop.f32.mrb[0].mxu0
        %v1745 = vpop.f32.mrb[0].mxu0
        %v1746 = vadd.f32 %v1585, %v1745
        %v1747 = vpop.f32.mrb[0].mxu0
        %1748 = vmatprep.mubr.bf16.mxu0 %v1302
        %1749 = vmatmul.mubr.bf16.gmra.mrb[0].mxu0 %v1301
        %v1750 = vpop.f32.mrb[0].mxu0
        %v1751 = vadd.f32 %v1590, %v1750
        %v1752 = vpop.f32.mrb[0].mxu0
        %v1753 = vpop.f32.mrb[0].mxu0
        %v1754 = vadd.f32 %v1593, %v1753
        %v1755 = vpop.f32.mrb[0].mxu0
        %1756 = vmatprep.mubr.bf16.mxu0 %v1310
        %1757 = vmatmul.mubr.bf16.gmra.mrb[0].mxu0 %v1309
        %v1758 = vpop.f32.mrb[0].mxu0
        %v1759 = vadd.f32 %v1598, %v1758
        %v1760 = vpop.f32.mrb[0].mxu0
        %v1761 = vpop.f32.mrb[0].mxu0
        %v1762 = vadd.f32 %v1601, %v1761
        %v1763 = vpop.f32.mrb[0].mxu0
        %1764 = vmatprep.mubr.bf16.mxu0 %v1318
        %1765 = vmatmul.mubr.bf16.gmra.mrb[0].mxu0 %v1317
        %v1766 = vpop.f32.mrb[0].mxu0
        %v1767 = vadd.f32 %v1606, %v1766
        %v1768 = vpop.f32.mrb[0].mxu0
        %v1769 = vpop.f32.mrb[0].mxu0
        %v1770 = vadd.f32 %v1609, %v1769
        %v1771 = vpop.f32.mrb[0].mxu0
        %1772 = vmatprep.mubr.bf16.mxu0 %v1326
        %1773 = vmatmul.mubr.bf16.gmra.mrb[0].mxu0 %v1325
        %v1774 = vpop.f32.mrb[0].mxu0
        %v1775 = vadd.f32 %v1614, %v1774
        %v1776 = vpop.f32.mrb[0].mxu0
        %v1777 = vpop.f32.mrb[0].mxu0
        %v1778 = vadd.f32 %v1617, %v1777
        %v1779 = vpop.f32.mrb[0].mxu0
        %1780 = vmatprep.mubr.bf16.mxu0 %v1334
        %1781 = vmatmul.mubr.bf16.gmra.mrb[0].mxu0 %v1333
        %v1782 = vpop.f32.mrb[0].mxu0
        %v1783 = vadd.f32 %v1622, %v1782
        %v1784 = vpop.f32.mrb[0].mxu0
        %v1785 = vpop.f32.mrb[0].mxu0
        %v1786 = vadd.f32 %v1625, %v1785
        %v1787 = vpop.f32.mrb[0].mxu0
        %1788 = vmatprep.mubr.bf16.mxu0 %v1342
        %1789 = vmatmul.mubr.bf16.gmra.mrb[0].mxu0 %v1341
        %v1790 = vpop.f32.mrb[0].mxu0
        %v1791 = vadd.f32 %v1630, %v1790
        %v1792 = vpop.f32.mrb[0].mxu0
        %v1793 = vpop.f32.mrb[0].mxu0
        %v1794 = vadd.f32 %v1633, %v1793
        %v1795 = vpop.f32.mrb[0].mxu0
        %1796 = vdwg.mxu0
        %1797 = vmatprep.subr.bf16.mxu0 0
        %1798 = vmatpush1.bf16.msra.mxu0 %v803
        %1799 = vmatprep.subr.bf16.mxu0 0
        %1800 = vmatpush1.bf16.msra.mxu0 %v804
        %1801 = vmatprep.subr.bf16.mxu0 0
        %1802 = vmatpush1.bf16.msra.mxu0 %v805
        %1803 = vmatprep.subr.bf16.mxu0 0
        %1804 = vmatpush1.bf16.msra.mxu0 %v806
        %1805 = vmatprep.subr.bf16.mxu0 0
        %1806 = vmatpush1.bf16.msra.mxu0 %v807
        %1807 = vmatprep.subr.bf16.mxu0 0
        %1808 = vmatpush1.bf16.msra.mxu0 %v808
        %1809 = vmatprep.subr.bf16.mxu0 0
        %1810 = vmatpush1.bf16.msra.mxu0 %v809
        %1811 = vmatprep.subr.bf16.mxu0 0
        %1812 = vmatpush1.bf16.msra.mxu0 %v810
        %1813 = vmatprep.subr.bf16.mxu0 0
        %1814 = vmatpush1.bf16.msra.mxu0 %v811
        %1815 = vmatprep.subr.bf16.mxu0 0
        %1816 = vmatpush1.bf16.msra.mxu0 %v812
        %1817 = vmatprep.subr.bf16.mxu0 0
        %1818 = vmatpush1.bf16.msra.mxu0 %v813
        %1819 = vmatprep.subr.bf16.mxu0 0
        %1820 = vmatpush1.bf16.msra.mxu0 %v814
        %1821 = vmatprep.subr.bf16.mxu0 0
        %1822 = vmatpush1.bf16.msra.mxu0 %v815
        %1823 = vmatprep.subr.bf16.mxu0 0
        %1824 = vmatpush1.bf16.msra.mxu0 %v816
        %1825 = vmatprep.subr.bf16.mxu0 0
        %1826 = vmatpush1.bf16.msra.mxu0 %v817
        %1827 = vmatprep.subr.bf16.mxu0 0
        %1828 = vmatpush1.bf16.msra.mxu0 %v818
        %1829 = vmatprep.mubr.bf16.mxu0 %v1224
        %1830 = vmatmul.mubr.bf16.gmra.mrb[0].mxu0 %v1223
        %v1831 = vpop.f32.mrb[0].mxu0
        %v1832 = vadd.f32 %v1671, %v1831
        %v1833 = vpop.f32.mrb[0].mxu0
        %v1834 = vpop.f32.mrb[0].mxu0
        %v1835 = vadd.f32 %v1674, %v1834
        %v1836 = vpop.f32.mrb[0].mxu0
        %1837 = vmatprep.mubr.bf16.mxu0 %v1232
        %1838 = vmatmul.mubr.bf16.gmra.mrb[0].mxu0 %v1231
        %v1839 = vpop.f32.mrb[0].mxu0
        %v1840 = vadd.f32 %v1679, %v1839
        %v1841 = vpop.f32.mrb[0].mxu0
        %v1842 = vpop.f32.mrb[0].mxu0
        %v1843 = vadd.f32 %v1682, %v1842
        %v1844 = vpop.f32.mrb[0].mxu0
        %1845 = vmatprep.mubr.bf16.mxu0 %v1240
        %1846 = vmatmul.mubr.bf16.gmra.mrb[0].mxu0 %v1239
        %v1847 = vpop.f32.mrb[0].mxu0
        %v1848 = vadd.f32 %v1687, %v1847
        %v1849 = vpop.f32.mrb[0].mxu0
        %v1850 = vpop.f32.mrb[0].mxu0
        %v1851 = vadd.f32 %v1690, %v1850
        %v1852 = vpop.f32.mrb[0].mxu0
        %1853 = vmatprep.mubr.bf16.mxu0 %v1248
        %1854 = vmatmul.mubr.bf16.gmra.mrb[0].mxu0 %v1247
        %v1855 = vpop.f32.mrb[0].mxu0
        %v1856 = vadd.f32 %v1695, %v1855
        %v1857 = vpop.f32.mrb[0].mxu0
        %v1858 = vpop.f32.mrb[0].mxu0
        %v1859 = vadd.f32 %v1698, %v1858
        %v1860 = vpop.f32.mrb[0].mxu0
        %1861 = vmatprep.mubr.bf16.mxu0 %v1256
        %1862 = vmatmul.mubr.bf16.gmra.mrb[0].mxu0 %v1255
        %v1863 = vpop.f32.mrb[0].mxu0
        %v1864 = vadd.f32 %v1703, %v1863
        %v1865 = vpop.f32.mrb[0].mxu0
        %v1866 = vpop.f32.mrb[0].mxu0
        %v1867 = vadd.f32 %v1706, %v1866
        %v1868 = vpop.f32.mrb[0].mxu0
        %1869 = vmatprep.mubr.bf16.mxu0 %v1264
        %1870 = vmatmul.mubr.bf16.gmra.mrb[0].mxu0 %v1263
        %v1871 = vpop.f32.mrb[0].mxu0
        %v1872 = vadd.f32 %v1711, %v1871
        %v1873 = vpop.f32.mrb[0].mxu0
        %v1874 = vpop.f32.mrb[0].mxu0
        %v1875 = vadd.f32 %v1714, %v1874
        %v1876 = vpop.f32.mrb[0].mxu0
        %1877 = vmatprep.mubr.bf16.mxu0 %v1272
        %1878 = vmatmul.mubr.bf16.gmra.mrb[0].mxu0 %v1271
        %v1879 = vpop.f32.mrb[0].mxu0
        %v1880 = vadd.f32 %v1719, %v1879
        %v1881 = vpop.f32.mrb[0].mxu0
        %v1882 = vpop.f32.mrb[0].mxu0
        %v1883 = vadd.f32 %v1722, %v1882
        %v1884 = vpop.f32.mrb[0].mxu0
        %1885 = vmatprep.mubr.bf16.mxu0 %v1280
        %1886 = vmatmul.mubr.bf16.gmra.mrb[0].mxu0 %v1279
        %v1887 = vpop.f32.mrb[0].mxu0
        %v1888 = vadd.f32 %v1727, %v1887
        %v1889 = vpop.f32.mrb[0].mxu0
        %v1890 = vpop.f32.mrb[0].mxu0
        %v1891 = vadd.f32 %v1730, %v1890
        %v1892 = vpop.f32.mrb[0].mxu0
        %1893 = vmatprep.mubr.bf16.mxu0 %v1288
        %1894 = vmatmul.mubr.bf16.gmra.mrb[0].mxu0 %v1287
        %v1895 = vpop.f32.mrb[0].mxu0
        %v1896 = vadd.f32 %v1735, %v1895
        %v1897 = vpop.f32.mrb[0].mxu0
        %v1898 = vpop.f32.mrb[0].mxu0
        %v1899 = vadd.f32 %v1738, %v1898
        %v1900 = vpop.f32.mrb[0].mxu0
        %1901 = vmatprep.mubr.bf16.mxu0 %v1296
        %1902 = vmatmul.mubr.bf16.gmra.mrb[0].mxu0 %v1295
        %v1903 = vpop.f32.mrb[0].mxu0
        %v1904 = vadd.f32 %v1743, %v1903
        %v1905 = vpop.f32.mrb[0].mxu0
        %v1906 = vpop.f32.mrb[0].mxu0
        %v1907 = vadd.f32 %v1746, %v1906
        %v1908 = vpop.f32.mrb[0].mxu0
        %1909 = vmatprep.mubr.bf16.mxu0 %v1304
        %1910 = vmatmul.mubr.bf16.gmra.mrb[0].mxu0 %v1303
        %v1911 = vpop.f32.mrb[0].mxu0
        %v1912 = vadd.f32 %v1751, %v1911
        %v1913 = vpop.f32.mrb[0].mxu0
        %v1914 = vpop.f32.mrb[0].mxu0
        %v1915 = vadd.f32 %v1754, %v1914
        %v1916 = vpop.f32.mrb[0].mxu0
        %1917 = vmatprep.mubr.bf16.mxu0 %v1312
        %1918 = vmatmul.mubr.bf16.gmra.mrb[0].mxu0 %v1311
        %v1919 = vpop.f32.mrb[0].mxu0
        %v1920 = vadd.f32 %v1759, %v1919
        %v1921 = vpop.f32.mrb[0].mxu0
        %v1922 = vpop.f32.mrb[0].mxu0
        %v1923 = vadd.f32 %v1762, %v1922
        %v1924 = vpop.f32.mrb[0].mxu0
        %1925 = vmatprep.mubr.bf16.mxu0 %v1320
        %1926 = vmatmul.mubr.bf16.gmra.mrb[0].mxu0 %v1319
        %v1927 = vpop.f32.mrb[0].mxu0
        %v1928 = vadd.f32 %v1767, %v1927
        %v1929 = vpop.f32.mrb[0].mxu0
        %v1930 = vpop.f32.mrb[0].mxu0
        %v1931 = vadd.f32 %v1770, %v1930
        %v1932 = vpop.f32.mrb[0].mxu0
        %1933 = vmatprep.mubr.bf16.mxu0 %v1328
        %1934 = vmatmul.mubr.bf16.gmra.mrb[0].mxu0 %v1327
        %v1935 = vpop.f32.mrb[0].mxu0
        %v1936 = vadd.f32 %v1775, %v1935
        %v1937 = vpop.f32.mrb[0].mxu0
        %v1938 = vpop.f32.mrb[0].mxu0
        %v1939 = vadd.f32 %v1778, %v1938
        %v1940 = vpop.f32.mrb[0].mxu0
        %1941 = vmatprep.mubr.bf16.mxu0 %v1336
        %1942 = vmatmul.mubr.bf16.gmra.mrb[0].mxu0 %v1335
        %v1943 = vpop.f32.mrb[0].mxu0
        %v1944 = vadd.f32 %v1783, %v1943
        %v1945 = vpop.f32.mrb[0].mxu0
        %v1946 = vpop.f32.mrb[0].mxu0
        %v1947 = vadd.f32 %v1786, %v1946
        %v1948 = vpop.f32.mrb[0].mxu0
        %1949 = vmatprep.mubr.bf16.mxu0 %v1344
        %1950 = vmatmul.mubr.bf16.gmra.mrb[0].mxu0 %v1343
        %v1951 = vpop.f32.mrb[0].mxu0
        %v1952 = vadd.f32 %v1791, %v1951
        %v1953 = vpop.f32.mrb[0].mxu0
        %v1954 = vpop.f32.mrb[0].mxu0
        %v1955 = vadd.f32 %v1794, %v1954
        %v1956 = vpop.f32.mrb[0].mxu0
        %1957 = vdwg.mxu0
        %1958 = vmatprep.subr.bf16.mxu0 0
        %1959 = vmatpush1.bf16.msra.mxu0 %v819
        %1960 = vmatprep.subr.bf16.mxu0 0
        %1961 = vmatpush1.bf16.msra.mxu0 %v820
        %1962 = vmatprep.subr.bf16.mxu0 0
        %1963 = vmatpush1.bf16.msra.mxu0 %v821
        %1964 = vmatprep.subr.bf16.mxu0 0
        %1965 = vmatpush1.bf16.msra.mxu0 %v822
        %1966 = vmatprep.subr.bf16.mxu0 0
        %1967 = vmatpush1.bf16.msra.mxu0 %v823
        %1968 = vmatprep.subr.bf16.mxu0 0
        %1969 = vmatpush1.bf16.msra.mxu0 %v824
        %1970 = vmatprep.subr.bf16.mxu0 0
        %1971 = vmatpush1.bf16.msra.mxu0 %v825
        %1972 = vmatprep.subr.bf16.mxu0 0
        %1973 = vmatpush1.bf16.msra.mxu0 %v826
        %1974 = vmatprep.subr.bf16.mxu0 0
        %1975 = vmatpush1.bf16.msra.mxu0 %v827
        %1976 = vmatprep.subr.bf16.mxu0 0
        %1977 = vmatpush1.bf16.msra.mxu0 %v828
        %1978 = vmatprep.subr.bf16.mxu0 0
        %1979 = vmatpush1.bf16.msra.mxu0 %v829
        %1980 = vmatprep.subr.bf16.mxu0 0
        %1981 = vmatpush1.bf16.msra.mxu0 %v830
        %1982 = vmatprep.subr.bf16.mxu0 0
        %1983 = vmatpush1.bf16.msra.mxu0 %v831
        %1984 = vmatprep.subr.bf16.mxu0 0
        %1985 = vmatpush1.bf16.msra.mxu0 %v832
        %1986 = vmatprep.subr.bf16.mxu0 0
        %1987 = vmatpush1.bf16.msra.mxu0 %v833
        %1988 = vmatprep.subr.bf16.mxu0 0
        %1989 = vmatpush1.bf16.msra.mxu0 %v834
        %1990 = vmatprep.mubr.bf16.mxu0 %v1226
        %1991 = vmatmul.mubr.bf16.gmra.mrb[0].mxu0 %v1225
        %v1992 = vpop.f32.mrb[0].mxu0
        %v1993 = vadd.f32 %v1832, %v1992
        %v1994 = vpop.f32.mrb[0].mxu0
        %v1995 = vpop.f32.mrb[0].mxu0
        %v1996 = vadd.f32 %v1835, %v1995
        %v1997 = vpop.f32.mrb[0].mxu0
        %1998 = vmatprep.mubr.bf16.mxu0 %v1234
        %1999 = vmatmul.mubr.bf16.gmra.mrb[0].mxu0 %v1233
        %v2000 = vpop.f32.mrb[0].mxu0
        %v2001 = vadd.f32 %v1840, %v2000
        %v2002 = vpop.f32.mrb[0].mxu0
        %v2003 = vpop.f32.mrb[0].mxu0
        %v2004 = vadd.f32 %v1843, %v2003
        %v2005 = vpop.f32.mrb[0].mxu0
        %2006 = vmatprep.mubr.bf16.mxu0 %v1242
        %2007 = vmatmul.mubr.bf16.gmra.mrb[0].mxu0 %v1241
        %v2008 = vpop.f32.mrb[0].mxu0
        %v2009 = vadd.f32 %v1848, %v2008
        %v2010 = vpop.f32.mrb[0].mxu0
        %v2011 = vpop.f32.mrb[0].mxu0
        %v2012 = vadd.f32 %v1851, %v2011
        %v2013 = vpop.f32.mrb[0].mxu0
        %2014 = vmatprep.mubr.bf16.mxu0 %v1250
        %2015 = vmatmul.mubr.bf16.gmra.mrb[0].mxu0 %v1249
        %v2016 = vpop.f32.mrb[0].mxu0
        %v2017 = vadd.f32 %v1856, %v2016
        %v2018 = vpop.f32.mrb[0].mxu0
        %v2019 = vpop.f32.mrb[0].mxu0
        %v2020 = vadd.f32 %v1859, %v2019
        %v2021 = vpop.f32.mrb[0].mxu0
        %2022 = vmatprep.mubr.bf16.mxu0 %v1258
        %2023 = vmatmul.mubr.bf16.gmra.mrb[0].mxu0 %v1257
        %v2024 = vpop.f32.mrb[0].mxu0
        %v2025 = vadd.f32 %v1864, %v2024
        %v2026 = vpop.f32.mrb[0].mxu0
        %v2027 = vpop.f32.mrb[0].mxu0
        %v2028 = vadd.f32 %v1867, %v2027
        %v2029 = vpop.f32.mrb[0].mxu0
        %2030 = vmatprep.mubr.bf16.mxu0 %v1266
        %2031 = vmatmul.mubr.bf16.gmra.mrb[0].mxu0 %v1265
        %v2032 = vpop.f32.mrb[0].mxu0
        %v2033 = vadd.f32 %v1872, %v2032
        %v2034 = vpop.f32.mrb[0].mxu0
        %v2035 = vpop.f32.mrb[0].mxu0
        %v2036 = vadd.f32 %v1875, %v2035
        %v2037 = vpop.f32.mrb[0].mxu0
        %2038 = vmatprep.mubr.bf16.mxu0 %v1274
        %2039 = vmatmul.mubr.bf16.gmra.mrb[0].mxu0 %v1273
        %v2040 = vpop.f32.mrb[0].mxu0
        %v2041 = vadd.f32 %v1880, %v2040
        %v2042 = vpop.f32.mrb[0].mxu0
        %v2043 = vpop.f32.mrb[0].mxu0
        %v2044 = vadd.f32 %v1883, %v2043
        %v2045 = vpop.f32.mrb[0].mxu0
        %2046 = vmatprep.mubr.bf16.mxu0 %v1282
        %2047 = vmatmul.mubr.bf16.gmra.mrb[0].mxu0 %v1281
        %v2048 = vpop.f32.mrb[0].mxu0
        %v2049 = vadd.f32 %v1888, %v2048
        %v2050 = vpop.f32.mrb[0].mxu0
        %v2051 = vpop.f32.mrb[0].mxu0
        %v2052 = vadd.f32 %v1891, %v2051
        %v2053 = vpop.f32.mrb[0].mxu0
        %2054 = vmatprep.mubr.bf16.mxu0 %v1290
        %2055 = vmatmul.mubr.bf16.gmra.mrb[0].mxu0 %v1289
        %v2056 = vpop.f32.mrb[0].mxu0
        %v2057 = vadd.f32 %v1896, %v2056
        %v2058 = vpop.f32.mrb[0].mxu0
        %v2059 = vpop.f32.mrb[0].mxu0
        %v2060 = vadd.f32 %v1899, %v2059
        %v2061 = vpop.f32.mrb[0].mxu0
        %2062 = vmatprep.mubr.bf16.mxu0 %v1298
        %2063 = vmatmul.mubr.bf16.gmra.mrb[0].mxu0 %v1297
        %v2064 = vpop.f32.mrb[0].mxu0
        %v2065 = vadd.f32 %v1904, %v2064
        %v2066 = vpop.f32.mrb[0].mxu0
        %v2067 = vpop.f32.mrb[0].mxu0
        %v2068 = vadd.f32 %v1907, %v2067
        %v2069 = vpop.f32.mrb[0].mxu0
        %2070 = vmatprep.mubr.bf16.mxu0 %v1306
        %2071 = vmatmul.mubr.bf16.gmra.mrb[0].mxu0 %v1305
        %v2072 = vpop.f32.mrb[0].mxu0
        %v2073 = vadd.f32 %v1912, %v2072
        %v2074 = vpop.f32.mrb[0].mxu0
        %v2075 = vpop.f32.mrb[0].mxu0
        %v2076 = vadd.f32 %v1915, %v2075
        %v2077 = vpop.f32.mrb[0].mxu0
        %2078 = vmatprep.mubr.bf16.mxu0 %v1314
        %2079 = vmatmul.mubr.bf16.gmra.mrb[0].mxu0 %v1313
        %v2080 = vpop.f32.mrb[0].mxu0
        %v2081 = vadd.f32 %v1920, %v2080
        %v2082 = vpop.f32.mrb[0].mxu0
        %v2083 = vpop.f32.mrb[0].mxu0
        %v2084 = vadd.f32 %v1923, %v2083
        %v2085 = vpop.f32.mrb[0].mxu0
        %2086 = vmatprep.mubr.bf16.mxu0 %v1322
        %2087 = vmatmul.mubr.bf16.gmra.mrb[0].mxu0 %v1321
        %v2088 = vpop.f32.mrb[0].mxu0
        %v2089 = vadd.f32 %v1928, %v2088
        %v2090 = vpop.f32.mrb[0].mxu0
        %v2091 = vpop.f32.mrb[0].mxu0
        %v2092 = vadd.f32 %v1931, %v2091
        %v2093 = vpop.f32.mrb[0].mxu0
        %2094 = vmatprep.mubr.bf16.mxu0 %v1330
        %2095 = vmatmul.mubr.bf16.gmra.mrb[0].mxu0 %v1329
        %v2096 = vpop.f32.mrb[0].mxu0
        %v2097 = vadd.f32 %v1936, %v2096
        %v2098 = vpop.f32.mrb[0].mxu0
        %v2099 = vpop.f32.mrb[0].mxu0
        %v2100 = vadd.f32 %v1939, %v2099
        %v2101 = vpop.f32.mrb[0].mxu0
        %2102 = vmatprep.mubr.bf16.mxu0 %v1338
        %2103 = vmatmul.mubr.bf16.gmra.mrb[0].mxu0 %v1337
        %v2104 = vpop.f32.mrb[0].mxu0
        %v2105 = vadd.f32 %v1944, %v2104
        %v2106 = vpop.f32.mrb[0].mxu0
        %v2107 = vpop.f32.mrb[0].mxu0
        %v2108 = vadd.f32 %v1947, %v2107
        %v2109 = vpop.f32.mrb[0].mxu0
        %2110 = vmatprep.mubr.bf16.mxu0 %v1346
        %2111 = vmatmul.mubr.bf16.gmra.mrb[0].mxu0 %v1345
        %v2112 = vpop.f32.mrb[0].mxu0
        %v2113 = vadd.f32 %v1952, %v2112
        %v2114 = vpop.f32.mrb[0].mxu0
        %v2115 = vpop.f32.mrb[0].mxu0
        %v2116 = vadd.f32 %v1955, %v2115
        %v2117 = vpop.f32.mrb[0].mxu0
        %2118 = vdwg.mxu0
        %v2119 = vadd.f32 %v607, %v1993
        %v2120 = vadd.f32 %v608, %v1996
        %v2121 = vadd.f32 %v609, %v2001
        %v2122 = vadd.f32 %v610, %v2004
        %v2123 = vadd.f32 %v611, %v2009
        %v2124 = vadd.f32 %v612, %v2012
        %v2125 = vadd.f32 %v613, %v2017
        %v2126 = vadd.f32 %v614, %v2020
        %v2127 = vadd.f32 %v615, %v2025
        %v2128 = vadd.f32 %v616, %v2028
        %v2129 = vadd.f32 %v617, %v2033
        %v2130 = vadd.f32 %v618, %v2036
        %v2131 = vadd.f32 %v619, %v2041
        %v2132 = vadd.f32 %v620, %v2044
        %v2133 = vadd.f32 %v621, %v2049
        %v2134 = vadd.f32 %v622, %v2052
        %v2135 = vadd.f32 %v623, %v2057
        %v2136 = vadd.f32 %v624, %v2060
        %v2137 = vadd.f32 %v625, %v2065
        %v2138 = vadd.f32 %v626, %v2068
        %v2139 = vadd.f32 %v627, %v2073
        %v2140 = vadd.f32 %v628, %v2076
        %v2141 = vadd.f32 %v629, %v2081
        %v2142 = vadd.f32 %v630, %v2084
        %v2143 = vadd.f32 %v631, %v2089
        %v2144 = vadd.f32 %v632, %v2092
        %v2145 = vadd.f32 %v633, %v2097
        %v2146 = vadd.f32 %v634, %v2100
        %v2147 = vadd.f32 %v635, %v2105
        %v2148 = vadd.f32 %v636, %v2108
        %v2149 = vadd.f32 %v637, %v2113
        %v2150 = vadd.f32 %v638, %v2116
        %vm2151 = vcmask 261120
        %2152 = vst.msk [vmem:[#allocation4] sm:$0xff] %vm2151, %v2119
        %2153 = vst.msk [vmem:[#allocation4 + $0x8] sm:$0xff] %vm2151, %v2120
        %2154 = vst.msk [vmem:[#allocation4 + $0x10] sm:$0xff] %vm2151, %v2121
        %2155 = vst.msk [vmem:[#allocation4 + $0x18] sm:$0xff] %vm2151, %v2122
        %2156 = vst.msk [vmem:[#allocation4 + $0x20] sm:$0xff] %vm2151, %v2123
        %2157 = vst.msk [vmem:[#allocation4 + $0x28] sm:$0xff] %vm2151, %v2124
        %2158 = vst.msk [vmem:[#allocation4 + $0x30] sm:$0xff] %vm2151, %v2125
        %2159 = vst.msk [vmem:[#allocation4 + $0x38] sm:$0xff] %vm2151, %v2126
        %2160 = vst.msk [vmem:[#allocation4 + $0x40] sm:$0xff] %vm2151, %v2127
        %2161 = vst.msk [vmem:[#allocation4 + $0x48] sm:$0xff] %vm2151, %v2128
        %2162 = vst.msk [vmem:[#allocation4 + $0x50] sm:$0xff] %vm2151, %v2129
        %2163 = vst.msk [vmem:[#allocation4 + $0x58] sm:$0xff] %vm2151, %v2130
        %2164 = vst.msk [vmem:[#allocation4 + $0x60] sm:$0xff] %vm2151, %v2131
        %2165 = vst.msk [vmem:[#allocation4 + $0x68] sm:$0xff] %vm2151, %v2132
        %2166 = vst.msk [vmem:[#allocation4 + $0x70] sm:$0xff] %vm2151, %v2133
        %2167 = vst.msk [vmem:[#allocation4 + $0x78] sm:$0xff] %vm2151, %v2134
        %2168 = vst.msk [vmem:[#allocation4 + $0x80] sm:$0xff] %vm2151, %v2135
        %2169 = vst.msk [vmem:[#allocation4 + $0x88] sm:$0xff] %vm2151, %v2136
        %2170 = vst.msk [vmem:[#allocation4 + $0x90] sm:$0xff] %vm2151, %v2137
        %2171 = vst.msk [vmem:[#allocation4 + $0x98] sm:$0xff] %vm2151, %v2138
        %2172 = vst.msk [vmem:[#allocation4 + $0xa0] sm:$0xff] %vm2151, %v2139
        %2173 = vst.msk [vmem:[#allocation4 + $0xa8] sm:$0xff] %vm2151, %v2140
        %2174 = vst.msk [vmem:[#allocation4 + $0xb0] sm:$0xff] %vm2151, %v2141
        %2175 = vst.msk [vmem:[#allocation4 + $0xb8] sm:$0xff] %vm2151, %v2142
        %2176 = vst.msk [vmem:[#allocation4 + $0xc0] sm:$0xff] %vm2151, %v2143
        %2177 = vst.msk [vmem:[#allocation4 + $0xc8] sm:$0xff] %vm2151, %v2144
        %2178 = vst.msk [vmem:[#allocation4 + $0xd0] sm:$0xff] %vm2151, %v2145
        %2179 = vst.msk [vmem:[#allocation4 + $0xd8] sm:$0xff] %vm2151, %v2146
        %2180 = vst.msk [vmem:[#allocation4 + $0xe0] sm:$0xff] %vm2151, %v2147
        %2181 = vst.msk [vmem:[#allocation4 + $0xe8] sm:$0xff] %vm2151, %v2148
        %2182 = vst.msk [vmem:[#allocation4 + $0xf0] sm:$0xff] %vm2151, %v2149
        %2183 = vst.msk [vmem:[#allocation4 + $0xf8] sm:$0xff] %vm2151, %v2150
        // Predicated region
        $region41: #{tpu_custom_call.1} parent=27 // pred_check
          %p2184 = pneg %p180
        $region42: #{tpu_custom_call.1} parent=27 // pred_check_branch
          %2186 = sbr.rel (%p2184) target = $region44
        $region43: #{tpu_custom_call.1} parent=27 // pred_region
          %v2187 = vld [vmem:[#allocation4] sm:$0xff]
          %v2188 = vld [vmem:[#allocation4 + $0x8] sm:$0xff]
          %v2189 = vld [vmem:[#allocation4 + $0x10] sm:$0xff]
          %v2190 = vld [vmem:[#allocation4 + $0x18] sm:$0xff]
          %v2191 = vld [vmem:[#allocation4 + $0x20] sm:$0xff]
          %v2192 = vld [vmem:[#allocation4 + $0x28] sm:$0xff]
          %v2193 = vld [vmem:[#allocation4 + $0x30] sm:$0xff]
          %v2194 = vld [vmem:[#allocation4 + $0x38] sm:$0xff]
          %v2195 = vld [vmem:[#allocation4 + $0x40] sm:$0xff]
          %v2196 = vld [vmem:[#allocation4 + $0x48] sm:$0xff]
          %v2197 = vld [vmem:[#allocation4 + $0x50] sm:$0xff]
          %v2198 = vld [vmem:[#allocation4 + $0x58] sm:$0xff]
          %v2199 = vld [vmem:[#allocation4 + $0x60] sm:$0xff]
          %v2200 = vld [vmem:[#allocation4 + $0x68] sm:$0xff]
          %v2201 = vld [vmem:[#allocation4 + $0x70] sm:$0xff]
          %v2202 = vld [vmem:[#allocation4 + $0x78] sm:$0xff]
          %v2203 = vld [vmem:[#allocation4 + $0x80] sm:$0xff]
          %v2204 = vld [vmem:[#allocation4 + $0x88] sm:$0xff]
          %v2205 = vld [vmem:[#allocation4 + $0x90] sm:$0xff]
          %v2206 = vld [vmem:[#allocation4 + $0x98] sm:$0xff]
          %v2207 = vld [vmem:[#allocation4 + $0xa0] sm:$0xff]
          %v2208 = vld [vmem:[#allocation4 + $0xa8] sm:$0xff]
          %v2209 = vld [vmem:[#allocation4 + $0xb0] sm:$0xff]
          %v2210 = vld [vmem:[#allocation4 + $0xb8] sm:$0xff]
          %v2211 = vld [vmem:[#allocation4 + $0xc0] sm:$0xff]
          %v2212 = vld [vmem:[#allocation4 + $0xc8] sm:$0xff]
          %v2213 = vld [vmem:[#allocation4 + $0xd0] sm:$0xff]
          %v2214 = vld [vmem:[#allocation4 + $0xd8] sm:$0xff]
          %v2215 = vld [vmem:[#allocation4 + $0xe0] sm:$0xff]
          %v2216 = vld [vmem:[#allocation4 + $0xe8] sm:$0xff]
          %v2217 = vld [vmem:[#allocation4 + $0xf0] sm:$0xff]
          %v2218 = vld [vmem:[#allocation4 + $0xf8] sm:$0xff]
          %s2219 = smul.u32 %s22, 256
          %v2220 = vpack.c.bf16 %v2188, %v2187
          %v2221 = vpack.c.bf16 %v2190, %v2189
          %v2222 = vpack.c.bf16 %v2192, %v2191
          %v2223 = vpack.c.bf16 %v2194, %v2193
          %v2224 = vpack.c.bf16 %v2196, %v2195
          %v2225 = vpack.c.bf16 %v2198, %v2197
          %v2226 = vpack.c.bf16 %v2200, %v2199
          %v2227 = vpack.c.bf16 %v2202, %v2201
          %v2228 = vpack.c.bf16 %v2204, %v2203
          %v2229 = vpack.c.bf16 %v2206, %v2205
          %v2230 = vpack.c.bf16 %v2208, %v2207
          %v2231 = vpack.c.bf16 %v2210, %v2209
          %v2232 = vpack.c.bf16 %v2212, %v2211
          %v2233 = vpack.c.bf16 %v2214, %v2213
          %v2234 = vpack.c.bf16 %v2216, %v2215
          %v2235 = vpack.c.bf16 %v2218, %v2217
          %s2236 = sshra.s32 %s2219, 4
          %s2237 = sand.u32 %s2219, 15
          %s2238 = smul.addr %s2236, 8
          %s2239 = scalar_lea.vmem [#allocation3], %s2238
          %2240 = vst.msk [vmem:[%s2239] sm:$0xff] %vm2151, %v2220
          %2241 = vst.msk [vmem:[%s2239 + $0x8] sm:$0xff] %vm2151, %v2221
          %2242 = vst.msk [vmem:[%s2239 + $0x10] sm:$0xff] %vm2151, %v2222
          %2243 = vst.msk [vmem:[%s2239 + $0x18] sm:$0xff] %vm2151, %v2223
          %2244 = vst.msk [vmem:[%s2239 + $0x20] sm:$0xff] %vm2151, %v2224
          %2245 = vst.msk [vmem:[%s2239 + $0x28] sm:$0xff] %vm2151, %v2225
          %2246 = vst.msk [vmem:[%s2239 + $0x30] sm:$0xff] %vm2151, %v2226
          %2247 = vst.msk [vmem:[%s2239 + $0x38] sm:$0xff] %vm2151, %v2227
          %2248 = vst.msk [vmem:[%s2239 + $0x40] sm:$0xff] %vm2151, %v2228
          %2249 = vst.msk [vmem:[%s2239 + $0x48] sm:$0xff] %vm2151, %v2229
          %2250 = vst.msk [vmem:[%s2239 + $0x50] sm:$0xff] %vm2151, %v2230
          %2251 = vst.msk [vmem:[%s2239 + $0x58] sm:$0xff] %vm2151, %v2231
          %2252 = vst.msk [vmem:[%s2239 + $0x60] sm:$0xff] %vm2151, %v2232
          %2253 = vst.msk [vmem:[%s2239 + $0x68] sm:$0xff] %vm2151, %v2233
          %2254 = vst.msk [vmem:[%s2239 + $0x70] sm:$0xff] %vm2151, %v2234
          %2255 = vst.msk [vmem:[%s2239 + $0x78] sm:$0xff] %vm2151, %v2235
          %s2256 = scalar_lea.vmem %s2, %s2219
          %v2257 = vld [vmem:[%s2256] sm:$0xff]
          %v2258 = vld [vmem:[%s2256 + $0x8] sm:$0xff]
          %v2259 = vld [vmem:[%s2256 + $0x10] sm:$0xff]
          %v2260 = vld [vmem:[%s2256 + $0x18] sm:$0xff]
          %v2261 = vld [vmem:[%s2256 + $0x20] sm:$0xff]
          %v2262 = vld [vmem:[%s2256 + $0x28] sm:$0xff]
          %v2263 = vld [vmem:[%s2256 + $0x30] sm:$0xff]
          %v2264 = vld [vmem:[%s2256 + $0x38] sm:$0xff]
          %v2265 = vld [vmem:[%s2256 + $0x40] sm:$0xff]
          %v2266 = vld [vmem:[%s2256 + $0x48] sm:$0xff]
          %v2267 = vld [vmem:[%s2256 + $0x50] sm:$0xff]
          %v2268 = vld [vmem:[%s2256 + $0x58] sm:$0xff]
          %v2269 = vld [vmem:[%s2256 + $0x60] sm:$0xff]
          %v2270 = vld [vmem:[%s2256 + $0x68] sm:$0xff]
          %v2271 = vld [vmem:[%s2256 + $0x70] sm:$0xff]
          %v2272 = vld [vmem:[%s2256 + $0x78] sm:$0xff]
          %v2273 = vld [vmem:[%s2256 + $0x80] sm:$0xff]
          %v2274 = vld [vmem:[%s2256 + $0x88] sm:$0xff]
          %v2275 = vld [vmem:[%s2256 + $0x90] sm:$0xff]
          %v2276 = vld [vmem:[%s2256 + $0x98] sm:$0xff]
          %v2277 = vld [vmem:[%s2256 + $0xa0] sm:$0xff]
          %v2278 = vld [vmem:[%s2256 + $0xa8] sm:$0xff]
          %v2279 = vld [vmem:[%s2256 + $0xb0] sm:$0xff]
          %v2280 = vld [vmem:[%s2256 + $0xb8] sm:$0xff]
          %v2281 = vld [vmem:[%s2256 + $0xc0] sm:$0xff]
          %v2282 = vld [vmem:[%s2256 + $0xc8] sm:$0xff]
          %v2283 = vld [vmem:[%s2256 + $0xd0] sm:$0xff]
          %v2284 = vld [vmem:[%s2256 + $0xd8] sm:$0xff]
          %v2285 = vld [vmem:[%s2256 + $0xe0] sm:$0xff]
          %v2286 = vld [vmem:[%s2256 + $0xe8] sm:$0xff]
          %v2287 = vld [vmem:[%s2256 + $0xf0] sm:$0xff]
          %v2288 = vld [vmem:[%s2256 + $0xf8] sm:$0xff]
          %v2289 = vadd.f32 %v2257, %v2187
          %v2290 = vadd.f32 %v2258, %v2188
          %v2291 = vadd.f32 %v2259, %v2189
          %v2292 = vadd.f32 %v2260, %v2190
          %v2293 = vadd.f32 %v2261, %v2191
          %v2294 = vadd.f32 %v2262, %v2192
          %v2295 = vadd.f32 %v2263, %v2193
          %v2296 = vadd.f32 %v2264, %v2194
          %v2297 = vadd.f32 %v2265, %v2195
          %v2298 = vadd.f32 %v2266, %v2196
          %v2299 = vadd.f32 %v2267, %v2197
          %v2300 = vadd.f32 %v2268, %v2198
          %v2301 = vadd.f32 %v2269, %v2199
          %v2302 = vadd.f32 %v2270, %v2200
          %v2303 = vadd.f32 %v2271, %v2201
          %v2304 = vadd.f32 %v2272, %v2202
          %v2305 = vadd.f32 %v2273, %v2203
          %v2306 = vadd.f32 %v2274, %v2204
          %v2307 = vadd.f32 %v2275, %v2205
          %v2308 = vadd.f32 %v2276, %v2206
          %v2309 = vadd.f32 %v2277, %v2207
          %v2310 = vadd.f32 %v2278, %v2208
          %v2311 = vadd.f32 %v2279, %v2209
          %v2312 = vadd.f32 %v2280, %v2210
          %v2313 = vadd.f32 %v2281, %v2211
          %v2314 = vadd.f32 %v2282, %v2212
          %v2315 = vadd.f32 %v2283, %v2213
          %v2316 = vadd.f32 %v2284, %v2214
          %v2317 = vadd.f32 %v2285, %v2215
          %v2318 = vadd.f32 %v2286, %v2216
          %v2319 = vadd.f32 %v2287, %v2217
          %v2320 = vadd.f32 %v2288, %v2218
          %2321 = vst.msk [vmem:[%s2256] sm:$0xff] %vm2151, %v2289
          %2322 = vst.msk [vmem:[%s2256 + $0x8] sm:$0xff] %vm2151, %v2290
          %2323 = vst.msk [vmem:[%s2256 + $0x10] sm:$0xff] %vm2151, %v2291
          %2324 = vst.msk [vmem:[%s2256 + $0x18] sm:$0xff] %vm2151, %v2292
          %2325 = vst.msk [vmem:[%s2256 + $0x20] sm:$0xff] %vm2151, %v2293
          %2326 = vst.msk [vmem:[%s2256 + $0x28] sm:$0xff] %vm2151, %v2294
          %2327 = vst.msk [vmem:[%s2256 + $0x30] sm:$0xff] %vm2151, %v2295
          %2328 = vst.msk [vmem:[%s2256 + $0x38] sm:$0xff] %vm2151, %v2296
          %2329 = vst.msk [vmem:[%s2256 + $0x40] sm:$0xff] %vm2151, %v2297
          %2330 = vst.msk [vmem:[%s2256 + $0x48] sm:$0xff] %vm2151, %v2298
          %2331 = vst.msk [vmem:[%s2256 + $0x50] sm:$0xff] %vm2151, %v2299
          %2332 = vst.msk [vmem:[%s2256 + $0x58] sm:$0xff] %vm2151, %v2300
          %2333 = vst.msk [vmem:[%s2256 + $0x60] sm:$0xff] %vm2151, %v2301
          %2334 = vst.msk [vmem:[%s2256 + $0x68] sm:$0xff] %vm2151, %v2302
          %2335 = vst.msk [vmem:[%s2256 + $0x70] sm:$0xff] %vm2151, %v2303
          %2336 = vst.msk [vmem:[%s2256 + $0x78] sm:$0xff] %vm2151, %v2304
          %2337 = vst.msk [vmem:[%s2256 + $0x80] sm:$0xff] %vm2151, %v2305
          %2338 = vst.msk [vmem:[%s2256 + $0x88] sm:$0xff] %vm2151, %v2306
          %2339 = vst.msk [vmem:[%s2256 + $0x90] sm:$0xff] %vm2151, %v2307
          %2340 = vst.msk [vmem:[%s2256 + $0x98] sm:$0xff] %vm2151, %v2308
          %2341 = vst.msk [vmem:[%s2256 + $0xa0] sm:$0xff] %vm2151, %v2309
          %2342 = vst.msk [vmem:[%s2256 + $0xa8] sm:$0xff] %vm2151, %v2310
          %2343 = vst.msk [vmem:[%s2256 + $0xb0] sm:$0xff] %vm2151, %v2311
          %2344 = vst.msk [vmem:[%s2256 + $0xb8] sm:$0xff] %vm2151, %v2312
          %2345 = vst.msk [vmem:[%s2256 + $0xc0] sm:$0xff] %vm2151, %v2313
          %2346 = vst.msk [vmem:[%s2256 + $0xc8] sm:$0xff] %vm2151, %v2314
          %2347 = vst.msk [vmem:[%s2256 + $0xd0] sm:$0xff] %vm2151, %v2315
          %2348 = vst.msk [vmem:[%s2256 + $0xd8] sm:$0xff] %vm2151, %v2316
          %2349 = vst.msk [vmem:[%s2256 + $0xe0] sm:$0xff] %vm2151, %v2317
          %2350 = vst.msk [vmem:[%s2256 + $0xe8] sm:$0xff] %vm2151, %v2318
          %2351 = vst.msk [vmem:[%s2256 + $0xf0] sm:$0xff] %vm2151, %v2319
          %2352 = vst.msk [vmem:[%s2256 + $0xf8] sm:$0xff] %vm2151, %v2320
        $region44: #{tpu_custom_call.1} parent=27 // pred_fallthru
          _
        %p2353 = scmp.eq.s32.totalorder %s22, 3
        %p2354 = pnand %p180, %p2353
        %p2355 = pneg %p2354
        // Predicated region
        $region45: #{tpu_custom_call.1} parent=27 // pred_check
          _
        $region46: #{tpu_custom_call.1} parent=27 // pred_check_branch
          %2357 = sbr.rel (%p2354) target = $region48
        $region47: #{tpu_custom_call.1} parent=27 // pred_region
          %v2358 = vld [vmem:[#allocation3] sm:$0xff]
          %v2359 = vld [vmem:[#allocation3 + $0x8] sm:$0xff]
          %v2360 = vld [vmem:[#allocation3 + $0x10] sm:$0xff]
          %v2361 = vld [vmem:[#allocation3 + $0x18] sm:$0xff]
          %v2362 = vld [vmem:[#allocation3 + $0x20] sm:$0xff]
          %v2363 = vld [vmem:[#allocation3 + $0x28] sm:$0xff]
          %v2364 = vld [vmem:[#allocation3 + $0x30] sm:$0xff]
          %v2365 = vld [vmem:[#allocation3 + $0x38] sm:$0xff]
          %v2366 = vld [vmem:[#allocation3 + $0x40] sm:$0xff]
          %v2367 = vld [vmem:[#allocation3 + $0x48] sm:$0xff]
          %v2368 = vld [vmem:[#allocation3 + $0x50] sm:$0xff]
          %v2369 = vld [vmem:[#allocation3 + $0x58] sm:$0xff]
          %v2370 = vld [vmem:[#allocation3 + $0x60] sm:$0xff]
          %v2371 = vld [vmem:[#allocation3 + $0x68] sm:$0xff]
          %v2372 = vld [vmem:[#allocation3 + $0x70] sm:$0xff]
          %v2373 = vld [vmem:[#allocation3 + $0x78] sm:$0xff]
          %v2374 = vld [vmem:[#allocation3 + $0x80] sm:$0xff]
          %v2375 = vld [vmem:[#allocation3 + $0x88] sm:$0xff]
          %v2376 = vld [vmem:[#allocation3 + $0x90] sm:$0xff]
          %v2377 = vld [vmem:[#allocation3 + $0x98] sm:$0xff]
          %v2378 = vld [vmem:[#allocation3 + $0xa0] sm:$0xff]
          %v2379 = vld [vmem:[#allocation3 + $0xa8] sm:$0xff]
          %v2380 = vld [vmem:[#allocation3 + $0xb0] sm:$0xff]
          %v2381 = vld [vmem:[#allocation3 + $0xb8] sm:$0xff]
          %v2382 = vld [vmem:[#allocation3 + $0xc0] sm:$0xff]
          %v2383 = vld [vmem:[#allocation3 + $0xc8] sm:$0xff]
          %v2384 = vld [vmem:[#allocation3 + $0xd0] sm:$0xff]
          %v2385 = vld [vmem:[#allocation3 + $0xd8] sm:$0xff]
          %v2386 = vld [vmem:[#allocation3 + $0xe0] sm:$0xff]
          %v2387 = vld [vmem:[#allocation3 + $0xe8] sm:$0xff]
          %v2388 = vld [vmem:[#allocation3 + $0xf0] sm:$0xff]
          %v2389 = vld [vmem:[#allocation3 + $0xf8] sm:$0xff]
          %v2390 = vld [vmem:[#allocation3 + $0x100] sm:$0xff]
          %v2391 = vld [vmem:[#allocation3 + $0x108] sm:$0xff]
          %v2392 = vld [vmem:[#allocation3 + $0x110] sm:$0xff]
          %v2393 = vld [vmem:[#allocation3 + $0x118] sm:$0xff]
          %v2394 = vld [vmem:[#allocation3 + $0x120] sm:$0xff]
          %v2395 = vld [vmem:[#allocation3 + $0x128] sm:$0xff]
          %v2396 = vld [vmem:[#allocation3 + $0x130] sm:$0xff]
          %v2397 = vld [vmem:[#allocation3 + $0x138] sm:$0xff]
          %v2398 = vld [vmem:[#allocation3 + $0x140] sm:$0xff]
          %v2399 = vld [vmem:[#allocation3 + $0x148] sm:$0xff]
          %v2400 = vld [vmem:[#allocation3 + $0x150] sm:$0xff]
          %v2401 = vld [vmem:[#allocation3 + $0x158] sm:$0xff]
          %v2402 = vld [vmem:[#allocation3 + $0x160] sm:$0xff]
          %v2403 = vld [vmem:[#allocation3 + $0x168] sm:$0xff]
          %v2404 = vld [vmem:[#allocation3 + $0x170] sm:$0xff]
          %v2405 = vld [vmem:[#allocation3 + $0x178] sm:$0xff]
          %v2406 = vld [vmem:[#allocation3 + $0x180] sm:$0xff]
          %v2407 = vld [vmem:[#allocation3 + $0x188] sm:$0xff]
          %v2408 = vld [vmem:[#allocation3 + $0x190] sm:$0xff]
          %v2409 = vld [vmem:[#allocation3 + $0x198] sm:$0xff]
          %v2410 = vld [vmem:[#allocation3 + $0x1a0] sm:$0xff]
          %v2411 = vld [vmem:[#allocation3 + $0x1a8] sm:$0xff]
          %v2412 = vld [vmem:[#allocation3 + $0x1b0] sm:$0xff]
          %v2413 = vld [vmem:[#allocation3 + $0x1b8] sm:$0xff]
          %v2414 = vld [vmem:[#allocation3 + $0x1c0] sm:$0xff]
          %v2415 = vld [vmem:[#allocation3 + $0x1c8] sm:$0xff]
          %v2416 = vld [vmem:[#allocation3 + $0x1d0] sm:$0xff]
          %v2417 = vld [vmem:[#allocation3 + $0x1d8] sm:$0xff]
          %v2418 = vld [vmem:[#allocation3 + $0x1e0] sm:$0xff]
          %v2419 = vld [vmem:[#allocation3 + $0x1e8] sm:$0xff]
          %v2420 = vld [vmem:[#allocation3 + $0x1f0] sm:$0xff]
          %v2421 = vld [vmem:[#allocation3 + $0x1f8] sm:$0xff]
          %2422 = vst.msk [vmem:[#allocation2] sm:$0xff] %vm2151, %v2358
          %2423 = vst.msk [vmem:[#allocation2 + $0x8] sm:$0xff] %vm2151, %v2359
          %2424 = vst.msk [vmem:[#allocation2 + $0x10] sm:$0xff] %vm2151, %v2360
          %2425 = vst.msk [vmem:[#allocation2 + $0x18] sm:$0xff] %vm2151, %v2361
          %2426 = vst.msk [vmem:[#allocation2 + $0x20] sm:$0xff] %vm2151, %v2362
          %2427 = vst.msk [vmem:[#allocation2 + $0x28] sm:$0xff] %vm2151, %v2363
          %2428 = vst.msk [vmem:[#allocation2 + $0x30] sm:$0xff] %vm2151, %v2364
          %2429 = vst.msk [vmem:[#allocation2 + $0x38] sm:$0xff] %vm2151, %v2365
          %2430 = vst.msk [vmem:[#allocation2 + $0x40] sm:$0xff] %vm2151, %v2366
          %2431 = vst.msk [vmem:[#allocation2 + $0x48] sm:$0xff] %vm2151, %v2367
          %2432 = vst.msk [vmem:[#allocation2 + $0x50] sm:$0xff] %vm2151, %v2368
          %2433 = vst.msk [vmem:[#allocation2 + $0x58] sm:$0xff] %vm2151, %v2369
          %2434 = vst.msk [vmem:[#allocation2 + $0x60] sm:$0xff] %vm2151, %v2370
          %2435 = vst.msk [vmem:[#allocation2 + $0x68] sm:$0xff] %vm2151, %v2371
          %2436 = vst.msk [vmem:[#allocation2 + $0x70] sm:$0xff] %vm2151, %v2372
          %2437 = vst.msk [vmem:[#allocation2 + $0x78] sm:$0xff] %vm2151, %v2373
          %2438 = vst.msk [vmem:[#allocation2 + $0x80] sm:$0xff] %vm2151, %v2374
          %2439 = vst.msk [vmem:[#allocation2 + $0x88] sm:$0xff] %vm2151, %v2375
          %2440 = vst.msk [vmem:[#allocation2 + $0x90] sm:$0xff] %vm2151, %v2376
          %2441 = vst.msk [vmem:[#allocation2 + $0x98] sm:$0xff] %vm2151, %v2377
          %2442 = vst.msk [vmem:[#allocation2 + $0xa0] sm:$0xff] %vm2151, %v2378
          %2443 = vst.msk [vmem:[#allocation2 + $0xa8] sm:$0xff] %vm2151, %v2379
          %2444 = vst.msk [vmem:[#allocation2 + $0xb0] sm:$0xff] %vm2151, %v2380
          %2445 = vst.msk [vmem:[#allocation2 + $0xb8] sm:$0xff] %vm2151, %v2381
          %2446 = vst.msk [vmem:[#allocation2 + $0xc0] sm:$0xff] %vm2151, %v2382
          %2447 = vst.msk [vmem:[#allocation2 + $0xc8] sm:$0xff] %vm2151, %v2383
          %2448 = vst.msk [vmem:[#allocation2 + $0xd0] sm:$0xff] %vm2151, %v2384
          %2449 = vst.msk [vmem:[#allocation2 + $0xd8] sm:$0xff] %vm2151, %v2385
          %2450 = vst.msk [vmem:[#allocation2 + $0xe0] sm:$0xff] %vm2151, %v2386
          %2451 = vst.msk [vmem:[#allocation2 + $0xe8] sm:$0xff] %vm2151, %v2387
          %2452 = vst.msk [vmem:[#allocation2 + $0xf0] sm:$0xff] %vm2151, %v2388
          %2453 = vst.msk [vmem:[#allocation2 + $0xf8] sm:$0xff] %vm2151, %v2389
          %2454 = vst.msk [vmem:[#allocation2 + $0x100] sm:$0xff] %vm2151, %v2390
          %2455 = vst.msk [vmem:[#allocation2 + $0x108] sm:$0xff] %vm2151, %v2391
          %2456 = vst.msk [vmem:[#allocation2 + $0x110] sm:$0xff] %vm2151, %v2392
          %2457 = vst.msk [vmem:[#allocation2 + $0x118] sm:$0xff] %vm2151, %v2393
          %2458 = vst.msk [vmem:[#allocation2 + $0x120] sm:$0xff] %vm2151, %v2394
          %2459 = vst.msk [vmem:[#allocation2 + $0x128] sm:$0xff] %vm2151, %v2395
          %2460 = vst.msk [vmem:[#allocation2 + $0x130] sm:$0xff] %vm2151, %v2396
          %2461 = vst.msk [vmem:[#allocation2 + $0x138] sm:$0xff] %vm2151, %v2397
          %2462 = vst.msk [vmem:[#allocation2 + $0x140] sm:$0xff] %vm2151, %v2398
          %2463 = vst.msk [vmem:[#allocation2 + $0x148] sm:$0xff] %vm2151, %v2399
          %2464 = vst.msk [vmem:[#allocation2 + $0x150] sm:$0xff] %vm2151, %v2400
          %2465 = vst.msk [vmem:[#allocation2 + $0x158] sm:$0xff] %vm2151, %v2401
          %2466 = vst.msk [vmem:[#allocation2 + $0x160] sm:$0xff] %vm2151, %v2402
          %2467 = vst.msk [vmem:[#allocation2 + $0x168] sm:$0xff] %vm2151, %v2403
          %2468 = vst.msk [vmem:[#allocation2 + $0x170] sm:$0xff] %vm2151, %v2404
          %2469 = vst.msk [vmem:[#allocation2 + $0x178] sm:$0xff] %vm2151, %v2405
          %2470 = vst.msk [vmem:[#allocation2 + $0x180] sm:$0xff] %vm2151, %v2406
          %2471 = vst.msk [vmem:[#allocation2 + $0x188] sm:$0xff] %vm2151, %v2407
          %2472 = vst.msk [vmem:[#allocation2 + $0x190] sm:$0xff] %vm2151, %v2408
          %2473 = vst.msk [vmem:[#allocation2 + $0x198] sm:$0xff] %vm2151, %v2409
          %2474 = vst.msk [vmem:[#allocation2 + $0x1a0] sm:$0xff] %vm2151, %v2410
          %2475 = vst.msk [vmem:[#allocation2 + $0x1a8] sm:$0xff] %vm2151, %v2411
          %2476 = vst.msk [vmem:[#allocation2 + $0x1b0] sm:$0xff] %vm2151, %v2412
          %2477 = vst.msk [vmem:[#allocation2 + $0x1b8] sm:$0xff] %vm2151, %v2413
          %2478 = vst.msk [vmem:[#allocation2 + $0x1c0] sm:$0xff] %vm2151, %v2414
          %2479 = vst.msk [vmem:[#allocation2 + $0x1c8] sm:$0xff] %vm2151, %v2415
          %2480 = vst.msk [vmem:[#allocation2 + $0x1d0] sm:$0xff] %vm2151, %v2416
          %2481 = vst.msk [vmem:[#allocation2 + $0x1d8] sm:$0xff] %vm2151, %v2417
          %2482 = vst.msk [vmem:[#allocation2 + $0x1e0] sm:$0xff] %vm2151, %v2418
          %2483 = vst.msk [vmem:[#allocation2 + $0x1e8] sm:$0xff] %vm2151, %v2419
          %2484 = vst.msk [vmem:[#allocation2 + $0x1f0] sm:$0xff] %vm2151, %v2420
          %2485 = vst.msk [vmem:[#allocation2 + $0x1f8] sm:$0xff] %vm2151, %v2421
        $region48: #{tpu_custom_call.1} parent=27 // pred_fallthru
          _
        %p2486 = scmp.eq.s32.totalorder %s21, 1
        %p2487 = pnand %p2486, %p2353
        %p2488 = pneg %p2487
        %p2489 = pnand %p2488, %p180
        %p2490 = pneg %p2489
        // Predicated region
        $region49: #{tpu_custom_call.1} parent=27 // pred_check
          _
        $region50: #{tpu_custom_call.1} parent=27 // pred_check_branch
          %2492 = sbr.rel (%p2489) target = $region52
        $region51: #{tpu_custom_call.1} parent=27 // pred_region
          %v2493 = vld [vmem:[%s2] sm:$0xff]
          %v2494 = vld [vmem:[%s2 + $0x8] sm:$0xff]
          %v2495 = vld [vmem:[%s2 + $0x10] sm:$0xff]
          %v2496 = vld [vmem:[%s2 + $0x18] sm:$0xff]
          %v2497 = vld [vmem:[%s2 + $0x20] sm:$0xff]
          %v2498 = vld [vmem:[%s2 + $0x28] sm:$0xff]
          %v2499 = vld [vmem:[%s2 + $0x30] sm:$0xff]
          %v2500 = vld [vmem:[%s2 + $0x38] sm:$0xff]
          %v2501 = vld [vmem:[%s2 + $0x40] sm:$0xff]
          %v2502 = vld [vmem:[%s2 + $0x48] sm:$0xff]
          %v2503 = vld [vmem:[%s2 + $0x50] sm:$0xff]
          %v2504 = vld [vmem:[%s2 + $0x58] sm:$0xff]
          %v2505 = vld [vmem:[%s2 + $0x60] sm:$0xff]
          %v2506 = vld [vmem:[%s2 + $0x68] sm:$0xff]
          %v2507 = vld [vmem:[%s2 + $0x70] sm:$0xff]
          %v2508 = vld [vmem:[%s2 + $0x78] sm:$0xff]
          %v2509 = vld [vmem:[%s2 + $0x80] sm:$0xff]
          %v2510 = vld [vmem:[%s2 + $0x88] sm:$0xff]
          %v2511 = vld [vmem:[%s2 + $0x90] sm:$0xff]
          %v2512 = vld [vmem:[%s2 + $0x98] sm:$0xff]
          %v2513 = vld [vmem:[%s2 + $0xa0] sm:$0xff]
          %v2514 = vld [vmem:[%s2 + $0xa8] sm:$0xff]
          %v2515 = vld [vmem:[%s2 + $0xb0] sm:$0xff]
          %v2516 = vld [vmem:[%s2 + $0xb8] sm:$0xff]
          %v2517 = vld [vmem:[%s2 + $0xc0] sm:$0xff]
          %v2518 = vld [vmem:[%s2 + $0xc8] sm:$0xff]
          %v2519 = vld [vmem:[%s2 + $0xd0] sm:$0xff]
          %v2520 = vld [vmem:[%s2 + $0xd8] sm:$0xff]
          %v2521 = vld [vmem:[%s2 + $0xe0] sm:$0xff]
          %v2522 = vld [vmem:[%s2 + $0xe8] sm:$0xff]
          %v2523 = vld [vmem:[%s2 + $0xf0] sm:$0xff]
          %v2524 = vld [vmem:[%s2 + $0xf8] sm:$0xff]
          %v2525 = vld [vmem:[%s2 + $0x100] sm:$0xff]
          %v2526 = vld [vmem:[%s2 + $0x108] sm:$0xff]
          %v2527 = vld [vmem:[%s2 + $0x110] sm:$0xff]
          %v2528 = vld [vmem:[%s2 + $0x118] sm:$0xff]
          %v2529 = vld [vmem:[%s2 + $0x120] sm:$0xff]
          %v2530 = vld [vmem:[%s2 + $0x128] sm:$0xff]
          %v2531 = vld [vmem:[%s2 + $0x130] sm:$0xff]
          %v2532 = vld [vmem:[%s2 + $0x138] sm:$0xff]
          %v2533 = vld [vmem:[%s2 + $0x140] sm:$0xff]
          %v2534 = vld [vmem:[%s2 + $0x148] sm:$0xff]
          %v2535 = vld [vmem:[%s2 + $0x150] sm:$0xff]
          %v2536 = vld [vmem:[%s2 + $0x158] sm:$0xff]
          %v2537 = vld [vmem:[%s2 + $0x160] sm:$0xff]
          %v2538 = vld [vmem:[%s2 + $0x168] sm:$0xff]
          %v2539 = vld [vmem:[%s2 + $0x170] sm:$0xff]
          %v2540 = vld [vmem:[%s2 + $0x178] sm:$0xff]
          %v2541 = vld [vmem:[%s2 + $0x180] sm:$0xff]
          %v2542 = vld [vmem:[%s2 + $0x188] sm:$0xff]
          %v2543 = vld [vmem:[%s2 + $0x190] sm:$0xff]
          %v2544 = vld [vmem:[%s2 + $0x198] sm:$0xff]
          %v2545 = vld [vmem:[%s2 + $0x1a0] sm:$0xff]
          %v2546 = vld [vmem:[%s2 + $0x1a8] sm:$0xff]
          %v2547 = vld [vmem:[%s2 + $0x1b0] sm:$0xff]
          %v2548 = vld [vmem:[%s2 + $0x1b8] sm:$0xff]
          %v2549 = vld [vmem:[%s2 + $0x1c0] sm:$0xff]
          %v2550 = vld [vmem:[%s2 + $0x1c8] sm:$0xff]
          %v2551 = vld [vmem:[%s2 + $0x1d0] sm:$0xff]
          %v2552 = vld [vmem:[%s2 + $0x1d8] sm:$0xff]
          %v2553 = vld [vmem:[%s2 + $0x1e0] sm:$0xff]
          %v2554 = vld [vmem:[%s2 + $0x1e8] sm:$0xff]
          %v2555 = vld [vmem:[%s2 + $0x1f0] sm:$0xff]
          %v2556 = vld [vmem:[%s2 + $0x1f8] sm:$0xff]
          %v2557 = vld [vmem:[%s2 + $0x200] sm:$0xff]
          %v2558 = vld [vmem:[%s2 + $0x208] sm:$0xff]
          %v2559 = vld [vmem:[%s2 + $0x210] sm:$0xff]
          %v2560 = vld [vmem:[%s2 + $0x218] sm:$0xff]
          %v2561 = vld [vmem:[%s2 + $0x220] sm:$0xff]
          %v2562 = vld [vmem:[%s2 + $0x228] sm:$0xff]
          %v2563 = vld [vmem:[%s2 + $0x230] sm:$0xff]
          %v2564 = vld [vmem:[%s2 + $0x238] sm:$0xff]
          %v2565 = vld [vmem:[%s2 + $0x240] sm:$0xff]
          %v2566 = vld [vmem:[%s2 + $0x248] sm:$0xff]
          %v2567 = vld [vmem:[%s2 + $0x250] sm:$0xff]
          %v2568 = vld [vmem:[%s2 + $0x258] sm:$0xff]
          %v2569 = vld [vmem:[%s2 + $0x260] sm:$0xff]
          %v2570 = vld [vmem:[%s2 + $0x268] sm:$0xff]
          %v2571 = vld [vmem:[%s2 + $0x270] sm:$0xff]
          %v2572 = vld [vmem:[%s2 + $0x278] sm:$0xff]
          %v2573 = vld [vmem:[%s2 + $0x280] sm:$0xff]
          %v2574 = vld [vmem:[%s2 + $0x288] sm:$0xff]
          %v2575 = vld [vmem:[%s2 + $0x290] sm:$0xff]
          %v2576 = vld [vmem:[%s2 + $0x298] sm:$0xff]
          %v2577 = vld [vmem:[%s2 + $0x2a0] sm:$0xff]
          %v2578 = vld [vmem:[%s2 + $0x2a8] sm:$0xff]
          %v2579 = vld [vmem:[%s2 + $0x2b0] sm:$0xff]
          %v2580 = vld [vmem:[%s2 + $0x2b8] sm:$0xff]
          %v2581 = vld [vmem:[%s2 + $0x2c0] sm:$0xff]
          %v2582 = vld [vmem:[%s2 + $0x2c8] sm:$0xff]
          %v2583 = vld [vmem:[%s2 + $0x2d0] sm:$0xff]
          %v2584 = vld [vmem:[%s2 + $0x2d8] sm:$0xff]
          %v2585 = vld [vmem:[%s2 + $0x2e0] sm:$0xff]
          %v2586 = vld [vmem:[%s2 + $0x2e8] sm:$0xff]
          %v2587 = vld [vmem:[%s2 + $0x2f0] sm:$0xff]
          %v2588 = vld [vmem:[%s2 + $0x2f8] sm:$0xff]
          %v2589 = vld [vmem:[%s2 + $0x300] sm:$0xff]
          %v2590 = vld [vmem:[%s2 + $0x308] sm:$0xff]
          %v2591 = vld [vmem:[%s2 + $0x310] sm:$0xff]
          %v2592 = vld [vmem:[%s2 + $0x318] sm:$0xff]
          %v2593 = vld [vmem:[%s2 + $0x320] sm:$0xff]
          %v2594 = vld [vmem:[%s2 + $0x328] sm:$0xff]
          %v2595 = vld [vmem:[%s2 + $0x330] sm:$0xff]
          %v2596 = vld [vmem:[%s2 + $0x338] sm:$0xff]
          %v2597 = vld [vmem:[%s2 + $0x340] sm:$0xff]
          %v2598 = vld [vmem:[%s2 + $0x348] sm:$0xff]
          %v2599 = vld [vmem:[%s2 + $0x350] sm:$0xff]
          %v2600 = vld [vmem:[%s2 + $0x358] sm:$0xff]
          %v2601 = vld [vmem:[%s2 + $0x360] sm:$0xff]
          %v2602 = vld [vmem:[%s2 + $0x368] sm:$0xff]
          %v2603 = vld [vmem:[%s2 + $0x370] sm:$0xff]
          %v2604 = vld [vmem:[%s2 + $0x378] sm:$0xff]
          %v2605 = vld [vmem:[%s2 + $0x380] sm:$0xff]
          %v2606 = vld [vmem:[%s2 + $0x388] sm:$0xff]
          %v2607 = vld [vmem:[%s2 + $0x390] sm:$0xff]
          %v2608 = vld [vmem:[%s2 + $0x398] sm:$0xff]
          %v2609 = vld [vmem:[%s2 + $0x3a0] sm:$0xff]
          %v2610 = vld [vmem:[%s2 + $0x3a8] sm:$0xff]
          %v2611 = vld [vmem:[%s2 + $0x3b0] sm:$0xff]
          %v2612 = vld [vmem:[%s2 + $0x3b8] sm:$0xff]
          %v2613 = vld [vmem:[%s2 + $0x3c0] sm:$0xff]
          %v2614 = vld [vmem:[%s2 + $0x3c8] sm:$0xff]
          %v2615 = vld [vmem:[%s2 + $0x3d0] sm:$0xff]
          %v2616 = vld [vmem:[%s2 + $0x3d8] sm:$0xff]
          %v2617 = vld [vmem:[%s2 + $0x3e0] sm:$0xff]
          %v2618 = vld [vmem:[%s2 + $0x3e8] sm:$0xff]
          %v2619 = vld [vmem:[%s2 + $0x3f0] sm:$0xff]
          %v2620 = vld [vmem:[%s2 + $0x3f8] sm:$0xff]
          %v2621 = vmul.f32 %v2493, 0.33333334
          %v2622 = vmul.f32 %v2494, 0.33333334
          %v2623 = vmul.f32 %v2495, 0.33333334
          %v2624 = vmul.f32 %v2496, 0.33333334
          %v2625 = vmul.f32 %v2497, 0.33333334
          %v2626 = vmul.f32 %v2498, 0.33333334
          %v2627 = vmul.f32 %v2499, 0.33333334
          %v2628 = vmul.f32 %v2500, 0.33333334
          %v2629 = vmul.f32 %v2501, 0.33333334
          %v2630 = vmul.f32 %v2502, 0.33333334
          %v2631 = vmul.f32 %v2503, 0.33333334
          %v2632 = vmul.f32 %v2504, 0.33333334
          %v2633 = vmul.f32 %v2505, 0.33333334
          %v2634 = vmul.f32 %v2506, 0.33333334
          %v2635 = vmul.f32 %v2507, 0.33333334
          %v2636 = vmul.f32 %v2508, 0.33333334
          %v2637 = vmul.f32 %v2509, 0.33333334
          %v2638 = vmul.f32 %v2510, 0.33333334
          %v2639 = vmul.f32 %v2511, 0.33333334
          %v2640 = vmul.f32 %v2512, 0.33333334
          %v2641 = vmul.f32 %v2513, 0.33333334
          %v2642 = vmul.f32 %v2514, 0.33333334
          %v2643 = vmul.f32 %v2515, 0.33333334
          %v2644 = vmul.f32 %v2516, 0.33333334
          %v2645 = vmul.f32 %v2517, 0.33333334
          %v2646 = vmul.f32 %v2518, 0.33333334
          %v2647 = vmul.f32 %v2519, 0.33333334
          %v2648 = vmul.f32 %v2520, 0.33333334
          %v2649 = vmul.f32 %v2521, 0.33333334
          %v2650 = vmul.f32 %v2522, 0.33333334
          %v2651 = vmul.f32 %v2523, 0.33333334
          %v2652 = vmul.f32 %v2524, 0.33333334
          %v2653 = vmul.f32 %v2525, 0.33333334
          %v2654 = vmul.f32 %v2526, 0.33333334
          %v2655 = vmul.f32 %v2527, 0.33333334
          %v2656 = vmul.f32 %v2528, 0.33333334
          %v2657 = vmul.f32 %v2529, 0.33333334
          %v2658 = vmul.f32 %v2530, 0.33333334
          %v2659 = vmul.f32 %v2531, 0.33333334
          %v2660 = vmul.f32 %v2532, 0.33333334
          %v2661 = vmul.f32 %v2533, 0.33333334
          %v2662 = vmul.f32 %v2534, 0.33333334
          %v2663 = vmul.f32 %v2535, 0.33333334
          %v2664 = vmul.f32 %v2536, 0.33333334
          %v2665 = vmul.f32 %v2537, 0.33333334
          %v2666 = vmul.f32 %v2538, 0.33333334
          %v2667 = vmul.f32 %v2539, 0.33333334
          %v2668 = vmul.f32 %v2540, 0.33333334
          %v2669 = vmul.f32 %v2541, 0.33333334
          %v2670 = vmul.f32 %v2542, 0.33333334
          %v2671 = vmul.f32 %v2543, 0.33333334
          %v2672 = vmul.f32 %v2544, 0.33333334
          %v2673 = vmul.f32 %v2545, 0.33333334
          %v2674 = vmul.f32 %v2546, 0.33333334
          %v2675 = vmul.f32 %v2547, 0.33333334
          %v2676 = vmul.f32 %v2548, 0.33333334
          %v2677 = vmul.f32 %v2549, 0.33333334
          %v2678 = vmul.f32 %v2550, 0.33333334
          %v2679 = vmul.f32 %v2551, 0.33333334
          %v2680 = vmul.f32 %v2552, 0.33333334
          %v2681 = vmul.f32 %v2553, 0.33333334
          %v2682 = vmul.f32 %v2554, 0.33333334
          %v2683 = vmul.f32 %v2555, 0.33333334
          %v2684 = vmul.f32 %v2556, 0.33333334
          %v2685 = vmul.f32 %v2557, 0.33333334
          %v2686 = vmul.f32 %v2558, 0.33333334
          %v2687 = vmul.f32 %v2559, 0.33333334
          %v2688 = vmul.f32 %v2560, 0.33333334
          %v2689 = vmul.f32 %v2561, 0.33333334
          %v2690 = vmul.f32 %v2562, 0.33333334
          %v2691 = vmul.f32 %v2563, 0.33333334
          %v2692 = vmul.f32 %v2564, 0.33333334
          %v2693 = vmul.f32 %v2565, 0.33333334
          %v2694 = vmul.f32 %v2566, 0.33333334
          %v2695 = vmul.f32 %v2567, 0.33333334
          %v2696 = vmul.f32 %v2568, 0.33333334
          %v2697 = vmul.f32 %v2569, 0.33333334
          %v2698 = vmul.f32 %v2570, 0.33333334
          %v2699 = vmul.f32 %v2571, 0.33333334
          %v2700 = vmul.f32 %v2572, 0.33333334
          %v2701 = vmul.f32 %v2573, 0.33333334
          %v2702 = vmul.f32 %v2574, 0.33333334
          %v2703 = vmul.f32 %v2575, 0.33333334
          %v2704 = vmul.f32 %v2576, 0.33333334
          %v2705 = vmul.f32 %v2577, 0.33333334
          %v2706 = vmul.f32 %v2578, 0.33333334
          %v2707 = vmul.f32 %v2579, 0.33333334
          %v2708 = vmul.f32 %v2580, 0.33333334
          %v2709 = vmul.f32 %v2581, 0.33333334
          %v2710 = vmul.f32 %v2582, 0.33333334
          %v2711 = vmul.f32 %v2583, 0.33333334
          %v2712 = vmul.f32 %v2584, 0.33333334
          %v2713 = vmul.f32 %v2585, 0.33333334
          %v2714 = vmul.f32 %v2586, 0.33333334
          %v2715 = vmul.f32 %v2587, 0.33333334
          %v2716 = vmul.f32 %v2588, 0.33333334
          %v2717 = vmul.f32 %v2589, 0.33333334
          %v2718 = vmul.f32 %v2590, 0.33333334
          %v2719 = vmul.f32 %v2591, 0.33333334
          %v2720 = vmul.f32 %v2592, 0.33333334
          %v2721 = vmul.f32 %v2593, 0.33333334
          %v2722 = vmul.f32 %v2594, 0.33333334
          %v2723 = vmul.f32 %v2595, 0.33333334
          %v2724 = vmul.f32 %v2596, 0.33333334
          %v2725 = vmul.f32 %v2597, 0.33333334
          %v2726 = vmul.f32 %v2598, 0.33333334
          %v2727 = vmul.f32 %v2599, 0.33333334
          %v2728 = vmul.f32 %v2600, 0.33333334
          %v2729 = vmul.f32 %v2601, 0.33333334
          %v2730 = vmul.f32 %v2602, 0.33333334
          %v2731 = vmul.f32 %v2603, 0.33333334
          %v2732 = vmul.f32 %v2604, 0.33333334
          %v2733 = vmul.f32 %v2605, 0.33333334
          %v2734 = vmul.f32 %v2606, 0.33333334
          %v2735 = vmul.f32 %v2607, 0.33333334
          %v2736 = vmul.f32 %v2608, 0.33333334
          %v2737 = vmul.f32 %v2609, 0.33333334
          %v2738 = vmul.f32 %v2610, 0.33333334
          %v2739 = vmul.f32 %v2611, 0.33333334
          %v2740 = vmul.f32 %v2612, 0.33333334
          %v2741 = vmul.f32 %v2613, 0.33333334
          %v2742 = vmul.f32 %v2614, 0.33333334
          %v2743 = vmul.f32 %v2615, 0.33333334
          %v2744 = vmul.f32 %v2616, 0.33333334
          %v2745 = vmul.f32 %v2617, 0.33333334
          %v2746 = vmul.f32 %v2618, 0.33333334
          %v2747 = vmul.f32 %v2619, 0.33333334
          %v2748 = vmul.f32 %v2620, 0.33333334
          %2749 = vst.msk [vmem:[%s2] sm:$0xff] %vm2151, %v2621
          %2750 = vst.msk [vmem:[%s2 + $0x8] sm:$0xff] %vm2151, %v2622
          %2751 = vst.msk [vmem:[%s2 + $0x10] sm:$0xff] %vm2151, %v2623
          %2752 = vst.msk [vmem:[%s2 + $0x18] sm:$0xff] %vm2151, %v2624
          %2753 = vst.msk [vmem:[%s2 + $0x20] sm:$0xff] %vm2151, %v2625
          %2754 = vst.msk [vmem:[%s2 + $0x28] sm:$0xff] %vm2151, %v2626
          %2755 = vst.msk [vmem:[%s2 + $0x30] sm:$0xff] %vm2151, %v2627
          %2756 = vst.msk [vmem:[%s2 + $0x38] sm:$0xff] %vm2151, %v2628
          %2757 = vst.msk [vmem:[%s2 + $0x40] sm:$0xff] %vm2151, %v2629
          %2758 = vst.msk [vmem:[%s2 + $0x48] sm:$0xff] %vm2151, %v2630
          %2759 = vst.msk [vmem:[%s2 + $0x50] sm:$0xff] %vm2151, %v2631
          %2760 = vst.msk [vmem:[%s2 + $0x58] sm:$0xff] %vm2151, %v2632
          %2761 = vst.msk [vmem:[%s2 + $0x60] sm:$0xff] %vm2151, %v2633
          %2762 = vst.msk [vmem:[%s2 + $0x68] sm:$0xff] %vm2151, %v2634
          %2763 = vst.msk [vmem:[%s2 + $0x70] sm:$0xff] %vm2151, %v2635
          %2764 = vst.msk [vmem:[%s2 + $0x78] sm:$0xff] %vm2151, %v2636
          %2765 = vst.msk [vmem:[%s2 + $0x80] sm:$0xff] %vm2151, %v2637
          %2766 = vst.msk [vmem:[%s2 + $0x88] sm:$0xff] %vm2151, %v2638
          %2767 = vst.msk [vmem:[%s2 + $0x90] sm:$0xff] %vm2151, %v2639
          %2768 = vst.msk [vmem:[%s2 + $0x98] sm:$0xff] %vm2151, %v2640
          %2769 = vst.msk [vmem:[%s2 + $0xa0] sm:$0xff] %vm2151, %v2641
          %2770 = vst.msk [vmem:[%s2 + $0xa8] sm:$0xff] %vm2151, %v2642
          %2771 = vst.msk [vmem:[%s2 + $0xb0] sm:$0xff] %vm2151, %v2643
          %2772 = vst.msk [vmem:[%s2 + $0xb8] sm:$0xff] %vm2151, %v2644
          %2773 = vst.msk [vmem:[%s2 + $0xc0] sm:$0xff] %vm2151, %v2645
          %2774 = vst.msk [vmem:[%s2 + $0xc8] sm:$0xff] %vm2151, %v2646
          %2775 = vst.msk [vmem:[%s2 + $0xd0] sm:$0xff] %vm2151, %v2647
          %2776 = vst.msk [vmem:[%s2 + $0xd8] sm:$0xff] %vm2151, %v2648
          %2777 = vst.msk [vmem:[%s2 + $0xe0] sm:$0xff] %vm2151, %v2649
          %2778 = vst.msk [vmem:[%s2 + $0xe8] sm:$0xff] %vm2151, %v2650
          %2779 = vst.msk [vmem:[%s2 + $0xf0] sm:$0xff] %vm2151, %v2651
          %2780 = vst.msk [vmem:[%s2 + $0xf8] sm:$0xff] %vm2151, %v2652
          %2781 = vst.msk [vmem:[%s2 + $0x100] sm:$0xff] %vm2151, %v2653
          %2782 = vst.msk [vmem:[%s2 + $0x108] sm:$0xff] %vm2151, %v2654
          %2783 = vst.msk [vmem:[%s2 + $0x110] sm:$0xff] %vm2151, %v2655
          %2784 = vst.msk [vmem:[%s2 + $0x118] sm:$0xff] %vm2151, %v2656
          %2785 = vst.msk [vmem:[%s2 + $0x120] sm:$0xff] %vm2151, %v2657
          %2786 = vst.msk [vmem:[%s2 + $0x128] sm:$0xff] %vm2151, %v2658
          %2787 = vst.msk [vmem:[%s2 + $0x130] sm:$0xff] %vm2151, %v2659
          %2788 = vst.msk [vmem:[%s2 + $0x138] sm:$0xff] %vm2151, %v2660
          %2789 = vst.msk [vmem:[%s2 + $0x140] sm:$0xff] %vm2151, %v2661
          %2790 = vst.msk [vmem:[%s2 + $0x148] sm:$0xff] %vm2151, %v2662
          %2791 = vst.msk [vmem:[%s2 + $0x150] sm:$0xff] %vm2151, %v2663
          %2792 = vst.msk [vmem:[%s2 + $0x158] sm:$0xff] %vm2151, %v2664
          %2793 = vst.msk [vmem:[%s2 + $0x160] sm:$0xff] %vm2151, %v2665
          %2794 = vst.msk [vmem:[%s2 + $0x168] sm:$0xff] %vm2151, %v2666
          %2795 = vst.msk [vmem:[%s2 + $0x170] sm:$0xff] %vm2151, %v2667
          %2796 = vst.msk [vmem:[%s2 + $0x178] sm:$0xff] %vm2151, %v2668
          %2797 = vst.msk [vmem:[%s2 + $0x180] sm:$0xff] %vm2151, %v2669
          %2798 = vst.msk [vmem:[%s2 + $0x188] sm:$0xff] %vm2151, %v2670
          %2799 = vst.msk [vmem:[%s2 + $0x190] sm:$0xff] %vm2151, %v2671
          %2800 = vst.msk [vmem:[%s2 + $0x198] sm:$0xff] %vm2151, %v2672
          %2801 = vst.msk [vmem:[%s2 + $0x1a0] sm:$0xff] %vm2151, %v2673
          %2802 = vst.msk [vmem:[%s2 + $0x1a8] sm:$0xff] %vm2151, %v2674
          %2803 = vst.msk [vmem:[%s2 + $0x1b0] sm:$0xff] %vm2151, %v2675
          %2804 = vst.msk [vmem:[%s2 + $0x1b8] sm:$0xff] %vm2151, %v2676
          %2805 = vst.msk [vmem:[%s2 + $0x1c0] sm:$0xff] %vm2151, %v2677
          %2806 = vst.msk [vmem:[%s2 + $0x1c8] sm:$0xff] %vm2151, %v2678
          %2807 = vst.msk [vmem:[%s2 + $0x1d0] sm:$0xff] %vm2151, %v2679
          %2808 = vst.msk [vmem:[%s2 + $0x1d8] sm:$0xff] %vm2151, %v2680
          %2809 = vst.msk [vmem:[%s2 + $0x1e0] sm:$0xff] %vm2151, %v2681
          %2810 = vst.msk [vmem:[%s2 + $0x1e8] sm:$0xff] %vm2151, %v2682
          %2811 = vst.msk [vmem:[%s2 + $0x1f0] sm:$0xff] %vm2151, %v2683
          %2812 = vst.msk [vmem:[%s2 + $0x1f8] sm:$0xff] %vm2151, %v2684
          %2813 = vst.msk [vmem:[%s2 + $0x200] sm:$0xff] %vm2151, %v2685
          %2814 = vst.msk [vmem:[%s2 + $0x208] sm:$0xff] %vm2151, %v2686
          %2815 = vst.msk [vmem:[%s2 + $0x210] sm:$0xff] %vm2151, %v2687
          %2816 = vst.msk [vmem:[%s2 + $0x218] sm:$0xff] %vm2151, %v2688
          %2817 = vst.msk [vmem:[%s2 + $0x220] sm:$0xff] %vm2151, %v2689
          %2818 = vst.msk [vmem:[%s2 + $0x228] sm:$0xff] %vm2151, %v2690
          %2819 = vst.msk [vmem:[%s2 + $0x230] sm:$0xff] %vm2151, %v2691
          %2820 = vst.msk [vmem:[%s2 + $0x238] sm:$0xff] %vm2151, %v2692
          %2821 = vst.msk [vmem:[%s2 + $0x240] sm:$0xff] %vm2151, %v2693
          %2822 = vst.msk [vmem:[%s2 + $0x248] sm:$0xff] %vm2151, %v2694
          %2823 = vst.msk [vmem:[%s2 + $0x250] sm:$0xff] %vm2151, %v2695
          %2824 = vst.msk [vmem:[%s2 + $0x258] sm:$0xff] %vm2151, %v2696
          %2825 = vst.msk [vmem:[%s2 + $0x260] sm:$0xff] %vm2151, %v2697
          %2826 = vst.msk [vmem:[%s2 + $0x268] sm:$0xff] %vm2151, %v2698
          %2827 = vst.msk [vmem:[%s2 + $0x270] sm:$0xff] %vm2151, %v2699
          %2828 = vst.msk [vmem:[%s2 + $0x278] sm:$0xff] %vm2151, %v2700
          %2829 = vst.msk [vmem:[%s2 + $0x280] sm:$0xff] %vm2151, %v2701
          %2830 = vst.msk [vmem:[%s2 + $0x288] sm:$0xff] %vm2151, %v2702
          %2831 = vst.msk [vmem:[%s2 + $0x290] sm:$0xff] %vm2151, %v2703
          %2832 = vst.msk [vmem:[%s2 + $0x298] sm:$0xff] %vm2151, %v2704
          %2833 = vst.msk [vmem:[%s2 + $0x2a0] sm:$0xff] %vm2151, %v2705
          %2834 = vst.msk [vmem:[%s2 + $0x2a8] sm:$0xff] %vm2151, %v2706
          %2835 = vst.msk [vmem:[%s2 + $0x2b0] sm:$0xff] %vm2151, %v2707
          %2836 = vst.msk [vmem:[%s2 + $0x2b8] sm:$0xff] %vm2151, %v2708
          %2837 = vst.msk [vmem:[%s2 + $0x2c0] sm:$0xff] %vm2151, %v2709
          %2838 = vst.msk [vmem:[%s2 + $0x2c8] sm:$0xff] %vm2151, %v2710
          %2839 = vst.msk [vmem:[%s2 + $0x2d0] sm:$0xff] %vm2151, %v2711
          %2840 = vst.msk [vmem:[%s2 + $0x2d8] sm:$0xff] %vm2151, %v2712
          %2841 = vst.msk [vmem:[%s2 + $0x2e0] sm:$0xff] %vm2151, %v2713
          %2842 = vst.msk [vmem:[%s2 + $0x2e8] sm:$0xff] %vm2151, %v2714
          %2843 = vst.msk [vmem:[%s2 + $0x2f0] sm:$0xff] %vm2151, %v2715
          %2844 = vst.msk [vmem:[%s2 + $0x2f8] sm:$0xff] %vm2151, %v2716
          %2845 = vst.msk [vmem:[%s2 + $0x300] sm:$0xff] %vm2151, %v2717
          %2846 = vst.msk [vmem:[%s2 + $0x308] sm:$0xff] %vm2151, %v2718
          %2847 = vst.msk [vmem:[%s2 + $0x310] sm:$0xff] %vm2151, %v2719
          %2848 = vst.msk [vmem:[%s2 + $0x318] sm:$0xff] %vm2151, %v2720
          %2849 = vst.msk [vmem:[%s2 + $0x320] sm:$0xff] %vm2151, %v2721
          %2850 = vst.msk [vmem:[%s2 + $0x328] sm:$0xff] %vm2151, %v2722
          %2851 = vst.msk [vmem:[%s2 + $0x330] sm:$0xff] %vm2151, %v2723
          %2852 = vst.msk [vmem:[%s2 + $0x338] sm:$0xff] %vm2151, %v2724
          %2853 = vst.msk [vmem:[%s2 + $0x340] sm:$0xff] %vm2151, %v2725
          %2854 = vst.msk [vmem:[%s2 + $0x348] sm:$0xff] %vm2151, %v2726
          %2855 = vst.msk [vmem:[%s2 + $0x350] sm:$0xff] %vm2151, %v2727
          %2856 = vst.msk [vmem:[%s2 + $0x358] sm:$0xff] %vm2151, %v2728
          %2857 = vst.msk [vmem:[%s2 + $0x360] sm:$0xff] %vm2151, %v2729
          %2858 = vst.msk [vmem:[%s2 + $0x368] sm:$0xff] %vm2151, %v2730
          %2859 = vst.msk [vmem:[%s2 + $0x370] sm:$0xff] %vm2151, %v2731
          %2860 = vst.msk [vmem:[%s2 + $0x378] sm:$0xff] %vm2151, %v2732
          %2861 = vst.msk [vmem:[%s2 + $0x380] sm:$0xff] %vm2151, %v2733
          %2862 = vst.msk [vmem:[%s2 + $0x388] sm:$0xff] %vm2151, %v2734
          %2863 = vst.msk [vmem:[%s2 + $0x390] sm:$0xff] %vm2151, %v2735
          %2864 = vst.msk [vmem:[%s2 + $0x398] sm:$0xff] %vm2151, %v2736
          %2865 = vst.msk [vmem:[%s2 + $0x3a0] sm:$0xff] %vm2151, %v2737
          %2866 = vst.msk [vmem:[%s2 + $0x3a8] sm:$0xff] %vm2151, %v2738
          %2867 = vst.msk [vmem:[%s2 + $0x3b0] sm:$0xff] %vm2151, %v2739
          %2868 = vst.msk [vmem:[%s2 + $0x3b8] sm:$0xff] %vm2151, %v2740
          %2869 = vst.msk [vmem:[%s2 + $0x3c0] sm:$0xff] %vm2151, %v2741
          %2870 = vst.msk [vmem:[%s2 + $0x3c8] sm:$0xff] %vm2151, %v2742
          %2871 = vst.msk [vmem:[%s2 + $0x3d0] sm:$0xff] %vm2151, %v2743
          %2872 = vst.msk [vmem:[%s2 + $0x3d8] sm:$0xff] %vm2151, %v2744
          %2873 = vst.msk [vmem:[%s2 + $0x3e0] sm:$0xff] %vm2151, %v2745
          %2874 = vst.msk [vmem:[%s2 + $0x3e8] sm:$0xff] %vm2151, %v2746
          %2875 = vst.msk [vmem:[%s2 + $0x3f0] sm:$0xff] %vm2151, %v2747
          %2876 = vst.msk [vmem:[%s2 + $0x3f8] sm:$0xff] %vm2151, %v2748
        $region52: #{tpu_custom_call.1} parent=27 // pred_fallthru
          _
        // Predicated region
        $region53: #{tpu_custom_call.1} parent=27 // pred_check
          %p2877 = pneg %p97
        $region54: #{tpu_custom_call.1} parent=27 // pred_check_branch
          %2879 = sbr.rel (%p2877) target = $region56
        $region55: #{tpu_custom_call.1} parent=27 // pred_region
          _
        $region56: #{tpu_custom_call.1} parent=27 // pred_fallthru
          _
        // Predicated region
        $region57: #{tpu_custom_call.1} parent=27 // pred_check
          %p2880 = pneg %p97
        $region58: #{tpu_custom_call.1} parent=27 // pred_check_branch
          %2882 = sbr.rel (%p2880) target = $region60
        $region59: #{tpu_custom_call.1} parent=27 // pred_region
          _
        $region60: #{tpu_custom_call.1} parent=27 // pred_fallthru
          _
      $region28: #{tpu_custom_call.1} parent=5 // pred_fallthru
        _
      %p2883 = scmp.le.s32.totalorder 2, %s11
      // Predicated region
      $region61: #{tpu_custom_call.1} parent=5 // pred_check
        %p2884 = pneg %p2883
      $region62: #{tpu_custom_call.1} parent=5 // pred_check_branch
        %2886 = sbr.rel (%p2884) target = $region64
      $region63: #{tpu_custom_call.1} parent=5 // pred_region
        %s2887 = ssub.s32 %s11, 2
      $region64: #{tpu_custom_call.1} parent=5 // pred_fallthru
        _
    $region6: #{tpu_custom_call.1} parent=1 // loop_footer
      %s15 = sadd.s32 1, %s11
    $region7: #{tpu_custom_call.1} parent=1 // loop_footer_branch
      %10 = sbr.rel target = $region3
    $region8: #{tpu_custom_call.1} parent=1 // loop_exit
      _
    %2888 = vsyncpa [#allocation6], 1
    %s2889 = scalar_lea.sflag [#allocation6], 1
    %2890 = vsyncpa %s2889, 1

</llo_original>
